<compile_context>
chip_gen: v6e
topology: v6e:2x2x1
jax: 0.10.0
libtpu: 0.0.40
codegen_flags: <defaults>
</compile_context>

<pallas_src>
import functools
import math

import jax
import jax.numpy as jnp
from jax import lax
from jax.experimental import pallas as pl
from jax.experimental.pallas import tpu as pltpu

_EPS = 1e-5
_INV_SQRT2 = 1.0 / math.sqrt(2.0)


def _gelu(v):
    # exact (erf) GELU == torch.nn.functional.gelu(approximate='none')
    return 0.5 * v * (1.0 + lax.erf(v * _INV_SQRT2))


# --------------------------- in-kernel helpers -------------------------------
def _zero_halo(pad_ref, h, w, c):
    """Zero only the 4 one-pixel halo strips of a (h+2, w+2, c) pad buffer."""
    dt = pad_ref.dtype
    z_row = jnp.zeros((1, w + 2, c), dt)
    z_col = jnp.zeros((h + 2, 1, c), dt)
    pad_ref[0:1, :, :] = z_row
    pad_ref[h + 1:h + 2, :, :] = z_row
    pad_ref[:, 0:1, :] = z_col
    pad_ref[:, w + 1:w + 2, :] = z_col


def _conv3x3_acc(pad_ref, w_ref, cin, cout, hout, wout, stride):
    """9 accumulating MXU matmuls on per-tap Ref slices of the padded input.

    Returns (f32 accumulator of shape (hout*wout, cout), centre-tap patch).
    """
    n = hout * wout
    acc = jnp.zeros((n, cout), jnp.float32)
    centre = None
    for kh in range(3):
        for kw in range(3):
            t = kh * 3 + kw
            if stride == 1:
                patch = pad_ref[kh:kh + hout, kw:kw + wout, :]
            else:
                patch = pad_ref[pl.ds(kh, hout, stride=stride),
                                pl.ds(kw, wout, stride=stride), :]
            patch = patch.reshape(n, cin)
            if t == 4:
                centre = patch
            acc = acc + jnp.dot(patch, w_ref[t * cin:(t + 1) * cin, :],
                                preferred_element_type=jnp.float32)
    return acc, centre


# ------------------------------- kernels --------------------------------------
def _pass1_kernel(*refs, stride, hout, wout, use_proj):
    if use_proj:
        x_ref, w1_ref, wsc_ref, y1_ref, sc_ref, st_ref, pad_ref = refs
    else:
        x_ref, w1_ref, y1_ref, st_ref, pad_ref = refs

    H, W, Ci = x_ref.shape
    Co = y1_ref.shape[-1]

    # padded input block: only the halo strips are zeroed, interior is the tile
    _zero_halo(pad_ref, H, W, Ci)
    pad_ref[1:H + 1, 1:W + 1, :] = x_ref[...]

    # conv1: 9 accumulating K=Ci matmuls (no im2col slab)
    acc, centre = _conv3x3_acc(pad_ref, w1_ref, Ci, Co, hout, wout, stride)

    y1_ref[...] = acc.astype(y1_ref.dtype)
    # single-pass partial BN statistics (sum, sum-of-squares) in f32
    st_ref[0:1, :] = jnp.sum(acc, axis=0, keepdims=True)
    st_ref[1:2, :] = jnp.sum(acc * acc, axis=0, keepdims=True)

    if use_proj:
        # shortcut input = centre tap (the stride-sampled identity), projected
        sc = jnp.dot(centre, wsc_ref[...], preferred_element_type=jnp.float32)
        sc_ref[...] = sc.astype(sc_ref.dtype)
        st_ref[2:3, :] = jnp.sum(sc, axis=0, keepdims=True)
        st_ref[3:4, :] = jnp.sum(sc * sc, axis=0, keepdims=True)


def _pass2_kernel(y1_ref, w2_ref, a1_ref, c1_ref, y2_ref, st_ref, pad_ref,
                  *, hout, wout):
    N, Co = y1_ref.shape

    # BN1 (pre-folded scale/shift, f32) + exact GELU on this block
    h = _gelu(y1_ref[...].astype(jnp.float32) * a1_ref[...] + c1_ref[...])

    # padded activation for conv2 (halo strips only, interior overwritten)
    _zero_halo(pad_ref, hout, wout, Co)
    pad_ref[1:hout + 1, 1:wout + 1, :] = h.reshape(hout, wout, Co).astype(pad_ref.dtype)

    # conv2: 9 accumulating K=Co matmuls
    acc, _ = _conv3x3_acc(pad_ref, w2_ref, Co, Co, hout, wout, 1)

    y2_ref[...] = acc.astype(y2_ref.dtype)
    st_ref[0:1, :] = jnp.sum(acc, axis=0, keepdims=True)
    st_ref[1:2, :] = jnp.sum(acc * acc, axis=0, keepdims=True)


def _pass3_kernel(y2_ref, sc_ref, a2_ref, c2_ref, asc_ref, csc_ref, o_ref):
    # BN2 (folded) + shortcut BN (or identity) + add + GELU, fully elementwise,
    # lane-dense (Q-wide rows, scale/shift pre-tiled to one row).
    y2 = y2_ref[...].astype(jnp.float32) * a2_ref[...] + c2_ref[...]
    ident = sc_ref[...].astype(jnp.float32) * asc_ref[...] + csc_ref[...]
    o_ref[...] = _gelu(y2 + ident).astype(o_ref.dtype)


# ------------------------------ host helpers ----------------------------------
def _fold_bn(s, q, count, gamma, beta):
    """Turn (sum, sum_sq) into BN scale/shift: y = a*x + c (biased variance)."""
    # NOTE: single-pass E[x^2]-E[x]^2 in f32; fine at these scales, switch to a
    # shifted/Welford accumulation if exact parity at very large B*H*W matters.
    mean = s / count
    var = q / count - mean * mean
    a = gamma.astype(jnp.float32) * lax.rsqrt(var + _EPS)
    c = beta.astype(jnp.float32) - mean * a
    return a.reshape(1, -1), c.reshape(1, -1)


def _vmem_limit(per_step_bytes):
    """Scoped-VMEM budget: ~2x the per-step footprint + slack, clamped to
    [16 MiB, 48 MiB] so it is always valid on v7x (64 MiB physical VMEM)."""
    need = 2 * int(per_step_bytes) + (2 << 20)
    return int(min(48 * 1024 * 1024, max(16 * 1024 * 1024, need)))


def _lane_pack(total, co):
    """Factor total = P*Q with Q a multiple of `co` (so the per-channel BN
    scale pattern tiles each row identically), preferably a multiple of 128
    (lane-dense unmasked stores), capped at 2048 lanes."""
    l0 = co * (128 // math.gcd(co, 128))          # lcm(co, 128)
    q = l0 if total % l0 == 0 else co
    while q * 2 <= 2048 and total % (q * 2) == 0:
        q *= 2
    return total // q, q


def _row_tile(p, q, elem_bytes, target_bytes=1 << 20):
    """Largest divisor of P (multiple of 8, or P itself) with block <= ~1 MiB."""
    if p * q * elem_bytes <= target_bytes:
        return p
    best = None
    for d in range(8, p, 8):
        if p % d == 0 and d * q * elem_bytes <= target_bytes:
            best = d
    return best if best is not None else p


# ------------------------------ host wrapper ----------------------------------
def residual_block(x_nchw, params, *, stride=1, compute_dtype=jnp.bfloat16):
    """Forward pass of ResidualBlock.  x_nchw: (B, Cin, H, W) float32 (NCHW)."""
    f32 = jnp.float32
    cdt = compute_dtype
    nbytes = jnp.dtype(cdt).itemsize

    # NCHW -> NHWC + cast to compute dtype (one fused wrapper-side XLA op).
    x = jnp.transpose(x_nchw, (0, 2, 3, 1)).astype(cdt)
    B, H, W, Ci = x.shape
    Co = params["w1"].shape[3]
    Hout = (H - 1) // stride + 1
    Wout = (W - 1) // stride + 1
    N = Hout * Wout
    use_proj = (stride != 1) or (Ci != Co)
    st_rows = 4 if use_proj else 2

    w1r = params["w1"].reshape(9 * Ci, Co).astype(cdt)     # HWIO -> (9Ci, Co)
    w2r = params["w2"].reshape(9 * Co, Co).astype(cdt)

    # ---------------------------- pass 1 --------------------------------------
    per_step1 = ((H * W * Ci + (H + 2) * (W + 2) * Ci + 9 * Ci * Co) * nbytes
                 + N * Co * (2 if use_proj else 1) * nbytes
                 + (Ci * Co * nbytes if use_proj else 0) + st_rows * Co * 4)
    cost1 = pl.CostEstimate(
        flops=int(2 * B * N * 9 * Ci * Co
                  + (2 * B * N * Ci * Co if use_proj else 0)),
        transcendentals=0,
        bytes_accessed=int(nbytes * (B * H * W * Ci + 9 * Ci * Co
                                     + (Ci * Co if use_proj else 0)
                                     + B * N * Co * (2 if use_proj else 1))
                           + 4 * B * st_rows * Co))

    in_specs1 = [pl.BlockSpec((None, H, W, Ci), lambda b: (b, 0, 0, 0)),
                 pl.BlockSpec((9 * Ci, Co), lambda b: (0, 0))]
    args1 = [x, w1r]
    out_shape1 = [jax.ShapeDtypeStruct((B, N, Co), cdt)]
    out_specs1 = [pl.BlockSpec((None, N, Co), lambda b: (b, 0, 0))]
    if use_proj:
        wsc = params["wsc"].reshape(Ci, Co).astype(cdt)    # 1x1 conv weight
        in_specs1.append(pl.BlockSpec((Ci, Co), lambda b: (0, 0)))
        args1.append(wsc)
        out_shape1.append(jax.ShapeDtypeStruct((B, N, Co), cdt))
        out_specs1.append(pl.BlockSpec((None, N, Co), lambda b: (b, 0, 0)))
    out_shape1.append(jax.ShapeDtypeStruct((B, st_rows, Co), f32))
    out_specs1.append(pl.BlockSpec((None, st_rows, Co), lambda b: (b, 0, 0)))

    k1 = functools.partial(_pass1_kernel, stride=stride, hout=Hout, wout=Wout,
                           use_proj=use_proj)
    res1 = pl.pallas_call(
        k1,
        out_shape=tuple(out_shape1),
        grid_spec=pltpu.PrefetchScalarGridSpec(
            num_scalar_prefetch=0, grid=(B,),
            in_specs=in_specs1, out_specs=tuple(out_specs1),
            scratch_shapes=[pltpu.VMEM((H + 2, W + 2, Ci), cdt)]),
        compiler_params=pltpu.CompilerParams(
            dimension_semantics=("parallel",),
            vmem_limit_bytes=_vmem_limit(per_step1)),
        cost_estimate=cost1,
    )(*args1)
    if use_proj:
        y1_raw, sc_raw, st1 = res1
    else:
        y1_raw, st1 = res1
        sc_raw = None

    # tiny cross-block reduction + BN scale/shift folding (exact batch stats)
    n_elems = B * N
    S1 = jnp.sum(st1, axis=0)
    a1, c1 = _fold_bn(S1[0], S1[1], n_elems, params["g1"], params["b1"])
    if use_proj:
        asc, csc = _fold_bn(S1[2], S1[3], n_elems, params["gsc"], params["bsc"])
    else:
        asc = jnp.ones((1, Co), f32)
        csc = jnp.zeros((1, Co), f32)

    # ---------------------------- pass 2 --------------------------------------
    per_step2 = ((2 * N * Co + (Hout + 2) * (Wout + 2) * Co + 9 * Co * Co) * nbytes
                 + 4 * Co * 4)
    cost2 = pl.CostEstimate(
        flops=int(2 * B * N * 9 * Co * Co + 10 * B * N * Co),
        transcendentals=int(B * N * Co),
        bytes_accessed=int(nbytes * (2 * B * N * Co + 9 * Co * Co)
                           + 4 * (2 * Co + 2 * B * Co)))
    k2 = functools.partial(_pass2_kernel, hout=Hout, wout=Wout)
    y2_raw, st2 = pl.pallas_call(
        k2,
        out_shape=(jax.ShapeDtypeStruct((B, N, Co), cdt),
                   jax.ShapeDtypeStruct((B, 2, Co), f32)),
        grid_spec=pltpu.PrefetchScalarGridSpec(
            num_scalar_prefetch=0, grid=(B,),
            in_specs=[pl.BlockSpec((None, N, Co), lambda b: (b, 0, 0)),
                      pl.BlockSpec((9 * Co, Co), lambda b: (0, 0)),
                      pl.BlockSpec((1, Co), lambda b: (0, 0)),
                      pl.BlockSpec((1, Co), lambda b: (0, 0))],
            out_specs=(pl.BlockSpec((None, N, Co), lambda b: (b, 0, 0)),
                       pl.BlockSpec((None, 2, Co), lambda b: (b, 0, 0))),
            scratch_shapes=[pltpu.VMEM((Hout + 2, Wout + 2, Co), cdt)]),
        compiler_params=pltpu.CompilerParams(
            dimension_semantics=("parallel",),
            vmem_limit_bytes=_vmem_limit(per_step2)),
        cost_estimate=cost2,
    )(y1_raw, w2r, a1, c1)

    S2 = jnp.sum(st2, axis=0)
    a2, c2 = _fold_bn(S2[0], S2[1], n_elems, params["g2"], params["b2"])

    # ---------------------------- pass 3 --------------------------------------
    # lane-dense elementwise epilogue: flatten to (P, Q), Q multiple of 128.
    total = B * N * Co
    P, Q = _lane_pack(total, Co)
    rep = Q // Co
    y2_flat = y2_raw.reshape(P, Q)
    if use_proj:
        sc_flat = sc_raw.reshape(P, Q)
    else:
        # identity shortcut (stride==1, Ci==Co): read x directly, no HBM copy
        sc_flat = x.reshape(P, Q)
    a2_row, c2_row = jnp.tile(a2, (1, rep)), jnp.tile(c2, (1, rep))
    asc_row, csc_row = jnp.tile(asc, (1, rep)), jnp.tile(csc, (1, rep))

    PT = _row_tile(P, Q, nbytes)
    T = P // PT
    per_step3 = PT * Q * (2 * nbytes + 4) + 4 * Q * 4
    cost3 = pl.CostEstimate(
        flops=int(8 * total), transcendentals=int(total),
        bytes_accessed=int(total * (2 * nbytes + 4) + 16 * Q))
    out_flat = pl.pallas_call(
        _pass3_kernel,
        out_shape=jax.ShapeDtypeStruct((P, Q), f32),
        grid_spec=pltpu.PrefetchScalarGridSpec(
            num_scalar_prefetch=0, grid=(T,),
            in_specs=[pl.BlockSpec((PT, Q), lambda r: (r, 0)),
                      pl.BlockSpec((PT, Q), lambda r: (r, 0)),
                      pl.BlockSpec((1, Q), lambda r: (0, 0)),
                      pl.BlockSpec((1, Q), lambda r: (0, 0)),
                      pl.BlockSpec((1, Q), lambda r: (0, 0)),
                      pl.BlockSpec((1, Q), lambda r: (0, 0))],
            out_specs=pl.BlockSpec((PT, Q), lambda r: (r, 0))),
        compiler_params=pltpu.CompilerParams(
            dimension_semantics=("parallel",),
            vmem_limit_bytes=_vmem_limit(per_step3)),
        cost_estimate=cost3,
    )(y2_flat, sc_flat, a2_row, c2_row, asc_row, csc_row)

    out = out_flat.reshape(B, Hout, Wout, Co)
    return jnp.transpose(out, (0, 3, 1, 2))                 # -> NCHW


# --------------------------- pure-JAX reference -------------------------------
def _ref_forward(x_nchw, params, *, stride=1):
    x = jnp.transpose(x_nchw, (0, 2, 3, 1)).astype(jnp.float32)
    Ci = x.shape[-1]
    Co = params["w1"].shape[3]

    def conv(v, w, s, p):
        return lax.conv_general_dilated(
            v, w, (s, s), [(p, p), (p, p)],
            dimension_numbers=("NHWC", "HWIO", "NHWC"))

    def bn(v, g, b):
        mean = v.mean(axis=(0, 1, 2))
        var = ((v - mean) ** 2).mean(axis=(0, 1, 2))
        return (v - mean) * lax.rsqrt(var + _EPS) * g + b

    y = _gelu(bn(conv(x, params["w1"], stride, 1), params["g1"], params["b1"]))
    y = bn(conv(y, params["w2"], 1, 1), params["g2"], params["b2"])
    if stride != 1 or Ci != Co:
        ident = conv(x, params["wsc"].reshape(1, 1, Ci, Co), stride, 0)
        ident = bn(ident, params["gsc"], params["bsc"])
    else:
        ident = x
    return jnp.transpose(_gelu(y + ident), (0, 3, 1, 2))


# --------------------------------- demo ----------------------------------------
if __name__ == "__main__":
    B, Cin, Cout, H, W, stride = 2, 4, 8, 16, 16, 1   # Cin != Cout -> projection

    key = jax.random.PRNGKey(0)
    ks = jax.random.split(key, 10)
    x = jax.random.normal(ks[0], (B, Cin, H, W), jnp.float32)

    params = {
        "w1":  0.2 * jax.random.normal(ks[1], (3, 3, Cin, Cout), jnp.float32),
        "g1":  1.0 + 0.1 * jax.random.normal(ks[2], (Cout,), jnp.float32),
        "b1":  0.1 * jax.random.normal(ks[3], (Cout,), jnp.float32),
        "w2":  0.2 * jax.random.normal(ks[4], (3, 3, Cout, Cout), jnp.float32),
        "g2":  1.0 + 0.1 * jax.random.normal(ks[5], (Cout,), jnp.float32),
        "b2":  0.1 * jax.random.normal(ks[6], (Cout,), jnp.float32),
        "wsc": 0.2 * jax.random.normal(ks[7], (Cin, Cout), jnp.float32),  # 1x1 conv
        "gsc": 1.0 + 0.1 * jax.random.normal(ks[8], (Cout,), jnp.float32),
        "bsc": 0.1 * jax.random.normal(ks[9], (Cout,), jnp.float32),
    }

    out = jax.block_until_ready(residual_block(x, params, stride=stride))
    ref = _ref_forward(x, params, stride=stride)

    assert out.shape == (B, Cout, H // stride, W // stride)
    # bf16 MXU + bf16 intermediates -> ~1e-2 level deviation from the exact
    # f32 reference; pass compute_dtype=jnp.float32 for ~1e-5 parity.
    if not jnp.allclose(out, ref, atol=5e-2, rtol=5e-2):
        max_err = float(jnp.max(jnp.abs(out - ref)))
        raise AssertionError(f"kernel/reference mismatch, max abs err = {max_err}")

    print("KERNEL_OK")
</pallas_src>

<mosaic_0001>
module attributes {stable_mosaic.version = 11 : i64} {
  func.func @_pass1_kernel(%arg0: i32, %arg1: memref<1x16x16x4xbf16, #tpu.memory_space<vmem>>, %arg2: memref<36x8xbf16, #tpu.memory_space<vmem>>, %arg3: memref<4x8xbf16, #tpu.memory_space<vmem>>, %arg4: memref<1x256x8xbf16, #tpu.memory_space<vmem>>, %arg5: memref<1x256x8xbf16, #tpu.memory_space<vmem>>, %arg6: memref<1x4x8xf32, #tpu.memory_space<vmem>>, %arg7: memref<18x18x4xbf16, #tpu.memory_space<vmem>>) attributes {dimension_semantics = [#tpu.dimension_semantics<parallel>], iteration_bounds = array<i64: 2>, scalar_prefetch = 0 : i64, scratch_operands = 1 : i64, tpu.core_type = #tpu.core_type<tc>, window_params = [{transform_indices = @transform_0, window_bounds = array<i64: 1, 16, 16, 4>}, {pipeline_mode = #tpu.pipeline_mode<synchronous>, transform_indices = @transform_1, window_bounds = array<i64: 36, 8>}, {pipeline_mode = #tpu.pipeline_mode<synchronous>, transform_indices = @transform_2, window_bounds = array<i64: 4, 8>}, {transform_indices = @transform_3, window_bounds = array<i64: 1, 256, 8>}, {transform_indices = @transform_4, window_bounds = array<i64: 1, 256, 8>}, {transform_indices = @transform_5, window_bounds = array<i64: 1, 4, 8>}]} {
    %cst = arith.constant 0.000000e+00 : bf16
    %0 = vector.broadcast %cst : bf16 to vector<1x18x4xbf16>
    %cst_0 = arith.constant 0.000000e+00 : bf16
    %1 = vector.broadcast %cst_0 : bf16 to vector<18x1x4xbf16>
    %c0 = arith.constant 0 : index
    %c0_1 = arith.constant 0 : index
    %c0_2 = arith.constant 0 : index
    %2 = vector.load %arg7[%c0, %c0_1, %c0_2] : memref<18x18x4xbf16, #tpu.memory_space<vmem>>, vector<1x18x4xbf16>
    tpu.vector_store %arg7[%c0, %c0_1, %c0_2], %0 {strides = array<i32>} : memref<18x18x4xbf16, #tpu.memory_space<vmem>>, vector<1x18x4xbf16>,
    %c17 = arith.constant 17 : index
    %c0_3 = arith.constant 0 : index
    %c0_4 = arith.constant 0 : index
    %3 = vector.load %arg7[%c17, %c0_3, %c0_4] : memref<18x18x4xbf16, #tpu.memory_space<vmem>>, vector<1x18x4xbf16>
    tpu.vector_store %arg7[%c17, %c0_3, %c0_4], %0 {strides = array<i32>} : memref<18x18x4xbf16, #tpu.memory_space<vmem>>, vector<1x18x4xbf16>,
    %c0_5 = arith.constant 0 : index
    %c0_6 = arith.constant 0 : index
    %c0_7 = arith.constant 0 : index
    %4 = vector.load %arg7[%c0_5, %c0_6, %c0_7] : memref<18x18x4xbf16, #tpu.memory_space<vmem>>, vector<18x1x4xbf16>
    tpu.vector_store %arg7[%c0_5, %c0_6, %c0_7], %1 {strides = array<i32>} : memref<18x18x4xbf16, #tpu.memory_space<vmem>>, vector<18x1x4xbf16>,
    %c0_8 = arith.constant 0 : index
    %c17_9 = arith.constant 17 : index
    %c0_10 = arith.constant 0 : index
    %5 = vector.load %arg7[%c0_8, %c17_9, %c0_10] : memref<18x18x4xbf16, #tpu.memory_space<vmem>>, vector<18x1x4xbf16>
    tpu.vector_store %arg7[%c0_8, %c17_9, %c0_10], %1 {strides = array<i32>} : memref<18x18x4xbf16, #tpu.memory_space<vmem>>, vector<18x1x4xbf16>,
    %c0_11 = arith.constant 0 : index
    %c0_12 = arith.constant 0 : index
    %c0_13 = arith.constant 0 : index
    %c0_14 = arith.constant 0 : index
    %6 = vector.load %arg1[%c0_11, %c0_12, %c0_13, %c0_14] : memref<1x16x16x4xbf16, #tpu.memory_space<vmem>>, vector<1x16x16x4xbf16>
    %7 = vector.shape_cast %6 : vector<1x16x16x4xbf16> to vector<16x16x4xbf16>
    %c1 = arith.constant 1 : index
    %c1_15 = arith.constant 1 : index
    %c0_16 = arith.constant 0 : index
    %8 = vector.load %arg7[%c1, %c1_15, %c0_16] : memref<18x18x4xbf16, #tpu.memory_space<vmem>>, vector<16x16x4xbf16>
    tpu.vector_store %arg7[%c1, %c1_15, %c0_16], %7 {strides = array<i32>} : memref<18x18x4xbf16, #tpu.memory_space<vmem>>, vector<16x16x4xbf16>,
    %cst_17 = arith.constant 0.000000e+00 : f32
    %9 = vector.broadcast %cst_17 : f32 to vector<256x8xf32>
    %c0_18 = arith.constant 0 : index
    %c0_19 = arith.constant 0 : index
    %c0_20 = arith.constant 0 : index
    %10 = vector.load %arg7[%c0_18, %c0_19, %c0_20] : memref<18x18x4xbf16, #tpu.memory_space<vmem>>, vector<16x16x4xbf16>
    %11 = vector.shape_cast %10 : vector<16x16x4xbf16> to vector<256x4xbf16>
    %c0_21 = arith.constant 0 : index
    %c0_22 = arith.constant 0 : index
    %12 = vector.load %arg2[%c0_21, %c0_22] : memref<36x8xbf16, #tpu.memory_space<vmem>>, vector<4x8xbf16>
    %cst_23 = arith.constant dense<0.000000e+00> : vector<256x8xf32>
    %13 = tpu.matmul %11, %12, %cst_23 {dimension_numbers = #tpu.dot_dimension_numbers<[1], [0], [0], [1], [0, 0, 1, 1], [], []>} : vector<256x4xbf16>, vector<4x8xbf16>, vector<256x8xf32> -> vector<256x8xf32>
    %14 = arith.addf %9, %13 : vector<256x8xf32>
    %c0_24 = arith.constant 0 : index
    %c1_25 = arith.constant 1 : index
    %c0_26 = arith.constant 0 : index
    %15 = vector.load %arg7[%c0_24, %c1_25, %c0_26] : memref<18x18x4xbf16, #tpu.memory_space<vmem>>, vector<16x16x4xbf16>
    %16 = vector.shape_cast %15 : vector<16x16x4xbf16> to vector<256x4xbf16>
    %c4 = arith.constant 4 : index
    %c0_27 = arith.constant 0 : index
    %17 = vector.load %arg2[%c4, %c0_27] : memref<36x8xbf16, #tpu.memory_space<vmem>>, vector<4x8xbf16>
    %cst_28 = arith.constant dense<0.000000e+00> : vector<256x8xf32>
    %18 = tpu.matmul %16, %17, %cst_28 {dimension_numbers = #tpu.dot_dimension_numbers<[1], [0], [0], [1], [0, 0, 1, 1], [], []>} : vector<256x4xbf16>, vector<4x8xbf16>, vector<256x8xf32> -> vector<256x8xf32>
    %19 = arith.addf %14, %18 : vector<256x8xf32>
    %c0_29 = arith.constant 0 : index
    %c2 = arith.constant 2 : index
    %c0_30 = arith.constant 0 : index
    %20 = vector.load %arg7[%c0_29, %c2, %c0_30] : memref<18x18x4xbf16, #tpu.memory_space<vmem>>, vector<16x16x4xbf16>
    %21 = vector.shape_cast %20 : vector<16x16x4xbf16> to vector<256x4xbf16>
    %c8 = arith.constant 8 : index
    %c0_31 = arith.constant 0 : index
    %22 = vector.load %arg2[%c8, %c0_31] : memref<36x8xbf16, #tpu.memory_space<vmem>>, vector<4x8xbf16>
    %cst_32 = arith.constant dense<0.000000e+00> : vector<256x8xf32>
    %23 = tpu.matmul %21, %22, %cst_32 {dimension_numbers = #tpu.dot_dimension_numbers<[1], [0], [0], [1], [0, 0, 1, 1], [], []>} : vector<256x4xbf16>, vector<4x8xbf16>, vector<256x8xf32> -> vector<256x8xf32>
    %24 = arith.addf %19, %23 : vector<256x8xf32>
    %c1_33 = arith.constant 1 : index
    %c0_34 = arith.constant 0 : index
    %c0_35 = arith.constant 0 : index
    %25 = vector.load %arg7[%c1_33, %c0_34, %c0_35] : memref<18x18x4xbf16, #tpu.memory_space<vmem>>, vector<16x16x4xbf16>
    %26 = vector.shape_cast %25 : vector<16x16x4xbf16> to vector<256x4xbf16>
    %c12 = arith.constant 12 : index
    %c0_36 = arith.constant 0 : index
    %27 = vector.load %arg2[%c12, %c0_36] : memref<36x8xbf16, #tpu.memory_space<vmem>>, vector<4x8xbf16>
    %cst_37 = arith.constant dense<0.000000e+00> : vector<256x8xf32>
    %28 = tpu.matmul %26, %27, %cst_37 {dimension_numbers = #tpu.dot_dimension_numbers<[1], [0], [0], [1], [0, 0, 1, 1], [], []>} : vector<256x4xbf16>, vector<4x8xbf16>, vector<256x8xf32> -> vector<256x8xf32>
    %29 = arith.addf %24, %28 : vector<256x8xf32>
    %c1_38 = arith.constant 1 : index
    %c1_39 = arith.constant 1 : index
    %c0_40 = arith.constant 0 : index
    %30 = vector.load %arg7[%c1_38, %c1_39, %c0_40] : memref<18x18x4xbf16, #tpu.memory_space<vmem>>, vector<16x16x4xbf16>
    %31 = vector.shape_cast %30 : vector<16x16x4xbf16> to vector<256x4xbf16>
    %c16 = arith.constant 16 : index
    %c0_41 = arith.constant 0 : index
    %32 = vector.load %arg2[%c16, %c0_41] : memref<36x8xbf16, #tpu.memory_space<vmem>>, vector<4x8xbf16>
    %cst_42 = arith.constant dense<0.000000e+00> : vector<256x8xf32>
    %33 = tpu.matmul %31, %32, %cst_42 {dimension_numbers = #tpu.dot_dimension_numbers<[1], [0], [0], [1], [0, 0, 1, 1], [], []>} : vector<256x4xbf16>, vector<4x8xbf16>, vector<256x8xf32> -> vector<256x8xf32>
    %34 = arith.addf %29, %33 : vector<256x8xf32>
    %c1_43 = arith.constant 1 : index
    %c2_44 = arith.constant 2 : index
    %c0_45 = arith.constant 0 : index
    %35 = vector.load %arg7[%c1_43, %c2_44, %c0_45] : memref<18x18x4xbf16, #tpu.memory_space<vmem>>, vector<16x16x4xbf16>
    %36 = vector.shape_cast %35 : vector<16x16x4xbf16> to vector<256x4xbf16>
    %c20 = arith.constant 20 : index
    %c0_46 = arith.constant 0 : index
    %37 = vector.load %arg2[%c20, %c0_46] : memref<36x8xbf16, #tpu.memory_space<vmem>>, vector<4x8xbf16>
    %cst_47 = arith.constant dense<0.000000e+00> : vector<256x8xf32>
    %38 = tpu.matmul %36, %37, %cst_47 {dimension_numbers = #tpu.dot_dimension_numbers<[1], [0], [0], [1], [0, 0, 1, 1], [], []>} : vector<256x4xbf16>, vector<4x8xbf16>, vector<256x8xf32> -> vector<256x8xf32>
    %39 = arith.addf %34, %38 : vector<256x8xf32>
    %c2_48 = arith.constant 2 : index
    %c0_49 = arith.constant 0 : index
    %c0_50 = arith.constant 0 : index
    %40 = vector.load %arg7[%c2_48, %c0_49, %c0_50] : memref<18x18x4xbf16, #tpu.memory_space<vmem>>, vector<16x16x4xbf16>
    %41 = vector.shape_cast %40 : vector<16x16x4xbf16> to vector<256x4xbf16>
    %c24 = arith.constant 24 : index
    %c0_51 = arith.constant 0 : index
    %42 = vector.load %arg2[%c24, %c0_51] : memref<36x8xbf16, #tpu.memory_space<vmem>>, vector<4x8xbf16>
    %cst_52 = arith.constant dense<0.000000e+00> : vector<256x8xf32>
    %43 = tpu.matmul %41, %42, %cst_52 {dimension_numbers = #tpu.dot_dimension_numbers<[1], [0], [0], [1], [0, 0, 1, 1], [], []>} : vector<256x4xbf16>, vector<4x8xbf16>, vector<256x8xf32> -> vector<256x8xf32>
    %44 = arith.addf %39, %43 : vector<256x8xf32>
    %c2_53 = arith.constant 2 : index
    %c1_54 = arith.constant 1 : index
    %c0_55 = arith.constant 0 : index
    %45 = vector.load %arg7[%c2_53, %c1_54, %c0_55] : memref<18x18x4xbf16, #tpu.memory_space<vmem>>, vector<16x16x4xbf16>
    %46 = vector.shape_cast %45 : vector<16x16x4xbf16> to vector<256x4xbf16>
    %c28 = arith.constant 28 : index
    %c0_56 = arith.constant 0 : index
    %47 = vector.load %arg2[%c28, %c0_56] : memref<36x8xbf16, #tpu.memory_space<vmem>>, vector<4x8xbf16>
    %cst_57 = arith.constant dense<0.000000e+00> : vector<256x8xf32>
    %48 = tpu.matmul %46, %47, %cst_57 {dimension_numbers = #tpu.dot_dimension_numbers<[1], [0], [0], [1], [0, 0, 1, 1], [], []>} : vector<256x4xbf16>, vector<4x8xbf16>, vector<256x8xf32> -> vector<256x8xf32>
    %49 = arith.addf %44, %48 : vector<256x8xf32>
    %c2_58 = arith.constant 2 : index
    %c2_59 = arith.constant 2 : index
    %c0_60 = arith.constant 0 : index
    %50 = vector.load %arg7[%c2_58, %c2_59, %c0_60] : memref<18x18x4xbf16, #tpu.memory_space<vmem>>, vector<16x16x4xbf16>
    %51 = vector.shape_cast %50 : vector<16x16x4xbf16> to vector<256x4xbf16>
    %c32 = arith.constant 32 : index
    %c0_61 = arith.constant 0 : index
    %52 = vector.load %arg2[%c32, %c0_61] : memref<36x8xbf16, #tpu.memory_space<vmem>>, vector<4x8xbf16>
    %cst_62 = arith.constant dense<0.000000e+00> : vector<256x8xf32>
    %53 = tpu.matmul %51, %52, %cst_62 {dimension_numbers = #tpu.dot_dimension_numbers<[1], [0], [0], [1], [0, 0, 1, 1], [], []>} : vector<256x4xbf16>, vector<4x8xbf16>, vector<256x8xf32> -> vector<256x8xf32>
    %54 = arith.addf %49, %53 : vector<256x8xf32>
    %55 = arith.truncf %54 : vector<256x8xf32> to vector<256x8xbf16>
    %c0_63 = arith.constant 0 : index
    %c0_64 = arith.constant 0 : index
    %c0_65 = arith.constant 0 : index
    %56 = vector.load %arg4[%c0_63, %c0_64, %c0_65] : memref<1x256x8xbf16, #tpu.memory_space<vmem>>, vector<1x256x8xbf16>
    %57 = vector.shape_cast %56 : vector<1x256x8xbf16> to vector<256x8xbf16>
    %58 = vector.shape_cast %55 : vector<256x8xbf16> to vector<1x256x8xbf16>
    tpu.vector_store %arg4[%c0_63, %c0_64, %c0_65], %58 {strides = array<i32>} : memref<1x256x8xbf16, #tpu.memory_space<vmem>>, vector<1x256x8xbf16>,
    %cst_66 = arith.constant dense<0.000000e+00> : vector<8xf32>
    %59 = vector.multi_reduction <add>, %54, %cst_66 [0] : vector<256x8xf32> to vector<8xf32>
    %60 = vector.shape_cast %59 : vector<8xf32> to vector<1x8xf32>
    %c0_67 = arith.constant 0 : index
    %c0_68 = arith.constant 0 : index
    %c0_69 = arith.constant 0 : index
    %61 = vector.load %arg6[%c0_67, %c0_68, %c0_69] : memref<1x4x8xf32, #tpu.memory_space<vmem>>, vector<1x1x8xf32>
    %62 = vector.shape_cast %61 : vector<1x1x8xf32> to vector<1x8xf32>
    %63 = vector.shape_cast %60 : vector<1x8xf32> to vector<1x1x8xf32>
    tpu.vector_store %arg6[%c0_67, %c0_68, %c0_69], %63 {strides = array<i32>} : memref<1x4x8xf32, #tpu.memory_space<vmem>>, vector<1x1x8xf32>,
    %64 = arith.mulf %54, %54 : vector<256x8xf32>
    %cst_70 = arith.constant dense<0.000000e+00> : vector<8xf32>
    %65 = vector.multi_reduction <add>, %64, %cst_70 [0] : vector<256x8xf32> to vector<8xf32>
    %66 = vector.shape_cast %65 : vector<8xf32> to vector<1x8xf32>
    %c0_71 = arith.constant 0 : index
    %c1_72 = arith.constant 1 : index
    %c0_73 = arith.constant 0 : index
    %67 = vector.load %arg6[%c0_71, %c1_72, %c0_73] : memref<1x4x8xf32, #tpu.memory_space<vmem>>, vector<1x1x8xf32>
    %68 = vector.shape_cast %67 : vector<1x1x8xf32> to vector<1x8xf32>
    %69 = vector.shape_cast %66 : vector<1x8xf32> to vector<1x1x8xf32>
    tpu.vector_store %arg6[%c0_71, %c1_72, %c0_73], %69 {strides = array<i32>} : memref<1x4x8xf32, #tpu.memory_space<vmem>>, vector<1x1x8xf32>,
    %c0_74 = arith.constant 0 : index
    %c0_75 = arith.constant 0 : index
    %70 = vector.load %arg3[%c0_74, %c0_75] : memref<4x8xbf16, #tpu.memory_space<vmem>>, vector<4x8xbf16>
    %cst_76 = arith.constant dense<0.000000e+00> : vector<256x8xf32>
    %71 = tpu.matmul %31, %70, %cst_76 {dimension_numbers = #tpu.dot_dimension_numbers<[1], [0], [0], [1], [0, 0, 1, 1], [], []>} : vector<256x4xbf16>, vector<4x8xbf16>, vector<256x8xf32> -> vector<256x8xf32>
    %72 = arith.truncf %71 : vector<256x8xf32> to vector<256x8xbf16>
    %c0_77 = arith.constant 0 : index
    %c0_78 = arith.constant 0 : index
    %c0_79 = arith.constant 0 : index
    %73 = vector.load %arg5[%c0_77, %c0_78, %c0_79] : memref<1x256x8xbf16, #tpu.memory_space<vmem>>, vector<1x256x8xbf16>
    %74 = vector.shape_cast %73 : vector<1x256x8xbf16> to vector<256x8xbf16>
    %75 = vector.shape_cast %72 : vector<256x8xbf16> to vector<1x256x8xbf16>
    tpu.vector_store %arg5[%c0_77, %c0_78, %c0_79], %75 {strides = array<i32>} : memref<1x256x8xbf16, #tpu.memory_space<vmem>>, vector<1x256x8xbf16>,
    %cst_80 = arith.constant dense<0.000000e+00> : vector<8xf32>
    %76 = vector.multi_reduction <add>, %71, %cst_80 [0] : vector<256x8xf32> to vector<8xf32>
    %77 = vector.shape_cast %76 : vector<8xf32> to vector<1x8xf32>
    %c0_81 = arith.constant 0 : index
    %c2_82 = arith.constant 2 : index
    %c0_83 = arith.constant 0 : index
    %78 = vector.load %arg6[%c0_81, %c2_82, %c0_83] : memref<1x4x8xf32, #tpu.memory_space<vmem>>, vector<1x1x8xf32>
    %79 = vector.shape_cast %78 : vector<1x1x8xf32> to vector<1x8xf32>
    %80 = vector.shape_cast %77 : vector<1x8xf32> to vector<1x1x8xf32>
    tpu.vector_store %arg6[%c0_81, %c2_82, %c0_83], %80 {strides = array<i32>} : memref<1x4x8xf32, #tpu.memory_space<vmem>>, vector<1x1x8xf32>,
    %81 = arith.mulf %71, %71 : vector<256x8xf32>
    %cst_84 = arith.constant dense<0.000000e+00> : vector<8xf32>
    %82 = vector.multi_reduction <add>, %81, %cst_84 [0] : vector<256x8xf32> to vector<8xf32>
    %83 = vector.shape_cast %82 : vector<8xf32> to vector<1x8xf32>
    %c0_85 = arith.constant 0 : index
    %c3 = arith.constant 3 : index
    %c0_86 = arith.constant 0 : index
    %84 = vector.load %arg6[%c0_85, %c3, %c0_86] : memref<1x4x8xf32, #tpu.memory_space<vmem>>, vector<1x1x8xf32>
    %85 = vector.shape_cast %84 : vector<1x1x8xf32> to vector<1x8xf32>
    %86 = vector.shape_cast %83 : vector<1x8xf32> to vector<1x1x8xf32>
    tpu.vector_store %arg6[%c0_85, %c3, %c0_86], %86 {strides = array<i32>} : memref<1x4x8xf32, #tpu.memory_space<vmem>>, vector<1x1x8xf32>,
    return
  }
  func.func @transform_0(%arg0: i32) -> (i32, i32, i32, i32) {
    %c0_i32 = arith.constant 0 : i32
    %c0_i32_0 = arith.constant 0 : i32
    %c0_i32_1 = arith.constant 0 : i32
    %c0_i32_2 = arith.constant 0 : i32
    return %arg0, %c0_i32, %c0_i32_0, %c0_i32_1 : i32, i32, i32, i32
  }
  func.func @transform_1(%arg0: i32) -> (i32, i32) {
    %c0_i32 = arith.constant 0 : i32
    %c0_i32_0 = arith.constant 0 : i32
    %c0_i32_1 = arith.constant 0 : i32
    return %c0_i32, %c0_i32_0 : i32, i32
  }
  func.func @transform_2(%arg0: i32) -> (i32, i32) {
    %c0_i32 = arith.constant 0 : i32
    %c0_i32_0 = arith.constant 0 : i32
    %c0_i32_1 = arith.constant 0 : i32
    return %c0_i32, %c0_i32_0 : i32, i32
  }
  func.func @transform_3(%arg0: i32) -> (i32, i32, i32) {
    %c0_i32 = arith.constant 0 : i32
    %c0_i32_0 = arith.constant 0 : i32
    %c0_i32_1 = arith.constant 0 : i32
    return %arg0, %c0_i32, %c0_i32_0 : i32, i32, i32
  }
  func.func @transform_4(%arg0: i32) -> (i32, i32, i32) {
    %c0_i32 = arith.constant 0 : i32
    %c0_i32_0 = arith.constant 0 : i32
    %c0_i32_1 = arith.constant 0 : i32
    return %arg0, %c0_i32, %c0_i32_0 : i32, i32, i32
  }
  func.func @transform_5(%arg0: i32) -> (i32, i32, i32) {
    %c0_i32 = arith.constant 0 : i32
    %c0_i32_0 = arith.constant 0 : i32
    %c0_i32_1 = arith.constant 0 : i32
    return %arg0, %c0_i32, %c0_i32_0 : i32, i32, i32
  }
}

</mosaic_0001>

<llo_original>
// kernel: tpu_custom_call.1
$region0: #{tpu_custom_call.1}
  #allocation0 [shape = 'u32[]', space=smem, size = 0x4, offset = 0x4, fixed_abs, tag = 'smem constant byte address 0x4 - core index']
  #allocation1 [shape = 'u32[144,128]{1,0:T(1,128)}', space=vmem, size = 0x12000, scoped, tag = 'internal scratch']
  #allocation2 [shape = 'bf16[18,18,4]{2,1,0:T(8,128)(2,1)}', space=vmem, size = 0x1b000, scoped, tag = 'scratch operand']
  %s0 = inlined_call_operand.vmem [shape: bf16[2,16,16,4], index: 0, kind: input, shape index: {}]
  %s1 = inlined_call_operand.vmem [shape: bf16[36,8], index: 1, kind: input, shape index: {}]
  %s2 = inlined_call_operand.vmem [shape: bf16[4,8], index: 2, kind: input, shape index: {}]
  %s3 = inlined_call_operand.vmem [shape: bf16[2,256,8], index: 3, kind: output, shape index: {0}]
  %s4 = inlined_call_operand.vmem [shape: bf16[2,256,8], index: 4, kind: output, shape index: {1}]
  %s5 = inlined_call_operand.hbm [shape: f32[2,4,8], index: 5, kind: output, shape index: {2}]
  %6 = xla_tuple %s3, %s4, %s5
  %s7 = sld [smem:[#allocation0]]
  $region61: #{tpu_custom_call.1} parent=0
    _
  %s9 = ssub.s32 1, %s7
  %s10 = scalar_select 0, %s9, %s7
  $region1: #{tpu_custom_call.1} parent=0
    #allocation3 [shape = 'u8[4096]{0}', space=vmem, size = 0x1000, scoped, tag = 'output window, operand 2']
    #allocation4 [shape = 's32[2]{0}', space=sflag, size = 0x8, scoped, tag = 'scoped memory for tpu_custom_call.1']
    %11 = vsyncpa [#allocation4], 0
    %s12 = scalar_lea.sflag [#allocation4], 1
    %13 = vsyncpa %s12, 0
    loop: start=0, step=1, limit=4
    $region2: #{tpu_custom_call.1} parent=1 // loop_pre_header
      _
    $region3: #{tpu_custom_call.1} parent=1 // loop_header
      %s15 = sphi 0, %s19
      %p16 = scmp.ge.s32.totalorder %s15, 4
      %s25 = sphi 0, %s27
      %s28 = sphi 0, %s25
      %s29 = sphi 0, %s28
      %s45 = sphi 0, %s29
      %s49 = sphi 0, %s49
      %s51 = sphi 0, %s49
      %s52 = sphi 0, %s51
      %s66 = sphi 0, %s52
      %s70 = sphi 0, %s70
      %s72 = sphi 0, %s70
      %s73 = sphi 0, %s72
      %s87 = sphi 0, %s73
      %s93 = sphi 0, %s95
      %s96 = sphi 0, %s93
      %s97 = sphi 0, %s96
      %s113 = sphi 0, %s97
      %s119 = sphi 0, %s121
      %s122 = sphi 0, %s119
      %s123 = sphi 0, %s122
      %s139 = sphi 0, %s123
      %s145 = sphi 0, %s147
      %s148 = sphi 0, %s145
      %s149 = sphi 0, %s148
      %s165 = sphi 0, %s149
    $region4: #{tpu_custom_call.1} parent=1 // loop_header_branch
      %18 = sbr.rel (%p16) target = $region8
    $region5: #{tpu_custom_call.1} parent=1 // loop_body
      %s20 = ssub.s32 %s15, 1
      %s21 = ssub.s32 %s15, 2
      %s22 = sadd.s32 %s15, 1
      %s23 = ssub.s32 %s15, %s22
      %p24 = scmp.eq.s32.totalorder %s23, 0
      %s26 = sadd.s32 %s25, 1
      %s27 = scalar_select %p24, %s25, %s26
      %p30 = pneg %p24
      %p31 = scmp.eq.s32.totalorder %s15, 1
      %p32 = por %p30, %p31
      %p33 = scmp.ne.s32.totalorder %s25, %s28
      %p34 = scmp.eq.s32.totalorder %s15, 0
      %p35 = por %p33, %p34
      %p36 = scmp.ne.s32.totalorder %s25, %s28
      %p37 = scmp.eq.s32.totalorder %s20, 1
      %p38 = por %p36, %p37
      %p39 = scmp.ne.s32.totalorder %s28, %s29
      %p40 = scmp.eq.s32.totalorder %s20, 0
      %p41 = por %p39, %p40
      %p42 = scmp.ne.s32.totalorder %s28, %s29
      %p43 = scmp.eq.s32.totalorder %s21, 1
      %p44 = por %p42, %p43
      %p46 = scmp.ne.s32.totalorder %s29, %s45
      %p47 = scmp.eq.s32.totalorder %s21, 0
      %p48 = por %p46, %p47
      %s50 = sadd.s32 %s49, 1
      %p53 = scmp.eq.s32.totalorder %s15, 1
      %p54 = scmp.ne.s32.totalorder %s49, %s51
      %p55 = scmp.eq.s32.totalorder %s15, 0
      %p56 = por %p54, %p55
      %p57 = scmp.ne.s32.totalorder %s49, %s51
      %p58 = scmp.eq.s32.totalorder %s20, 1
      %p59 = por %p57, %p58
      %p60 = scmp.ne.s32.totalorder %s51, %s52
      %p61 = scmp.eq.s32.totalorder %s20, 0
      %p62 = por %p60, %p61
      %p63 = scmp.ne.s32.totalorder %s51, %s52
      %p64 = scmp.eq.s32.totalorder %s21, 1
      %p65 = por %p63, %p64
      %p67 = scmp.ne.s32.totalorder %s52, %s66
      %p68 = scmp.eq.s32.totalorder %s21, 0
      %p69 = por %p67, %p68
      %s71 = sadd.s32 %s70, 1
      %p74 = scmp.eq.s32.totalorder %s15, 1
      %p75 = scmp.ne.s32.totalorder %s70, %s72
      %p76 = scmp.eq.s32.totalorder %s15, 0
      %p77 = por %p75, %p76
      %p78 = scmp.ne.s32.totalorder %s70, %s72
      %p79 = scmp.eq.s32.totalorder %s20, 1
      %p80 = por %p78, %p79
      %p81 = scmp.ne.s32.totalorder %s72, %s73
      %p82 = scmp.eq.s32.totalorder %s20, 0
      %p83 = por %p81, %p82
      %p84 = scmp.ne.s32.totalorder %s72, %s73
      %p85 = scmp.eq.s32.totalorder %s21, 1
      %p86 = por %p84, %p85
      %p88 = scmp.ne.s32.totalorder %s73, %s87
      %p89 = scmp.eq.s32.totalorder %s21, 0
      %p90 = por %p88, %p89
      %s91 = ssub.s32 %s15, %s22
      %p92 = scmp.eq.s32.totalorder %s91, 0
      %s94 = sadd.s32 %s93, 1
      %s95 = scalar_select %p92, %s93, %s94
      %p98 = pneg %p92
      %p99 = scmp.eq.s32.totalorder %s15, 1
      %p100 = por %p98, %p99
      %p101 = scmp.ne.s32.totalorder %s93, %s96
      %p102 = scmp.eq.s32.totalorder %s15, 0
      %p103 = por %p101, %p102
      %p104 = scmp.ne.s32.totalorder %s93, %s96
      %p105 = scmp.eq.s32.totalorder %s20, 1
      %p106 = por %p104, %p105
      %p107 = scmp.ne.s32.totalorder %s96, %s97
      %p108 = scmp.eq.s32.totalorder %s20, 0
      %p109 = por %p107, %p108
      %p110 = scmp.ne.s32.totalorder %s96, %s97
      %p111 = scmp.eq.s32.totalorder %s21, 1
      %p112 = por %p110, %p111
      %p114 = scmp.ne.s32.totalorder %s97, %s113
      %p115 = scmp.eq.s32.totalorder %s21, 0
      %p116 = por %p114, %p115
      %s117 = ssub.s32 %s15, %s22
      %p118 = scmp.eq.s32.totalorder %s117, 0
      %s120 = sadd.s32 %s119, 1
      %s121 = scalar_select %p118, %s119, %s120
      %p124 = pneg %p118
      %p125 = scmp.eq.s32.totalorder %s15, 1
      %p126 = por %p124, %p125
      %p127 = scmp.ne.s32.totalorder %s119, %s122
      %p128 = scmp.eq.s32.totalorder %s15, 0
      %p129 = por %p127, %p128
      %p130 = scmp.ne.s32.totalorder %s119, %s122
      %p131 = scmp.eq.s32.totalorder %s20, 1
      %p132 = por %p130, %p131
      %p133 = scmp.ne.s32.totalorder %s122, %s123
      %p134 = scmp.eq.s32.totalorder %s20, 0
      %p135 = por %p133, %p134
      %p136 = scmp.ne.s32.totalorder %s122, %s123
      %p137 = scmp.eq.s32.totalorder %s21, 1
      %p138 = por %p136, %p137
      %p140 = scmp.ne.s32.totalorder %s123, %s139
      %p141 = scmp.eq.s32.totalorder %s21, 0
      %p142 = por %p140, %p141
      %s143 = ssub.s32 %s15, %s22
      %p144 = scmp.eq.s32.totalorder %s143, 0
      %s146 = sadd.s32 %s145, 1
      %s147 = scalar_select %p144, %s145, %s146
      %p150 = pneg %p144
      %p151 = scmp.eq.s32.totalorder %s15, 1
      %p152 = por %p150, %p151
      %p153 = scmp.ne.s32.totalorder %s145, %s148
      %p154 = scmp.eq.s32.totalorder %s15, 0
      %p155 = por %p153, %p154
      %p156 = scmp.ne.s32.totalorder %s145, %s148
      %p157 = scmp.eq.s32.totalorder %s20, 1
      %p158 = por %p156, %p157
      %p159 = scmp.ne.s32.totalorder %s148, %s149
      %p160 = scmp.eq.s32.totalorder %s20, 0
      %p161 = por %p159, %p160
      %p162 = scmp.ne.s32.totalorder %s148, %s149
      %p163 = scmp.eq.s32.totalorder %s21, 1
      %p164 = por %p162, %p163
      %p166 = scmp.ne.s32.totalorder %s149, %s165
      %p167 = scmp.eq.s32.totalorder %s21, 0
      %p168 = por %p166, %p167
      %p169 = scmp.le.s32.totalorder 1, %s15
      %p170 = scmp.lt.s32.totalorder %s15, 3
      %p171 = pnand %p169, %p170
      %p172 = pneg %p171
      // Predicated region
      $region9: #{tpu_custom_call.1} parent=5 // pred_check
        _
      $region10: #{tpu_custom_call.1} parent=5 // pred_check_branch
        %174 = sbr.rel (%p171) target = $region12
      $region11: #{tpu_custom_call.1} parent=5 // pred_region
        %s175 = ssub.s32 %s15, 1
        // Predicated region
        $region13: #{tpu_custom_call.1} parent=11 // pred_check
          %p176 = pneg %p62
        $region14: #{tpu_custom_call.1} parent=11 // pred_check_branch
          %178 = sbr.rel (%p176) target = $region16
        $region15: #{tpu_custom_call.1} parent=11 // pred_region
          _
        $region16: #{tpu_custom_call.1} parent=11 // pred_fallthru
          _
        // Predicated region
        $region17: #{tpu_custom_call.1} parent=11 // pred_check
          %p179 = pneg %p83
        $region18: #{tpu_custom_call.1} parent=11 // pred_check_branch
          %181 = sbr.rel (%p179) target = $region20
        $region19: #{tpu_custom_call.1} parent=11 // pred_region
          _
        $region20: #{tpu_custom_call.1} parent=11 // pred_fallthru
          _
      $region12: #{tpu_custom_call.1} parent=5 // pred_fallthru
        _
      %p182 = scmp.lt.s32.totalorder %s15, 2
      // Predicated region
      $region21: #{tpu_custom_call.1} parent=5 // pred_check
        %p183 = pneg %p182
      $region22: #{tpu_custom_call.1} parent=5 // pred_check_branch
        %185 = sbr.rel (%p183) target = $region24
      $region23: #{tpu_custom_call.1} parent=5 // pred_region
        // Predicated region
        $region25: #{tpu_custom_call.1} parent=23 // pred_check
          %p186 = pneg %p35
        $region26: #{tpu_custom_call.1} parent=23 // pred_check_branch
          %188 = sbr.rel (%p186) target = $region28
        $region27: #{tpu_custom_call.1} parent=23 // pred_region
          %p189 = scmp.lt.s32.totalorder %s15, 1
          %s190 = scalar_select %p189, %s15, 1
          %s191 = smul.addr %s190, 32
          %s192 = smul.addr %s191, 4
          %s193 = scalar_lea.vmem %s0, %s192
        $region28: #{tpu_custom_call.1} parent=23 // pred_fallthru
          _
      $region24: #{tpu_custom_call.1} parent=5 // pred_fallthru
        _
      %p194 = scmp.le.s32.totalorder 1, %s15
      %p195 = scmp.lt.s32.totalorder %s15, 3
      %p196 = pnand %p194, %p195
      %p197 = pneg %p196
      // Predicated region
      $region29: #{tpu_custom_call.1} parent=5 // pred_check
        _
      $region30: #{tpu_custom_call.1} parent=5 // pred_check_branch
        %199 = sbr.rel (%p196) target = $region32
      $region31: #{tpu_custom_call.1} parent=5 // pred_region
        %s200 = ssub.s32 %s15, 1
        %p201 = scmp.lt.s32.totalorder %s20, 1
        %s202 = scalar_select %p201, %s20, 1
        %s203 = smul.addr %s202, 32
        %s204 = smul.addr %s203, 4
        %s205 = scalar_lea.vmem %s0, %s204
        %p206 = pneg %p41
        %p207 = pneg %p38
        %p208 = pneg %p62
        %p209 = pneg %p59
        %p210 = pneg %p83
        %p211 = pneg %p80
        %p212 = pneg %p109
        %p213 = pneg %p106
        %p214 = scmp.lt.s32.totalorder %s20, 1
        %s215 = scalar_select %p214, %s20, 1
        %s216 = smul.addr %s215, 32
        %s217 = smul.addr %s216, 4
        %s218 = scalar_lea.vmem %s3, %s217
        %p219 = pneg %p135
        %p220 = pneg %p132
        %p221 = scmp.lt.s32.totalorder %s20, 1
        %s222 = scalar_select %p221, %s20, 1
        %s223 = smul.addr %s222, 32
        %s224 = smul.addr %s223, 4
        %s225 = scalar_lea.vmem %s4, %s224
        %p226 = pneg %p161
        %p227 = pneg %p158
        %s228 = sand.u32 %s148, 1
        %s229 = scalar_lea.sflag [#allocation4], %s228
        %s230 = sand.u32 %s148, 1
        %s231 = smul.addr %s230, 4
        %s232 = scalar_lea.vmem [#allocation3], %s231
        %p233 = scmp.lt.s32.totalorder %s20, 1
        %s234 = scalar_select %p233, %s20, 1
        %s235 = smul.addr %s234, 32
        %s236 = smul.addr %s235, 4
        %s237 = scalar_lea.vmem %s0, %s236
        %p238 = scmp.lt.s32.totalorder %s20, 1
        %s239 = scalar_select %p238, %s20, 1
        %s240 = smul.addr %s239, 32
        %s241 = smul.addr %s240, 4
        %s242 = scalar_lea.vmem %s3, %s241
        %p243 = scmp.lt.s32.totalorder %s20, 1
        %s244 = scalar_select %p243, %s20, 1
        %s245 = smul.addr %s244, 32
        %s246 = smul.addr %s245, 4
        %s247 = scalar_lea.vmem %s4, %s246
        %vm249 = vcmask 27648
        %250 = vst.msk [vmem:[#allocation2] sm:$0xf] %vm249, 0
        %251 = vst.msk [vmem:[#allocation2 + $0x4] sm:$0xf] %vm249, 0
        %vm252 = vcmask 24576
        %253 = vst.msk [vmem:[#allocation2 + $0x8] sm:$0x1] %vm252, 0
        %s254 = scalar_lea.vmem [#allocation2], 204
        %255 = vst.msk [vmem:[%s254] sm:$0xf] %vm249, 0
        %256 = vst.msk [vmem:[%s254 + $0x4] sm:$0xf] %vm249, 0
        %257 = vst.msk [vmem:[%s254 + $0x8] sm:$0x1] %vm252, 0
        %vm258 = vcmask 24576
        %vm259 = vsmask.f32 256
        %vm260 = vmand %vm258, %vm259
        %v261 = vld [vmem:[#allocation2] sm:$0x1]
        %v262 = vsel %vm260, 0, %v261
        %263 = vst [vmem:[#allocation2] sm:$0x1] %v262
        %v264 = vld [vmem:[#allocation2 + $0xc] sm:$0x1]
        %v265 = vsel %vm260, 0, %v264
        %266 = vst [vmem:[#allocation2 + $0xc] sm:$0x1] %v265
        %v267 = vld [vmem:[#allocation2 + $0x18] sm:$0x1]
        %v268 = vsel %vm260, 0, %v267
        %269 = vst [vmem:[#allocation2 + $0x18] sm:$0x1] %v268
        %v270 = vld [vmem:[#allocation2 + $0x24] sm:$0x1]
        %v271 = vsel %vm260, 0, %v270
        %272 = vst [vmem:[#allocation2 + $0x24] sm:$0x1] %v271
        %v273 = vld [vmem:[#allocation2 + $0x30] sm:$0x1]
        %v274 = vsel %vm260, 0, %v273
        %275 = vst [vmem:[#allocation2 + $0x30] sm:$0x1] %v274
        %v276 = vld [vmem:[#allocation2 + $0x3c] sm:$0x1]
        %v277 = vsel %vm260, 0, %v276
        %278 = vst [vmem:[#allocation2 + $0x3c] sm:$0x1] %v277
        %v279 = vld [vmem:[#allocation2 + $0x48] sm:$0x1]
        %v280 = vsel %vm260, 0, %v279
        %281 = vst [vmem:[#allocation2 + $0x48] sm:$0x1] %v280
        %v282 = vld [vmem:[#allocation2 + $0x54] sm:$0x1]
        %v283 = vsel %vm260, 0, %v282
        %284 = vst [vmem:[#allocation2 + $0x54] sm:$0x1] %v283
        %v285 = vld [vmem:[#allocation2 + $0x60] sm:$0x1]
        %v286 = vsel %vm260, 0, %v285
        %287 = vst [vmem:[#allocation2 + $0x60] sm:$0x1] %v286
        %v288 = vld [vmem:[#allocation2 + $0x6c] sm:$0x1]
        %v289 = vsel %vm260, 0, %v288
        %290 = vst [vmem:[#allocation2 + $0x6c] sm:$0x1] %v289
        %v291 = vld [vmem:[#allocation2 + $0x78] sm:$0x1]
        %v292 = vsel %vm260, 0, %v291
        %293 = vst [vmem:[#allocation2 + $0x78] sm:$0x1] %v292
        %v294 = vld [vmem:[#allocation2 + $0x84] sm:$0x1]
        %v295 = vsel %vm260, 0, %v294
        %296 = vst [vmem:[#allocation2 + $0x84] sm:$0x1] %v295
        %v297 = vld [vmem:[#allocation2 + $0x90] sm:$0x1]
        %v298 = vsel %vm260, 0, %v297
        %299 = vst [vmem:[#allocation2 + $0x90] sm:$0x1] %v298
        %v300 = vld [vmem:[#allocation2 + $0x9c] sm:$0x1]
        %v301 = vsel %vm260, 0, %v300
        %302 = vst [vmem:[#allocation2 + $0x9c] sm:$0x1] %v301
        %v303 = vld [vmem:[#allocation2 + $0xa8] sm:$0x1]
        %v304 = vsel %vm260, 0, %v303
        %305 = vst [vmem:[#allocation2 + $0xa8] sm:$0x1] %v304
        %v306 = vld [vmem:[#allocation2 + $0xb4] sm:$0x1]
        %v307 = vsel %vm260, 0, %v306
        %308 = vst [vmem:[#allocation2 + $0xb4] sm:$0x1] %v307
        %v309 = vld [vmem:[#allocation2 + $0xc0] sm:$0x1]
        %v310 = vsel %vm260, 0, %v309
        %311 = vst [vmem:[#allocation2 + $0xc0] sm:$0x1] %v310
        %v312 = vld [vmem:[#allocation2 + $0xcc] sm:$0x1]
        %v313 = vsel %vm260, 0, %v312
        %314 = vst [vmem:[#allocation2 + $0xcc] sm:$0x1] %v313
        %vm315 = vsmask.f32 7938
        %vm316 = vmand %vm258, %vm315
        %v317 = vld [vmem:[#allocation2 + $0x8] sm:$0x1]
        %v318 = vsel %vm316, 0, %v317
        %319 = vst [vmem:[#allocation2 + $0x8] sm:$0x1] %v318
        %v320 = vld [vmem:[#allocation2 + $0x14] sm:$0x1]
        %v321 = vsel %vm316, 0, %v320
        %322 = vst [vmem:[#allocation2 + $0x14] sm:$0x1] %v321
        %v323 = vld [vmem:[#allocation2 + $0x20] sm:$0x1]
        %v324 = vsel %vm316, 0, %v323
        %325 = vst [vmem:[#allocation2 + $0x20] sm:$0x1] %v324
        %v326 = vld [vmem:[#allocation2 + $0x2c] sm:$0x1]
        %v327 = vsel %vm316, 0, %v326
        %328 = vst [vmem:[#allocation2 + $0x2c] sm:$0x1] %v327
        %v329 = vld [vmem:[#allocation2 + $0x38] sm:$0x1]
        %v330 = vsel %vm316, 0, %v329
        %331 = vst [vmem:[#allocation2 + $0x38] sm:$0x1] %v330
        %v332 = vld [vmem:[#allocation2 + $0x44] sm:$0x1]
        %v333 = vsel %vm316, 0, %v332
        %334 = vst [vmem:[#allocation2 + $0x44] sm:$0x1] %v333
        %v335 = vld [vmem:[#allocation2 + $0x50] sm:$0x1]
        %v336 = vsel %vm316, 0, %v335
        %337 = vst [vmem:[#allocation2 + $0x50] sm:$0x1] %v336
        %v338 = vld [vmem:[#allocation2 + $0x5c] sm:$0x1]
        %v339 = vsel %vm316, 0, %v338
        %340 = vst [vmem:[#allocation2 + $0x5c] sm:$0x1] %v339
        %v341 = vld [vmem:[#allocation2 + $0x68] sm:$0x1]
        %v342 = vsel %vm316, 0, %v341
        %343 = vst [vmem:[#allocation2 + $0x68] sm:$0x1] %v342
        %v344 = vld [vmem:[#allocation2 + $0x74] sm:$0x1]
        %v345 = vsel %vm316, 0, %v344
        %346 = vst [vmem:[#allocation2 + $0x74] sm:$0x1] %v345
        %v347 = vld [vmem:[#allocation2 + $0x80] sm:$0x1]
        %v348 = vsel %vm316, 0, %v347
        %349 = vst [vmem:[#allocation2 + $0x80] sm:$0x1] %v348
        %v350 = vld [vmem:[#allocation2 + $0x8c] sm:$0x1]
        %v351 = vsel %vm316, 0, %v350
        %352 = vst [vmem:[#allocation2 + $0x8c] sm:$0x1] %v351
        %v353 = vld [vmem:[#allocation2 + $0x98] sm:$0x1]
        %v354 = vsel %vm316, 0, %v353
        %355 = vst [vmem:[#allocation2 + $0x98] sm:$0x1] %v354
        %v356 = vld [vmem:[#allocation2 + $0xa4] sm:$0x1]
        %v357 = vsel %vm316, 0, %v356
        %358 = vst [vmem:[#allocation2 + $0xa4] sm:$0x1] %v357
        %v359 = vld [vmem:[#allocation2 + $0xb0] sm:$0x1]
        %v360 = vsel %vm316, 0, %v359
        %361 = vst [vmem:[#allocation2 + $0xb0] sm:$0x1] %v360
        %v362 = vld [vmem:[#allocation2 + $0xbc] sm:$0x1]
        %v363 = vsel %vm316, 0, %v362
        %364 = vst [vmem:[#allocation2 + $0xbc] sm:$0x1] %v363
        %v365 = vld [vmem:[#allocation2 + $0xc8] sm:$0x1]
        %v366 = vsel %vm316, 0, %v365
        %367 = vst [vmem:[#allocation2 + $0xc8] sm:$0x1] %v366
        %v368 = vld [vmem:[#allocation2 + $0xd4] sm:$0x1]
        %v369 = vsel %vm316, 0, %v368
        %370 = vst [vmem:[#allocation2 + $0xd4] sm:$0x1] %v369
        %v371 = vld [vmem:[%s237] sm:$0xf]
        %v372 = vld [vmem:[%s237 + $0x4] sm:$0xf]
        %v373 = vld [vmem:[%s237 + $0x8] sm:$0xf]
        %v374 = vld [vmem:[%s237 + $0xc] sm:$0xf]
        %v375 = vld [vmem:[%s237 + $0x10] sm:$0xf]
        %v376 = vld [vmem:[%s237 + $0x14] sm:$0xf]
        %v377 = vld [vmem:[%s237 + $0x18] sm:$0xf]
        %v378 = vld [vmem:[%s237 + $0x1c] sm:$0xf]
        %v379 = vld [vmem:[%s237 + $0x20] sm:$0xf]
        %v380 = vld [vmem:[%s237 + $0x24] sm:$0xf]
        %v381 = vld [vmem:[%s237 + $0x28] sm:$0xf]
        %v382 = vld [vmem:[%s237 + $0x2c] sm:$0xf]
        %v383 = vld [vmem:[%s237 + $0x30] sm:$0xf]
        %v384 = vld [vmem:[%s237 + $0x34] sm:$0xf]
        %v385 = vld [vmem:[%s237 + $0x38] sm:$0xf]
        %v386 = vld [vmem:[%s237 + $0x3c] sm:$0xf]
        %v387 = vld [vmem:[%s237 + $0x40] sm:$0xf]
        %v388 = vld [vmem:[%s237 + $0x44] sm:$0xf]
        %v389 = vld [vmem:[%s237 + $0x48] sm:$0xf]
        %v390 = vld [vmem:[%s237 + $0x4c] sm:$0xf]
        %v391 = vld [vmem:[%s237 + $0x50] sm:$0xf]
        %v392 = vld [vmem:[%s237 + $0x54] sm:$0xf]
        %v393 = vld [vmem:[%s237 + $0x58] sm:$0xf]
        %v394 = vld [vmem:[%s237 + $0x5c] sm:$0xf]
        %v395 = vld [vmem:[%s237 + $0x60] sm:$0xf]
        %v396 = vld [vmem:[%s237 + $0x64] sm:$0xf]
        %v397 = vld [vmem:[%s237 + $0x68] sm:$0xf]
        %v398 = vld [vmem:[%s237 + $0x6c] sm:$0xf]
        %v399 = vld [vmem:[%s237 + $0x70] sm:$0xf]
        %v400 = vld [vmem:[%s237 + $0x74] sm:$0xf]
        %v401 = vld [vmem:[%s237 + $0x78] sm:$0xf]
        %v402 = vld [vmem:[%s237 + $0x7c] sm:$0xf]
        %vm403 = vsmask.f32 4368
        %vm404 = vmor %vm259, %vm403
        %v406 = vshrl.u32 %v371, 16
        %v408 = vrot.slane %v406, 7
        %v409 = vshll.u32 %v371, 16
        %v411 = vor.u32 %v408, %v409
        %v412 = vrot.slane %v408, 4
        %v414 = vshrl.u32 %v372, 16
        %v416 = vrot.slane %v414, 7
        %v417 = vshll.u32 %v372, 16
        %v419 = vor.u32 %v416, %v417
        %v420 = vsel %vm404, %v412, %v419
        %v421 = vrot.slane %v416, 4
        %v423 = vshrl.u32 %v373, 16
        %v425 = vrot.slane %v423, 7
        %v426 = vshll.u32 %v373, 16
        %v428 = vor.u32 %v425, %v426
        %v429 = vrot.slane %v425, 4
        %v431 = vshrl.u32 %v374, 16
        %v433 = vrot.slane %v431, 7
        %v434 = vshll.u32 %v374, 16
        %v436 = vor.u32 %v433, %v434
        %v437 = vsel %vm404, %v429, %v436
        %v438 = vrot.slane %v433, 4
        %v440 = vshrl.u32 %v375, 16
        %v442 = vrot.slane %v440, 7
        %v443 = vshll.u32 %v375, 16
        %v445 = vor.u32 %v442, %v443
        %v446 = vrot.slane %v442, 4
        %v448 = vshrl.u32 %v376, 16
        %v450 = vrot.slane %v448, 7
        %v451 = vshll.u32 %v376, 16
        %v453 = vor.u32 %v450, %v451
        %v454 = vsel %vm404, %v446, %v453
        %v455 = vrot.slane %v450, 4
        %v457 = vshrl.u32 %v377, 16
        %v459 = vrot.slane %v457, 7
        %v460 = vshll.u32 %v377, 16
        %v462 = vor.u32 %v459, %v460
        %v463 = vrot.slane %v459, 4
        %v465 = vshrl.u32 %v378, 16
        %v467 = vrot.slane %v465, 7
        %v468 = vshll.u32 %v378, 16
        %v470 = vor.u32 %v467, %v468
        %v471 = vsel %vm404, %v463, %v470
        %v472 = vrot.slane %v467, 4
        %v474 = vshrl.u32 %v379, 16
        %v476 = vrot.slane %v474, 7
        %v477 = vshll.u32 %v379, 16
        %v479 = vor.u32 %v476, %v477
        %v480 = vrot.slane %v476, 4
        %v482 = vshrl.u32 %v380, 16
        %v484 = vrot.slane %v482, 7
        %v485 = vshll.u32 %v380, 16
        %v487 = vor.u32 %v484, %v485
        %v488 = vsel %vm404, %v480, %v487
        %v489 = vrot.slane %v484, 4
        %v491 = vshrl.u32 %v381, 16
        %v493 = vrot.slane %v491, 7
        %v494 = vshll.u32 %v381, 16
        %v496 = vor.u32 %v493, %v494
        %v497 = vrot.slane %v493, 4
        %v499 = vshrl.u32 %v382, 16
        %v501 = vrot.slane %v499, 7
        %v502 = vshll.u32 %v382, 16
        %v504 = vor.u32 %v501, %v502
        %v505 = vsel %vm404, %v497, %v504
        %v506 = vrot.slane %v501, 4
        %v508 = vshrl.u32 %v383, 16
        %v510 = vrot.slane %v508, 7
        %v511 = vshll.u32 %v383, 16
        %v513 = vor.u32 %v510, %v511
        %v514 = vrot.slane %v510, 4
        %v516 = vshrl.u32 %v384, 16
        %v518 = vrot.slane %v516, 7
        %v519 = vshll.u32 %v384, 16
        %v521 = vor.u32 %v518, %v519
        %v522 = vsel %vm404, %v514, %v521
        %v523 = vrot.slane %v518, 4
        %v525 = vshrl.u32 %v385, 16
        %v527 = vrot.slane %v525, 7
        %v528 = vshll.u32 %v385, 16
        %v530 = vor.u32 %v527, %v528
        %v531 = vrot.slane %v527, 4
        %v533 = vshrl.u32 %v386, 16
        %v535 = vrot.slane %v533, 7
        %v536 = vshll.u32 %v386, 16
        %v538 = vor.u32 %v535, %v536
        %v539 = vsel %vm404, %v531, %v538
        %v540 = vrot.slane %v535, 4
        %v542 = vshrl.u32 %v387, 16
        %v544 = vrot.slane %v542, 7
        %v545 = vshll.u32 %v387, 16
        %v547 = vor.u32 %v544, %v545
        %v548 = vrot.slane %v544, 4
        %v550 = vshrl.u32 %v388, 16
        %v552 = vrot.slane %v550, 7
        %v553 = vshll.u32 %v388, 16
        %v555 = vor.u32 %v552, %v553
        %v556 = vsel %vm404, %v548, %v555
        %v557 = vrot.slane %v552, 4
        %v559 = vshrl.u32 %v389, 16
        %v561 = vrot.slane %v559, 7
        %v562 = vshll.u32 %v389, 16
        %v564 = vor.u32 %v561, %v562
        %v565 = vrot.slane %v561, 4
        %v567 = vshrl.u32 %v390, 16
        %v569 = vrot.slane %v567, 7
        %v570 = vshll.u32 %v390, 16
        %v572 = vor.u32 %v569, %v570
        %v573 = vsel %vm404, %v565, %v572
        %v574 = vrot.slane %v569, 4
        %v576 = vshrl.u32 %v391, 16
        %v578 = vrot.slane %v576, 7
        %v579 = vshll.u32 %v391, 16
        %v581 = vor.u32 %v578, %v579
        %v582 = vrot.slane %v578, 4
        %v584 = vshrl.u32 %v392, 16
        %v586 = vrot.slane %v584, 7
        %v587 = vshll.u32 %v392, 16
        %v589 = vor.u32 %v586, %v587
        %v590 = vsel %vm404, %v582, %v589
        %v591 = vrot.slane %v586, 4
        %v593 = vshrl.u32 %v393, 16
        %v595 = vrot.slane %v593, 7
        %v596 = vshll.u32 %v393, 16
        %v598 = vor.u32 %v595, %v596
        %v599 = vrot.slane %v595, 4
        %v601 = vshrl.u32 %v394, 16
        %v603 = vrot.slane %v601, 7
        %v604 = vshll.u32 %v394, 16
        %v606 = vor.u32 %v603, %v604
        %v607 = vsel %vm404, %v599, %v606
        %v608 = vrot.slane %v603, 4
        %v610 = vshrl.u32 %v395, 16
        %v612 = vrot.slane %v610, 7
        %v613 = vshll.u32 %v395, 16
        %v615 = vor.u32 %v612, %v613
        %v616 = vrot.slane %v612, 4
        %v618 = vshrl.u32 %v396, 16
        %v620 = vrot.slane %v618, 7
        %v621 = vshll.u32 %v396, 16
        %v623 = vor.u32 %v620, %v621
        %v624 = vsel %vm404, %v616, %v623
        %v625 = vrot.slane %v620, 4
        %v627 = vshrl.u32 %v397, 16
        %v629 = vrot.slane %v627, 7
        %v630 = vshll.u32 %v397, 16
        %v632 = vor.u32 %v629, %v630
        %v633 = vrot.slane %v629, 4
        %v635 = vshrl.u32 %v398, 16
        %v637 = vrot.slane %v635, 7
        %v638 = vshll.u32 %v398, 16
        %v640 = vor.u32 %v637, %v638
        %v641 = vsel %vm404, %v633, %v640
        %v642 = vrot.slane %v637, 4
        %v644 = vshrl.u32 %v399, 16
        %v646 = vrot.slane %v644, 7
        %v647 = vshll.u32 %v399, 16
        %v649 = vor.u32 %v646, %v647
        %v650 = vrot.slane %v646, 4
        %v652 = vshrl.u32 %v400, 16
        %v654 = vrot.slane %v652, 7
        %v655 = vshll.u32 %v400, 16
        %v657 = vor.u32 %v654, %v655
        %v658 = vsel %vm404, %v650, %v657
        %v659 = vrot.slane %v654, 4
        %v661 = vshrl.u32 %v401, 16
        %v663 = vrot.slane %v661, 7
        %v664 = vshll.u32 %v401, 16
        %v666 = vor.u32 %v663, %v664
        %v667 = vrot.slane %v663, 4
        %v669 = vshrl.u32 %v402, 16
        %v671 = vrot.slane %v669, 7
        %v672 = vshll.u32 %v402, 16
        %v674 = vor.u32 %v671, %v672
        %v675 = vsel %vm404, %v667, %v674
        %v676 = vrot.slane %v671, 4
        %s725 = scalar_lea.vmem [#allocation2], 12
        %vm726 = vcmask 27648
        %vm727 = vmand %vm726, %vm315
        %v728 = vld [vmem:[%s725] sm:$0xf]
        %v729 = vsel %vm727, %v411, %v728
        %730 = vst [vmem:[%s725] sm:$0xf] %v729
        %731 = vst.msk [vmem:[%s725 + $0x4] sm:$0xf] %vm249, %v420
        %v732 = vld [vmem:[%s725 + $0x8] sm:$0x1]
        %v733 = vsel %vm260, %v421, %v732
        %734 = vst [vmem:[%s725 + $0x8] sm:$0x1] %v733
        %v735 = vld [vmem:[%s725 + $0xc] sm:$0xf]
        %v736 = vsel %vm727, %v428, %v735
        %737 = vst [vmem:[%s725 + $0xc] sm:$0xf] %v736
        %738 = vst.msk [vmem:[%s725 + $0x10] sm:$0xf] %vm249, %v437
        %v739 = vld [vmem:[%s725 + $0x14] sm:$0x1]
        %v740 = vsel %vm260, %v438, %v739
        %741 = vst [vmem:[%s725 + $0x14] sm:$0x1] %v740
        %v742 = vld [vmem:[%s725 + $0x18] sm:$0xf]
        %v743 = vsel %vm727, %v445, %v742
        %744 = vst [vmem:[%s725 + $0x18] sm:$0xf] %v743
        %745 = vst.msk [vmem:[%s725 + $0x1c] sm:$0xf] %vm249, %v454
        %v746 = vld [vmem:[%s725 + $0x20] sm:$0x1]
        %v747 = vsel %vm260, %v455, %v746
        %748 = vst [vmem:[%s725 + $0x20] sm:$0x1] %v747
        %v749 = vld [vmem:[%s725 + $0x24] sm:$0xf]
        %v750 = vsel %vm727, %v462, %v749
        %751 = vst [vmem:[%s725 + $0x24] sm:$0xf] %v750
        %752 = vst.msk [vmem:[%s725 + $0x28] sm:$0xf] %vm249, %v471
        %v753 = vld [vmem:[%s725 + $0x2c] sm:$0x1]
        %v754 = vsel %vm260, %v472, %v753
        %755 = vst [vmem:[%s725 + $0x2c] sm:$0x1] %v754
        %v756 = vld [vmem:[%s725 + $0x30] sm:$0xf]
        %v757 = vsel %vm727, %v479, %v756
        %758 = vst [vmem:[%s725 + $0x30] sm:$0xf] %v757
        %759 = vst.msk [vmem:[%s725 + $0x34] sm:$0xf] %vm249, %v488
        %v760 = vld [vmem:[%s725 + $0x38] sm:$0x1]
        %v761 = vsel %vm260, %v489, %v760
        %762 = vst [vmem:[%s725 + $0x38] sm:$0x1] %v761
        %v763 = vld [vmem:[%s725 + $0x3c] sm:$0xf]
        %v764 = vsel %vm727, %v496, %v763
        %765 = vst [vmem:[%s725 + $0x3c] sm:$0xf] %v764
        %766 = vst.msk [vmem:[%s725 + $0x40] sm:$0xf] %vm249, %v505
        %v767 = vld [vmem:[%s725 + $0x44] sm:$0x1]
        %v768 = vsel %vm260, %v506, %v767
        %769 = vst [vmem:[%s725 + $0x44] sm:$0x1] %v768
        %v770 = vld [vmem:[%s725 + $0x48] sm:$0xf]
        %v771 = vsel %vm727, %v513, %v770
        %772 = vst [vmem:[%s725 + $0x48] sm:$0xf] %v771
        %773 = vst.msk [vmem:[%s725 + $0x4c] sm:$0xf] %vm249, %v522
        %v774 = vld [vmem:[%s725 + $0x50] sm:$0x1]
        %v775 = vsel %vm260, %v523, %v774
        %776 = vst [vmem:[%s725 + $0x50] sm:$0x1] %v775
        %v777 = vld [vmem:[%s725 + $0x54] sm:$0xf]
        %v778 = vsel %vm727, %v530, %v777
        %779 = vst [vmem:[%s725 + $0x54] sm:$0xf] %v778
        %780 = vst.msk [vmem:[%s725 + $0x58] sm:$0xf] %vm249, %v539
        %v781 = vld [vmem:[%s725 + $0x5c] sm:$0x1]
        %v782 = vsel %vm260, %v540, %v781
        %783 = vst [vmem:[%s725 + $0x5c] sm:$0x1] %v782
        %v784 = vld [vmem:[%s725 + $0x60] sm:$0xf]
        %v785 = vsel %vm727, %v547, %v784
        %786 = vst [vmem:[%s725 + $0x60] sm:$0xf] %v785
        %787 = vst.msk [vmem:[%s725 + $0x64] sm:$0xf] %vm249, %v556
        %v788 = vld [vmem:[%s725 + $0x68] sm:$0x1]
        %v789 = vsel %vm260, %v557, %v788
        %790 = vst [vmem:[%s725 + $0x68] sm:$0x1] %v789
        %v791 = vld [vmem:[%s725 + $0x6c] sm:$0xf]
        %v792 = vsel %vm727, %v564, %v791
        %793 = vst [vmem:[%s725 + $0x6c] sm:$0xf] %v792
        %794 = vst.msk [vmem:[%s725 + $0x70] sm:$0xf] %vm249, %v573
        %v795 = vld [vmem:[%s725 + $0x74] sm:$0x1]
        %v796 = vsel %vm260, %v574, %v795
        %797 = vst [vmem:[%s725 + $0x74] sm:$0x1] %v796
        %v798 = vld [vmem:[%s725 + $0x78] sm:$0xf]
        %v799 = vsel %vm727, %v581, %v798
        %800 = vst [vmem:[%s725 + $0x78] sm:$0xf] %v799
        %801 = vst.msk [vmem:[%s725 + $0x7c] sm:$0xf] %vm249, %v590
        %v802 = vld [vmem:[%s725 + $0x80] sm:$0x1]
        %v803 = vsel %vm260, %v591, %v802
        %804 = vst [vmem:[%s725 + $0x80] sm:$0x1] %v803
        %v805 = vld [vmem:[%s725 + $0x84] sm:$0xf]
        %v806 = vsel %vm727, %v598, %v805
        %807 = vst [vmem:[%s725 + $0x84] sm:$0xf] %v806
        %808 = vst.msk [vmem:[%s725 + $0x88] sm:$0xf] %vm249, %v607
        %v809 = vld [vmem:[%s725 + $0x8c] sm:$0x1]
        %v810 = vsel %vm260, %v608, %v809
        %811 = vst [vmem:[%s725 + $0x8c] sm:$0x1] %v810
        %v812 = vld [vmem:[%s725 + $0x90] sm:$0xf]
        %v813 = vsel %vm727, %v615, %v812
        %814 = vst [vmem:[%s725 + $0x90] sm:$0xf] %v813
        %815 = vst.msk [vmem:[%s725 + $0x94] sm:$0xf] %vm249, %v624
        %v816 = vld [vmem:[%s725 + $0x98] sm:$0x1]
        %v817 = vsel %vm260, %v625, %v816
        %818 = vst [vmem:[%s725 + $0x98] sm:$0x1] %v817
        %v819 = vld [vmem:[%s725 + $0x9c] sm:$0xf]
        %v820 = vsel %vm727, %v632, %v819
        %821 = vst [vmem:[%s725 + $0x9c] sm:$0xf] %v820
        %822 = vst.msk [vmem:[%s725 + $0xa0] sm:$0xf] %vm249, %v641
        %v823 = vld [vmem:[%s725 + $0xa4] sm:$0x1]
        %v824 = vsel %vm260, %v642, %v823
        %825 = vst [vmem:[%s725 + $0xa4] sm:$0x1] %v824
        %v826 = vld [vmem:[%s725 + $0xa8] sm:$0xf]
        %v827 = vsel %vm727, %v649, %v826
        %828 = vst [vmem:[%s725 + $0xa8] sm:$0xf] %v827
        %829 = vst.msk [vmem:[%s725 + $0xac] sm:$0xf] %vm249, %v658
        %v830 = vld [vmem:[%s725 + $0xb0] sm:$0x1]
        %v831 = vsel %vm260, %v659, %v830
        %832 = vst [vmem:[%s725 + $0xb0] sm:$0x1] %v831
        %v833 = vld [vmem:[%s725 + $0xb4] sm:$0xf]
        %v834 = vsel %vm727, %v666, %v833
        %835 = vst [vmem:[%s725 + $0xb4] sm:$0xf] %v834
        %836 = vst.msk [vmem:[%s725 + $0xb8] sm:$0xf] %vm249, %v675
        %v837 = vld [vmem:[%s725 + $0xbc] sm:$0x1]
        %v838 = vsel %vm260, %v676, %v837
        %839 = vst [vmem:[%s725 + $0xbc] sm:$0x1] %v838
        %v840 = vld [vmem:[#allocation2] sm:$0xf]
        %v841 = vld [vmem:[#allocation2 + $0x4] sm:$0xf]
        %v842 = vld [vmem:[#allocation2 + $0xc] sm:$0xf]
        %v843 = vld [vmem:[#allocation2 + $0x10] sm:$0xf]
        %v844 = vld [vmem:[#allocation2 + $0x18] sm:$0xf]
        %v845 = vld [vmem:[#allocation2 + $0x1c] sm:$0xf]
        %v846 = vld [vmem:[#allocation2 + $0x24] sm:$0xf]
        %v847 = vld [vmem:[#allocation2 + $0x28] sm:$0xf]
        %v848 = vld [vmem:[#allocation2 + $0x30] sm:$0xf]
        %v849 = vld [vmem:[#allocation2 + $0x34] sm:$0xf]
        %v850 = vld [vmem:[#allocation2 + $0x3c] sm:$0xf]
        %v851 = vld [vmem:[#allocation2 + $0x40] sm:$0xf]
        %v852 = vld [vmem:[#allocation2 + $0x48] sm:$0xf]
        %v853 = vld [vmem:[#allocation2 + $0x4c] sm:$0xf]
        %v854 = vld [vmem:[#allocation2 + $0x54] sm:$0xf]
        %v855 = vld [vmem:[#allocation2 + $0x58] sm:$0xf]
        %v856 = vld [vmem:[#allocation2 + $0x60] sm:$0xf]
        %v857 = vld [vmem:[#allocation2 + $0x64] sm:$0xf]
        %v858 = vld [vmem:[#allocation2 + $0x6c] sm:$0xf]
        %v859 = vld [vmem:[#allocation2 + $0x70] sm:$0xf]
        %v860 = vld [vmem:[#allocation2 + $0x78] sm:$0xf]
        %v861 = vld [vmem:[#allocation2 + $0x7c] sm:$0xf]
        %v862 = vld [vmem:[#allocation2 + $0x84] sm:$0xf]
        %v863 = vld [vmem:[#allocation2 + $0x88] sm:$0xf]
        %v864 = vld [vmem:[#allocation2 + $0x90] sm:$0xf]
        %v865 = vld [vmem:[#allocation2 + $0x94] sm:$0xf]
        %v866 = vld [vmem:[#allocation2 + $0x9c] sm:$0xf]
        %v867 = vld [vmem:[#allocation2 + $0xa0] sm:$0xf]
        %v868 = vld [vmem:[#allocation2 + $0xa8] sm:$0xf]
        %v869 = vld [vmem:[#allocation2 + $0xac] sm:$0xf]
        %v870 = vld [vmem:[#allocation2 + $0xb4] sm:$0xf]
        %v871 = vld [vmem:[#allocation2 + $0xb8] sm:$0xf]
        %v872 = vld [vmem:[%s1] sm:$0x3]
        %v873 = vld [vmem:[#allocation2 + $0x8] sm:$0x1]
        %v874 = vld [vmem:[#allocation2 + $0x14] sm:$0x1]
        %v875 = vld [vmem:[#allocation2 + $0x20] sm:$0x1]
        %v876 = vld [vmem:[#allocation2 + $0x2c] sm:$0x1]
        %v877 = vld [vmem:[#allocation2 + $0x38] sm:$0x1]
        %v878 = vld [vmem:[#allocation2 + $0x44] sm:$0x1]
        %v879 = vld [vmem:[#allocation2 + $0x50] sm:$0x1]
        %v880 = vld [vmem:[#allocation2 + $0x5c] sm:$0x1]
        %v881 = vld [vmem:[#allocation2 + $0x68] sm:$0x1]
        %v882 = vld [vmem:[#allocation2 + $0x74] sm:$0x1]
        %v883 = vld [vmem:[#allocation2 + $0x80] sm:$0x1]
        %v884 = vld [vmem:[#allocation2 + $0x8c] sm:$0x1]
        %v885 = vld [vmem:[#allocation2 + $0x98] sm:$0x1]
        %v886 = vld [vmem:[#allocation2 + $0xa4] sm:$0x1]
        %v887 = vld [vmem:[#allocation2 + $0xb0] sm:$0x1]
        %v888 = vld [vmem:[#allocation2 + $0xbc] sm:$0x1]
        %vm889 = vsmask.f32 3328
        %vm890 = vsmask.f32 7440
        %vm891 = vmor %vm889, %vm890
        %v893 = vshrl.u32 %v840, 16
        %v895 = vrot.slane %v893, 4
        %v896 = vshll.u32 %v840, 16
        %v898 = vrot.slane %v896, 5
        %v899 = vor.u32 %v895, %v898
        %v900 = vrot.slane %v899, 4
        %v902 = vshll.u32 %v841, 16
        %v904 = vrot.slane %v902, 5
        %v905 = vsel %vm891, %v900, %v904
        %v906 = vshrl.u32 %v841, 16
        %v908 = vrot.slane %v906, 4
        %v909 = vor.u32 %v908, %v904
        %v910 = vrot.slane %v909, 4
        %v912 = vshll.u32 %v873, 16
        %v914 = vrot.slane %v912, 5
        %v915 = vsel %vm891, %v910, %v914
        %v917 = vshrl.u32 %v842, 16
        %v919 = vrot.slane %v917, 4
        %v920 = vshll.u32 %v842, 16
        %v922 = vrot.slane %v920, 5
        %v923 = vor.u32 %v919, %v922
        %v924 = vrot.slane %v923, 4
        %v926 = vshll.u32 %v843, 16
        %v928 = vrot.slane %v926, 5
        %v929 = vsel %vm891, %v924, %v928
        %v930 = vshrl.u32 %v843, 16
        %v932 = vrot.slane %v930, 4
        %v933 = vor.u32 %v932, %v928
        %v934 = vrot.slane %v933, 4
        %v936 = vshll.u32 %v874, 16
        %v938 = vrot.slane %v936, 5
        %v939 = vsel %vm891, %v934, %v938
        %v941 = vshrl.u32 %v844, 16
        %v943 = vrot.slane %v941, 4
        %v944 = vshll.u32 %v844, 16
        %v946 = vrot.slane %v944, 5
        %v947 = vor.u32 %v943, %v946
        %v948 = vrot.slane %v947, 4
        %v950 = vshll.u32 %v845, 16
        %v952 = vrot.slane %v950, 5
        %v953 = vsel %vm891, %v948, %v952
        %v954 = vshrl.u32 %v845, 16
        %v956 = vrot.slane %v954, 4
        %v957 = vor.u32 %v956, %v952
        %v958 = vrot.slane %v957, 4
        %v960 = vshll.u32 %v875, 16
        %v962 = vrot.slane %v960, 5
        %v963 = vsel %vm891, %v958, %v962
        %v965 = vshrl.u32 %v846, 16
        %v967 = vrot.slane %v965, 4
        %v968 = vshll.u32 %v846, 16
        %v970 = vrot.slane %v968, 5
        %v971 = vor.u32 %v967, %v970
        %v972 = vrot.slane %v971, 4
        %v974 = vshll.u32 %v847, 16
        %v976 = vrot.slane %v974, 5
        %v977 = vsel %vm891, %v972, %v976
        %v978 = vshrl.u32 %v847, 16
        %v980 = vrot.slane %v978, 4
        %v981 = vor.u32 %v980, %v976
        %v982 = vrot.slane %v981, 4
        %v984 = vshll.u32 %v876, 16
        %v986 = vrot.slane %v984, 5
        %v987 = vsel %vm891, %v982, %v986
        %v989 = vshrl.u32 %v848, 16
        %v991 = vrot.slane %v989, 4
        %v992 = vshll.u32 %v848, 16
        %v994 = vrot.slane %v992, 5
        %v995 = vor.u32 %v991, %v994
        %v996 = vrot.slane %v995, 4
        %v998 = vshll.u32 %v849, 16
        %v1000 = vrot.slane %v998, 5
        %v1001 = vsel %vm891, %v996, %v1000
        %v1002 = vshrl.u32 %v849, 16
        %v1004 = vrot.slane %v1002, 4
        %v1005 = vor.u32 %v1004, %v1000
        %v1006 = vrot.slane %v1005, 4
        %v1008 = vshll.u32 %v877, 16
        %v1010 = vrot.slane %v1008, 5
        %v1011 = vsel %vm891, %v1006, %v1010
        %v1013 = vshrl.u32 %v850, 16
        %v1015 = vrot.slane %v1013, 4
        %v1016 = vshll.u32 %v850, 16
        %v1018 = vrot.slane %v1016, 5
        %v1019 = vor.u32 %v1015, %v1018
        %v1020 = vrot.slane %v1019, 4
        %v1022 = vshll.u32 %v851, 16
        %v1024 = vrot.slane %v1022, 5
        %v1025 = vsel %vm891, %v1020, %v1024
        %v1026 = vshrl.u32 %v851, 16
        %v1028 = vrot.slane %v1026, 4
        %v1029 = vor.u32 %v1028, %v1024
        %v1030 = vrot.slane %v1029, 4
        %v1032 = vshll.u32 %v878, 16
        %v1034 = vrot.slane %v1032, 5
        %v1035 = vsel %vm891, %v1030, %v1034
        %v1037 = vshrl.u32 %v852, 16
        %v1039 = vrot.slane %v1037, 4
        %v1040 = vshll.u32 %v852, 16
        %v1042 = vrot.slane %v1040, 5
        %v1043 = vor.u32 %v1039, %v1042
        %v1044 = vrot.slane %v1043, 4
        %v1046 = vshll.u32 %v853, 16
        %v1048 = vrot.slane %v1046, 5
        %v1049 = vsel %vm891, %v1044, %v1048
        %v1050 = vshrl.u32 %v853, 16
        %v1052 = vrot.slane %v1050, 4
        %v1053 = vor.u32 %v1052, %v1048
        %v1054 = vrot.slane %v1053, 4
        %v1056 = vshll.u32 %v879, 16
        %v1058 = vrot.slane %v1056, 5
        %v1059 = vsel %vm891, %v1054, %v1058
        %v1061 = vshrl.u32 %v854, 16
        %v1063 = vrot.slane %v1061, 4
        %v1064 = vshll.u32 %v854, 16
        %v1066 = vrot.slane %v1064, 5
        %v1067 = vor.u32 %v1063, %v1066
        %v1068 = vrot.slane %v1067, 4
        %v1070 = vshll.u32 %v855, 16
        %v1072 = vrot.slane %v1070, 5
        %v1073 = vsel %vm891, %v1068, %v1072
        %v1074 = vshrl.u32 %v855, 16
        %v1076 = vrot.slane %v1074, 4
        %v1077 = vor.u32 %v1076, %v1072
        %v1078 = vrot.slane %v1077, 4
        %v1080 = vshll.u32 %v880, 16
        %v1082 = vrot.slane %v1080, 5
        %v1083 = vsel %vm891, %v1078, %v1082
        %v1085 = vshrl.u32 %v856, 16
        %v1087 = vrot.slane %v1085, 4
        %v1088 = vshll.u32 %v856, 16
        %v1090 = vrot.slane %v1088, 5
        %v1091 = vor.u32 %v1087, %v1090
        %v1092 = vrot.slane %v1091, 4
        %v1094 = vshll.u32 %v857, 16
        %v1096 = vrot.slane %v1094, 5
        %v1097 = vsel %vm891, %v1092, %v1096
        %v1098 = vshrl.u32 %v857, 16
        %v1100 = vrot.slane %v1098, 4
        %v1101 = vor.u32 %v1100, %v1096
        %v1102 = vrot.slane %v1101, 4
        %v1104 = vshll.u32 %v881, 16
        %v1106 = vrot.slane %v1104, 5
        %v1107 = vsel %vm891, %v1102, %v1106
        %v1109 = vshrl.u32 %v858, 16
        %v1111 = vrot.slane %v1109, 4
        %v1112 = vshll.u32 %v858, 16
        %v1114 = vrot.slane %v1112, 5
        %v1115 = vor.u32 %v1111, %v1114
        %v1116 = vrot.slane %v1115, 4
        %v1118 = vshll.u32 %v859, 16
        %v1120 = vrot.slane %v1118, 5
        %v1121 = vsel %vm891, %v1116, %v1120
        %v1122 = vshrl.u32 %v859, 16
        %v1124 = vrot.slane %v1122, 4
        %v1125 = vor.u32 %v1124, %v1120
        %v1126 = vrot.slane %v1125, 4
        %v1128 = vshll.u32 %v882, 16
        %v1130 = vrot.slane %v1128, 5
        %v1131 = vsel %vm891, %v1126, %v1130
        %v1133 = vshrl.u32 %v860, 16
        %v1135 = vrot.slane %v1133, 4
        %v1136 = vshll.u32 %v860, 16
        %v1138 = vrot.slane %v1136, 5
        %v1139 = vor.u32 %v1135, %v1138
        %v1140 = vrot.slane %v1139, 4
        %v1142 = vshll.u32 %v861, 16
        %v1144 = vrot.slane %v1142, 5
        %v1145 = vsel %vm891, %v1140, %v1144
        %v1146 = vshrl.u32 %v861, 16
        %v1148 = vrot.slane %v1146, 4
        %v1149 = vor.u32 %v1148, %v1144
        %v1150 = vrot.slane %v1149, 4
        %v1152 = vshll.u32 %v883, 16
        %v1154 = vrot.slane %v1152, 5
        %v1155 = vsel %vm891, %v1150, %v1154
        %v1157 = vshrl.u32 %v862, 16
        %v1159 = vrot.slane %v1157, 4
        %v1160 = vshll.u32 %v862, 16
        %v1162 = vrot.slane %v1160, 5
        %v1163 = vor.u32 %v1159, %v1162
        %v1164 = vrot.slane %v1163, 4
        %v1166 = vshll.u32 %v863, 16
        %v1168 = vrot.slane %v1166, 5
        %v1169 = vsel %vm891, %v1164, %v1168
        %v1170 = vshrl.u32 %v863, 16
        %v1172 = vrot.slane %v1170, 4
        %v1173 = vor.u32 %v1172, %v1168
        %v1174 = vrot.slane %v1173, 4
        %v1176 = vshll.u32 %v884, 16
        %v1178 = vrot.slane %v1176, 5
        %v1179 = vsel %vm891, %v1174, %v1178
        %v1181 = vshrl.u32 %v864, 16
        %v1183 = vrot.slane %v1181, 4
        %v1184 = vshll.u32 %v864, 16
        %v1186 = vrot.slane %v1184, 5
        %v1187 = vor.u32 %v1183, %v1186
        %v1188 = vrot.slane %v1187, 4
        %v1190 = vshll.u32 %v865, 16
        %v1192 = vrot.slane %v1190, 5
        %v1193 = vsel %vm891, %v1188, %v1192
        %v1194 = vshrl.u32 %v865, 16
        %v1196 = vrot.slane %v1194, 4
        %v1197 = vor.u32 %v1196, %v1192
        %v1198 = vrot.slane %v1197, 4
        %v1200 = vshll.u32 %v885, 16
        %v1202 = vrot.slane %v1200, 5
        %v1203 = vsel %vm891, %v1198, %v1202
        %v1205 = vshrl.u32 %v866, 16
        %v1207 = vrot.slane %v1205, 4
        %v1208 = vshll.u32 %v866, 16
        %v1210 = vrot.slane %v1208, 5
        %v1211 = vor.u32 %v1207, %v1210
        %v1212 = vrot.slane %v1211, 4
        %v1214 = vshll.u32 %v867, 16
        %v1216 = vrot.slane %v1214, 5
        %v1217 = vsel %vm891, %v1212, %v1216
        %v1218 = vshrl.u32 %v867, 16
        %v1220 = vrot.slane %v1218, 4
        %v1221 = vor.u32 %v1220, %v1216
        %v1222 = vrot.slane %v1221, 4
        %v1224 = vshll.u32 %v886, 16
        %v1226 = vrot.slane %v1224, 5
        %v1227 = vsel %vm891, %v1222, %v1226
        %v1229 = vshrl.u32 %v868, 16
        %v1231 = vrot.slane %v1229, 4
        %v1232 = vshll.u32 %v868, 16
        %v1234 = vrot.slane %v1232, 5
        %v1235 = vor.u32 %v1231, %v1234
        %v1236 = vrot.slane %v1235, 4
        %v1238 = vshll.u32 %v869, 16
        %v1240 = vrot.slane %v1238, 5
        %v1241 = vsel %vm891, %v1236, %v1240
        %v1242 = vshrl.u32 %v869, 16
        %v1244 = vrot.slane %v1242, 4
        %v1245 = vor.u32 %v1244, %v1240
        %v1246 = vrot.slane %v1245, 4
        %v1248 = vshll.u32 %v887, 16
        %v1250 = vrot.slane %v1248, 5
        %v1251 = vsel %vm891, %v1246, %v1250
        %v1253 = vshrl.u32 %v870, 16
        %v1255 = vrot.slane %v1253, 4
        %v1256 = vshll.u32 %v870, 16
        %v1258 = vrot.slane %v1256, 5
        %v1259 = vor.u32 %v1255, %v1258
        %v1260 = vrot.slane %v1259, 4
        %v1262 = vshll.u32 %v871, 16
        %v1264 = vrot.slane %v1262, 5
        %v1265 = vsel %vm891, %v1260, %v1264
        %v1266 = vshrl.u32 %v871, 16
        %v1268 = vrot.slane %v1266, 4
        %v1269 = vor.u32 %v1268, %v1264
        %v1270 = vrot.slane %v1269, 4
        %v1272 = vshll.u32 %v888, 16
        %v1274 = vrot.slane %v1272, 5
        %v1275 = vsel %vm891, %v1270, %v1274
        %v1276 = vld [vmem:[%s1] sm:$0xc]
        %v1277 = vunpack.c.l.b16 %v905
        %v1278 = vunpack.c.l.b16 %v915
        %v1279 = vunpack.c.l.b16 %v929
        %v1280 = vunpack.c.l.b16 %v939
        %v1281 = vunpack.c.l.b16 %v953
        %v1282 = vunpack.c.l.b16 %v963
        %v1283 = vunpack.c.l.b16 %v977
        %v1284 = vunpack.c.l.b16 %v987
        %v1285 = vunpack.c.l.b16 %v1001
        %v1286 = vunpack.c.l.b16 %v1011
        %v1287 = vunpack.c.l.b16 %v1025
        %v1288 = vunpack.c.l.b16 %v1035
        %v1289 = vunpack.c.l.b16 %v1049
        %v1290 = vunpack.c.l.b16 %v1059
        %v1291 = vunpack.c.l.b16 %v1073
        %v1292 = vunpack.c.l.b16 %v1083
        %v1293 = vunpack.c.l.b16 %v1097
        %v1294 = vunpack.c.l.b16 %v1107
        %v1295 = vunpack.c.l.b16 %v1121
        %v1296 = vunpack.c.l.b16 %v1131
        %v1297 = vunpack.c.l.b16 %v1145
        %v1298 = vunpack.c.l.b16 %v1155
        %v1299 = vunpack.c.l.b16 %v1169
        %v1300 = vunpack.c.l.b16 %v1179
        %v1301 = vunpack.c.l.b16 %v1193
        %v1302 = vunpack.c.l.b16 %v1203
        %v1303 = vunpack.c.l.b16 %v1217
        %v1304 = vunpack.c.l.b16 %v1227
        %v1305 = vunpack.c.l.b16 %v1241
        %v1306 = vunpack.c.l.b16 %v1251
        %v1307 = vunpack.c.l.b16 %v1265
        %v1308 = vunpack.c.l.b16 %v1275
        %v1309 = vpack.c.b16 %v1278, %v1277
        %v1310 = vpack.c.b16 %v1280, %v1279
        %v1311 = vpack.c.b16 %v1282, %v1281
        %v1312 = vpack.c.b16 %v1284, %v1283
        %v1313 = vpack.c.b16 %v1286, %v1285
        %v1314 = vpack.c.b16 %v1288, %v1287
        %v1315 = vpack.c.b16 %v1290, %v1289
        %v1316 = vpack.c.b16 %v1292, %v1291
        %v1317 = vpack.c.b16 %v1294, %v1293
        %v1318 = vpack.c.b16 %v1296, %v1295
        %v1319 = vpack.c.b16 %v1298, %v1297
        %v1320 = vpack.c.b16 %v1300, %v1299
        %v1321 = vpack.c.b16 %v1302, %v1301
        %v1322 = vpack.c.b16 %v1304, %v1303
        %v1323 = vpack.c.b16 %v1306, %v1305
        %v1324 = vpack.c.b16 %v1308, %v1307
        %v1326 = vunpack.c.l.b16 %v1276
        %v1327 = vpack.c.b16 %v1326, %v1326
        %v1328 = vrot.slane %v1327, 2
        %vm1329 = vcmask 31744
        %v1331 = vsel %vm1329, %v1309, 0
        %v1334 = vsel %vm1329, %v1310, 0
        %v1337 = vsel %vm1329, %v1311, 0
        %v1340 = vsel %vm1329, %v1312, 0
        %v1343 = vsel %vm1329, %v1313, 0
        %v1346 = vsel %vm1329, %v1314, 0
        %v1349 = vsel %vm1329, %v1315, 0
        %v1352 = vsel %vm1329, %v1316, 0
        %v1355 = vsel %vm1329, %v1317, 0
        %v1358 = vsel %vm1329, %v1318, 0
        %v1361 = vsel %vm1329, %v1319, 0
        %v1364 = vsel %vm1329, %v1320, 0
        %v1367 = vsel %vm1329, %v1321, 0
        %v1370 = vsel %vm1329, %v1322, 0
        %v1373 = vsel %vm1329, %v1323, 0
        %v1376 = vsel %vm1329, %v1324, 0
        %vm1378 = vcmask 1041408
        %v1380 = vsel %vm1378, %v1328, 0
        %1382 = vmatprep.subr.bf16.mxu0 0
        %1383 = vmatpush1.bf16.msra.mxu0 0
        %1384 = vmatprep.subr.bf16.mxu0 0
        %1385 = vmatpush1.bf16.msra.mxu0 0
        %1386 = vmatprep.subr.bf16.mxu0 0
        %1387 = vmatpush1.bf16.msra.mxu0 0
        %1388 = vmatprep.subr.bf16.mxu0 0
        %1389 = vmatpush1.bf16.msra.mxu0 0
        %1390 = vmatprep.subr.bf16.mxu0 0
        %1391 = vmatpush1.bf16.msra.mxu0 0
        %1392 = vmatprep.subr.bf16.mxu0 0
        %1393 = vmatpush1.bf16.msra.mxu0 0
        %1394 = vmatprep.subr.bf16.mxu0 0
        %1395 = vmatpush1.bf16.msra.mxu0 0
        %1396 = vmatprep.subr.bf16.mxu0 0
        %1397 = vmatpush1.bf16.msra.mxu0 %v1380
        %1398 = vmatprep.subr.bf16.mxu0 0
        %1399 = vmatpush2.bf16.msra.mxu0 0
        %1400 = vmatprep.subr.bf16.mxu0 0
        %1401 = vmatpush2.bf16.msra.mxu0 0
        %1402 = vmatprep.subr.bf16.mxu0 0
        %1403 = vmatpush2.bf16.msra.mxu0 0
        %1404 = vmatprep.subr.bf16.mxu0 0
        %1405 = vmatpush2.bf16.msra.mxu0 0
        %1406 = vmatprep.subr.bf16.mxu0 0
        %1407 = vmatpush2.bf16.msra.mxu0 0
        %1408 = vmatprep.subr.bf16.mxu0 0
        %1409 = vmatpush2.bf16.msra.mxu0 0
        %1410 = vmatprep.subr.bf16.mxu0 0
        %1411 = vmatpush2.bf16.msra.mxu0 0
        %1412 = vmatprep.subr.bf16.mxu0 0
        %1413 = vmatpush2.bf16.msra.mxu0 0
        %1414 = vmatprep.mubr.bf16.mxu0 0
        %1415 = vmatmul.mubr.bf16.gmra.mxu0 %v1331
        %v1416 = vpop.f32.mrf.mxu0
        %v1417 = vadd.f32 0.0, %v1416
        %v1418 = vpop.f32.mrf.mxu0
        %v1419 = vpop.f32.mrf.mxu0
        %v1420 = vadd.f32 0.0, %v1419
        %v1421 = vpop.f32.mrf.mxu0
        %1422 = vmatprep.mubr.bf16.mxu0 0
        %1423 = vmatmul.mubr.bf16.gmra.mxu0 %v1334
        %v1424 = vpop.f32.mrf.mxu0
        %v1425 = vadd.f32 0.0, %v1424
        %v1426 = vpop.f32.mrf.mxu0
        %v1427 = vpop.f32.mrf.mxu0
        %v1428 = vadd.f32 0.0, %v1427
        %v1429 = vpop.f32.mrf.mxu0
        %1430 = vmatprep.mubr.bf16.mxu0 0
        %1431 = vmatmul.mubr.bf16.gmra.mxu0 %v1337
        %v1432 = vpop.f32.mrf.mxu0
        %v1433 = vadd.f32 0.0, %v1432
        %v1434 = vpop.f32.mrf.mxu0
        %v1435 = vpop.f32.mrf.mxu0
        %v1436 = vadd.f32 0.0, %v1435
        %v1437 = vpop.f32.mrf.mxu0
        %1438 = vmatprep.mubr.bf16.mxu0 0
        %1439 = vmatmul.mubr.bf16.gmra.mxu0 %v1340
        %v1440 = vpop.f32.mrf.mxu0
        %v1441 = vadd.f32 0.0, %v1440
        %v1442 = vpop.f32.mrf.mxu0
        %v1443 = vpop.f32.mrf.mxu0
        %v1444 = vadd.f32 0.0, %v1443
        %v1445 = vpop.f32.mrf.mxu0
        %1446 = vmatprep.mubr.bf16.mxu0 0
        %1447 = vmatmul.mubr.bf16.gmra.mxu0 %v1343
        %v1448 = vpop.f32.mrf.mxu0
        %v1449 = vadd.f32 0.0, %v1448
        %v1450 = vpop.f32.mrf.mxu0
        %v1451 = vpop.f32.mrf.mxu0
        %v1452 = vadd.f32 0.0, %v1451
        %v1453 = vpop.f32.mrf.mxu0
        %1454 = vmatprep.mubr.bf16.mxu0 0
        %1455 = vmatmul.mubr.bf16.gmra.mxu0 %v1346
        %v1456 = vpop.f32.mrf.mxu0
        %v1457 = vadd.f32 0.0, %v1456
        %v1458 = vpop.f32.mrf.mxu0
        %v1459 = vpop.f32.mrf.mxu0
        %v1460 = vadd.f32 0.0, %v1459
        %v1461 = vpop.f32.mrf.mxu0
        %1462 = vmatprep.mubr.bf16.mxu0 0
        %1463 = vmatmul.mubr.bf16.gmra.mxu0 %v1349
        %v1464 = vpop.f32.mrf.mxu0
        %v1465 = vadd.f32 0.0, %v1464
        %v1466 = vpop.f32.mrf.mxu0
        %v1467 = vpop.f32.mrf.mxu0
        %v1468 = vadd.f32 0.0, %v1467
        %v1469 = vpop.f32.mrf.mxu0
        %1470 = vmatprep.mubr.bf16.mxu0 0
        %1471 = vmatmul.mubr.bf16.gmra.mxu0 %v1352
        %v1472 = vpop.f32.mrf.mxu0
        %v1473 = vadd.f32 0.0, %v1472
        %v1474 = vpop.f32.mrf.mxu0
        %v1475 = vpop.f32.mrf.mxu0
        %v1476 = vadd.f32 0.0, %v1475
        %v1477 = vpop.f32.mrf.mxu0
        %1478 = vmatprep.mubr.bf16.mxu0 0
        %1479 = vmatmul.mubr.bf16.gmra.mxu0 %v1355
        %v1480 = vpop.f32.mrf.mxu0
        %v1481 = vadd.f32 0.0, %v1480
        %v1482 = vpop.f32.mrf.mxu0
        %v1483 = vpop.f32.mrf.mxu0
        %v1484 = vadd.f32 0.0, %v1483
        %v1485 = vpop.f32.mrf.mxu0
        %1486 = vmatprep.mubr.bf16.mxu0 0
        %1487 = vmatmul.mubr.bf16.gmra.mxu0 %v1358
        %v1488 = vpop.f32.mrf.mxu0
        %v1489 = vadd.f32 0.0, %v1488
        %v1490 = vpop.f32.mrf.mxu0
        %v1491 = vpop.f32.mrf.mxu0
        %v1492 = vadd.f32 0.0, %v1491
        %v1493 = vpop.f32.mrf.mxu0
        %1494 = vmatprep.mubr.bf16.mxu0 0
        %1495 = vmatmul.mubr.bf16.gmra.mxu0 %v1361
        %v1496 = vpop.f32.mrf.mxu0
        %v1497 = vadd.f32 0.0, %v1496
        %v1498 = vpop.f32.mrf.mxu0
        %v1499 = vpop.f32.mrf.mxu0
        %v1500 = vadd.f32 0.0, %v1499
        %v1501 = vpop.f32.mrf.mxu0
        %1502 = vmatprep.mubr.bf16.mxu0 0
        %1503 = vmatmul.mubr.bf16.gmra.mxu0 %v1364
        %v1504 = vpop.f32.mrf.mxu0
        %v1505 = vadd.f32 0.0, %v1504
        %v1506 = vpop.f32.mrf.mxu0
        %v1507 = vpop.f32.mrf.mxu0
        %v1508 = vadd.f32 0.0, %v1507
        %v1509 = vpop.f32.mrf.mxu0
        %1510 = vmatprep.mubr.bf16.mxu0 0
        %1511 = vmatmul.mubr.bf16.gmra.mxu0 %v1367
        %v1512 = vpop.f32.mrf.mxu0
        %v1513 = vadd.f32 0.0, %v1512
        %v1514 = vpop.f32.mrf.mxu0
        %v1515 = vpop.f32.mrf.mxu0
        %v1516 = vadd.f32 0.0, %v1515
        %v1517 = vpop.f32.mrf.mxu0
        %1518 = vmatprep.mubr.bf16.mxu0 0
        %1519 = vmatmul.mubr.bf16.gmra.mxu0 %v1370
        %v1520 = vpop.f32.mrf.mxu0
        %v1521 = vadd.f32 0.0, %v1520
        %v1522 = vpop.f32.mrf.mxu0
        %v1523 = vpop.f32.mrf.mxu0
        %v1524 = vadd.f32 0.0, %v1523
        %v1525 = vpop.f32.mrf.mxu0
        %1526 = vmatprep.mubr.bf16.mxu0 0
        %1527 = vmatmul.mubr.bf16.gmra.mxu0 %v1373
        %v1528 = vpop.f32.mrf.mxu0
        %v1529 = vadd.f32 0.0, %v1528
        %v1530 = vpop.f32.mrf.mxu0
        %v1531 = vpop.f32.mrf.mxu0
        %v1532 = vadd.f32 0.0, %v1531
        %v1533 = vpop.f32.mrf.mxu0
        %1534 = vmatprep.mubr.bf16.mxu0 0
        %1535 = vmatmul.mubr.bf16.gmra.mxu0 %v1376
        %v1536 = vpop.f32.mrf.mxu0
        %v1537 = vadd.f32 0.0, %v1536
        %v1538 = vpop.f32.mrf.mxu0
        %v1539 = vpop.f32.mrf.mxu0
        %v1540 = vadd.f32 0.0, %v1539
        %v1541 = vpop.f32.mrf.mxu0
        %1542 = vdwg.mxu0
        %v1575 = vunpack.c.l.b16 %v840
        %v1576 = vunpack.c.l.b16 %v841
        %v1577 = vunpack.c.l.b16 %v842
        %v1578 = vunpack.c.l.b16 %v843
        %v1579 = vunpack.c.l.b16 %v844
        %v1580 = vunpack.c.l.b16 %v845
        %v1581 = vunpack.c.l.b16 %v846
        %v1582 = vunpack.c.l.b16 %v847
        %v1583 = vunpack.c.l.b16 %v848
        %v1584 = vunpack.c.l.b16 %v849
        %v1585 = vunpack.c.l.b16 %v850
        %v1586 = vunpack.c.l.b16 %v851
        %v1587 = vunpack.c.l.b16 %v852
        %v1588 = vunpack.c.l.b16 %v853
        %v1589 = vunpack.c.l.b16 %v854
        %v1590 = vunpack.c.l.b16 %v855
        %v1591 = vunpack.c.l.b16 %v856
        %v1592 = vunpack.c.l.b16 %v857
        %v1593 = vunpack.c.l.b16 %v858
        %v1594 = vunpack.c.l.b16 %v859
        %v1595 = vunpack.c.l.b16 %v860
        %v1596 = vunpack.c.l.b16 %v861
        %v1597 = vunpack.c.l.b16 %v862
        %v1598 = vunpack.c.l.b16 %v863
        %v1599 = vunpack.c.l.b16 %v864
        %v1600 = vunpack.c.l.b16 %v865
        %v1601 = vunpack.c.l.b16 %v866
        %v1602 = vunpack.c.l.b16 %v867
        %v1603 = vunpack.c.l.b16 %v868
        %v1604 = vunpack.c.l.b16 %v869
        %v1605 = vunpack.c.l.b16 %v870
        %v1606 = vunpack.c.l.b16 %v871
        %v1607 = vpack.c.b16 %v1576, %v1575
        %v1608 = vpack.c.b16 %v1578, %v1577
        %v1609 = vpack.c.b16 %v1580, %v1579
        %v1610 = vpack.c.b16 %v1582, %v1581
        %v1611 = vpack.c.b16 %v1584, %v1583
        %v1612 = vpack.c.b16 %v1586, %v1585
        %v1613 = vpack.c.b16 %v1588, %v1587
        %v1614 = vpack.c.b16 %v1590, %v1589
        %v1615 = vpack.c.b16 %v1592, %v1591
        %v1616 = vpack.c.b16 %v1594, %v1593
        %v1617 = vpack.c.b16 %v1596, %v1595
        %v1618 = vpack.c.b16 %v1598, %v1597
        %v1619 = vpack.c.b16 %v1600, %v1599
        %v1620 = vpack.c.b16 %v1602, %v1601
        %v1621 = vpack.c.b16 %v1604, %v1603
        %v1622 = vpack.c.b16 %v1606, %v1605
        %v1624 = vsel %vm1329, %v1607, 0
        %v1627 = vsel %vm1329, %v1608, 0
        %v1630 = vsel %vm1329, %v1609, 0
        %v1633 = vsel %vm1329, %v1610, 0
        %v1636 = vsel %vm1329, %v1611, 0
        %v1639 = vsel %vm1329, %v1612, 0
        %v1642 = vsel %vm1329, %v1613, 0
        %v1645 = vsel %vm1329, %v1614, 0
        %v1648 = vsel %vm1329, %v1615, 0
        %v1651 = vsel %vm1329, %v1616, 0
        %v1654 = vsel %vm1329, %v1617, 0
        %v1657 = vsel %vm1329, %v1618, 0
        %v1660 = vsel %vm1329, %v1619, 0
        %v1663 = vsel %vm1329, %v1620, 0
        %v1666 = vsel %vm1329, %v1621, 0
        %v1669 = vsel %vm1329, %v1622, 0
        %v1672 = vsel %vm1378, %v872, 0
        %1674 = vmatprep.subr.bf16.mxu0 0
        %1675 = vmatpush1.bf16.msra.mxu0 0
        %1676 = vmatprep.subr.bf16.mxu0 0
        %1677 = vmatpush1.bf16.msra.mxu0 0
        %1678 = vmatprep.subr.bf16.mxu0 0
        %1679 = vmatpush1.bf16.msra.mxu0 0
        %1680 = vmatprep.subr.bf16.mxu0 0
        %1681 = vmatpush1.bf16.msra.mxu0 0
        %1682 = vmatprep.subr.bf16.mxu0 0
        %1683 = vmatpush1.bf16.msra.mxu0 0
        %1684 = vmatprep.subr.bf16.mxu0 0
        %1685 = vmatpush1.bf16.msra.mxu0 0
        %1686 = vmatprep.subr.bf16.mxu0 0
        %1687 = vmatpush1.bf16.msra.mxu0 0
        %1688 = vmatprep.subr.bf16.mxu0 0
        %1689 = vmatpush1.bf16.msra.mxu0 %v1672
        %1690 = vmatprep.subr.bf16.mxu0 0
        %1691 = vmatpush2.bf16.msra.mxu0 0
        %1692 = vmatprep.subr.bf16.mxu0 0
        %1693 = vmatpush2.bf16.msra.mxu0 0
        %1694 = vmatprep.subr.bf16.mxu0 0
        %1695 = vmatpush2.bf16.msra.mxu0 0
        %1696 = vmatprep.subr.bf16.mxu0 0
        %1697 = vmatpush2.bf16.msra.mxu0 0
        %1698 = vmatprep.subr.bf16.mxu0 0
        %1699 = vmatpush2.bf16.msra.mxu0 0
        %1700 = vmatprep.subr.bf16.mxu0 0
        %1701 = vmatpush2.bf16.msra.mxu0 0
        %1702 = vmatprep.subr.bf16.mxu0 0
        %1703 = vmatpush2.bf16.msra.mxu0 0
        %1704 = vmatprep.subr.bf16.mxu0 0
        %1705 = vmatpush2.bf16.msra.mxu0 0
        %1706 = vmatprep.mubr.bf16.mxu0 0
        %1707 = vmatmul.mubr.bf16.gmra.mxu0 %v1624
        %v1708 = vpop.f32.mrf.mxu0
        %v1709 = vadd.f32 %v1417, %v1708
        %v1710 = vpop.f32.mrf.mxu0
        %v1711 = vpop.f32.mrf.mxu0
        %v1712 = vadd.f32 %v1420, %v1711
        %v1713 = vpop.f32.mrf.mxu0
        %1714 = vmatprep.mubr.bf16.mxu0 0
        %1715 = vmatmul.mubr.bf16.gmra.mxu0 %v1627
        %v1716 = vpop.f32.mrf.mxu0
        %v1717 = vadd.f32 %v1425, %v1716
        %v1718 = vpop.f32.mrf.mxu0
        %v1719 = vpop.f32.mrf.mxu0
        %v1720 = vadd.f32 %v1428, %v1719
        %v1721 = vpop.f32.mrf.mxu0
        %1722 = vmatprep.mubr.bf16.mxu0 0
        %1723 = vmatmul.mubr.bf16.gmra.mxu0 %v1630
        %v1724 = vpop.f32.mrf.mxu0
        %v1725 = vadd.f32 %v1433, %v1724
        %v1726 = vpop.f32.mrf.mxu0
        %v1727 = vpop.f32.mrf.mxu0
        %v1728 = vadd.f32 %v1436, %v1727
        %v1729 = vpop.f32.mrf.mxu0
        %1730 = vmatprep.mubr.bf16.mxu0 0
        %1731 = vmatmul.mubr.bf16.gmra.mxu0 %v1633
        %v1732 = vpop.f32.mrf.mxu0
        %v1733 = vadd.f32 %v1441, %v1732
        %v1734 = vpop.f32.mrf.mxu0
        %v1735 = vpop.f32.mrf.mxu0
        %v1736 = vadd.f32 %v1444, %v1735
        %v1737 = vpop.f32.mrf.mxu0
        %1738 = vmatprep.mubr.bf16.mxu0 0
        %1739 = vmatmul.mubr.bf16.gmra.mxu0 %v1636
        %v1740 = vpop.f32.mrf.mxu0
        %v1741 = vadd.f32 %v1449, %v1740
        %v1742 = vpop.f32.mrf.mxu0
        %v1743 = vpop.f32.mrf.mxu0
        %v1744 = vadd.f32 %v1452, %v1743
        %v1745 = vpop.f32.mrf.mxu0
        %1746 = vmatprep.mubr.bf16.mxu0 0
        %1747 = vmatmul.mubr.bf16.gmra.mxu0 %v1639
        %v1748 = vpop.f32.mrf.mxu0
        %v1749 = vadd.f32 %v1457, %v1748
        %v1750 = vpop.f32.mrf.mxu0
        %v1751 = vpop.f32.mrf.mxu0
        %v1752 = vadd.f32 %v1460, %v1751
        %v1753 = vpop.f32.mrf.mxu0
        %1754 = vmatprep.mubr.bf16.mxu0 0
        %1755 = vmatmul.mubr.bf16.gmra.mxu0 %v1642
        %v1756 = vpop.f32.mrf.mxu0
        %v1757 = vadd.f32 %v1465, %v1756
        %v1758 = vpop.f32.mrf.mxu0
        %v1759 = vpop.f32.mrf.mxu0
        %v1760 = vadd.f32 %v1468, %v1759
        %v1761 = vpop.f32.mrf.mxu0
        %1762 = vmatprep.mubr.bf16.mxu0 0
        %1763 = vmatmul.mubr.bf16.gmra.mxu0 %v1645
        %v1764 = vpop.f32.mrf.mxu0
        %v1765 = vadd.f32 %v1473, %v1764
        %v1766 = vpop.f32.mrf.mxu0
        %v1767 = vpop.f32.mrf.mxu0
        %v1768 = vadd.f32 %v1476, %v1767
        %v1769 = vpop.f32.mrf.mxu0
        %1770 = vmatprep.mubr.bf16.mxu0 0
        %1771 = vmatmul.mubr.bf16.gmra.mxu0 %v1648
        %v1772 = vpop.f32.mrf.mxu0
        %v1773 = vadd.f32 %v1481, %v1772
        %v1774 = vpop.f32.mrf.mxu0
        %v1775 = vpop.f32.mrf.mxu0
        %v1776 = vadd.f32 %v1484, %v1775
        %v1777 = vpop.f32.mrf.mxu0
        %1778 = vmatprep.mubr.bf16.mxu0 0
        %1779 = vmatmul.mubr.bf16.gmra.mxu0 %v1651
        %v1780 = vpop.f32.mrf.mxu0
        %v1781 = vadd.f32 %v1489, %v1780
        %v1782 = vpop.f32.mrf.mxu0
        %v1783 = vpop.f32.mrf.mxu0
        %v1784 = vadd.f32 %v1492, %v1783
        %v1785 = vpop.f32.mrf.mxu0
        %1786 = vmatprep.mubr.bf16.mxu0 0
        %1787 = vmatmul.mubr.bf16.gmra.mxu0 %v1654
        %v1788 = vpop.f32.mrf.mxu0
        %v1789 = vadd.f32 %v1497, %v1788
        %v1790 = vpop.f32.mrf.mxu0
        %v1791 = vpop.f32.mrf.mxu0
        %v1792 = vadd.f32 %v1500, %v1791
        %v1793 = vpop.f32.mrf.mxu0
        %1794 = vmatprep.mubr.bf16.mxu0 0
        %1795 = vmatmul.mubr.bf16.gmra.mxu0 %v1657
        %v1796 = vpop.f32.mrf.mxu0
        %v1797 = vadd.f32 %v1505, %v1796
        %v1798 = vpop.f32.mrf.mxu0
        %v1799 = vpop.f32.mrf.mxu0
        %v1800 = vadd.f32 %v1508, %v1799
        %v1801 = vpop.f32.mrf.mxu0
        %1802 = vmatprep.mubr.bf16.mxu0 0
        %1803 = vmatmul.mubr.bf16.gmra.mxu0 %v1660
        %v1804 = vpop.f32.mrf.mxu0
        %v1805 = vadd.f32 %v1513, %v1804
        %v1806 = vpop.f32.mrf.mxu0
        %v1807 = vpop.f32.mrf.mxu0
        %v1808 = vadd.f32 %v1516, %v1807
        %v1809 = vpop.f32.mrf.mxu0
        %1810 = vmatprep.mubr.bf16.mxu0 0
        %1811 = vmatmul.mubr.bf16.gmra.mxu0 %v1663
        %v1812 = vpop.f32.mrf.mxu0
        %v1813 = vadd.f32 %v1521, %v1812
        %v1814 = vpop.f32.mrf.mxu0
        %v1815 = vpop.f32.mrf.mxu0
        %v1816 = vadd.f32 %v1524, %v1815
        %v1817 = vpop.f32.mrf.mxu0
        %1818 = vmatprep.mubr.bf16.mxu0 0
        %1819 = vmatmul.mubr.bf16.gmra.mxu0 %v1666
        %v1820 = vpop.f32.mrf.mxu0
        %v1821 = vadd.f32 %v1529, %v1820
        %v1822 = vpop.f32.mrf.mxu0
        %v1823 = vpop.f32.mrf.mxu0
        %v1824 = vadd.f32 %v1532, %v1823
        %v1825 = vpop.f32.mrf.mxu0
        %1826 = vmatprep.mubr.bf16.mxu0 0
        %1827 = vmatmul.mubr.bf16.gmra.mxu0 %v1669
        %v1828 = vpop.f32.mrf.mxu0
        %v1829 = vadd.f32 %v1537, %v1828
        %v1830 = vpop.f32.mrf.mxu0
        %v1831 = vpop.f32.mrf.mxu0
        %v1832 = vadd.f32 %v1540, %v1831
        %v1833 = vpop.f32.mrf.mxu0
        %1834 = vdwg.mxu0
        %v1835 = vld [vmem:[#allocation2] sm:$0xe]
        %v1836 = vld [vmem:[#allocation2 + $0xc] sm:$0xe]
        %v1837 = vld [vmem:[#allocation2 + $0x18] sm:$0xe]
        %v1838 = vld [vmem:[#allocation2 + $0x24] sm:$0xe]
        %v1839 = vld [vmem:[#allocation2 + $0x30] sm:$0xe]
        %v1840 = vld [vmem:[#allocation2 + $0x3c] sm:$0xe]
        %v1841 = vld [vmem:[#allocation2 + $0x48] sm:$0xe]
        %v1842 = vld [vmem:[#allocation2 + $0x54] sm:$0xe]
        %v1843 = vld [vmem:[#allocation2 + $0x60] sm:$0xe]
        %v1844 = vld [vmem:[#allocation2 + $0x6c] sm:$0xe]
        %v1845 = vld [vmem:[#allocation2 + $0x78] sm:$0xe]
        %v1846 = vld [vmem:[#allocation2 + $0x84] sm:$0xe]
        %v1847 = vld [vmem:[#allocation2 + $0x90] sm:$0xe]
        %v1848 = vld [vmem:[#allocation2 + $0x9c] sm:$0xe]
        %v1849 = vld [vmem:[#allocation2 + $0xa8] sm:$0xe]
        %v1850 = vld [vmem:[#allocation2 + $0xb4] sm:$0xe]
        %vm1883 = vcmask 1042432
        %vm1884 = vcmask 1046532
        %vm1885 = vmor %vm1883, %vm1884
        %v1886 = vrot.slane %v1835, 5
        %v1887 = vrot.slane %v1886, 4
        %v1888 = vrot.slane %v841, 5
        %v1889 = vsel %vm1885, %v1887, %v1888
        %v1890 = vrot.slane %v1888, 4
        %v1891 = vrot.slane %v873, 5
        %v1892 = vsel %vm1885, %v1890, %v1891
        %v1893 = vrot.slane %v1836, 5
        %v1894 = vrot.slane %v1893, 4
        %v1895 = vrot.slane %v843, 5
        %v1896 = vsel %vm1885, %v1894, %v1895
        %v1897 = vrot.slane %v1895, 4
        %v1898 = vrot.slane %v874, 5
        %v1899 = vsel %vm1885, %v1897, %v1898
        %v1900 = vrot.slane %v1837, 5
        %v1901 = vrot.slane %v1900, 4
        %v1902 = vrot.slane %v845, 5
        %v1903 = vsel %vm1885, %v1901, %v1902
        %v1904 = vrot.slane %v1902, 4
        %v1905 = vrot.slane %v875, 5
        %v1906 = vsel %vm1885, %v1904, %v1905
        %v1907 = vrot.slane %v1838, 5
        %v1908 = vrot.slane %v1907, 4
        %v1909 = vrot.slane %v847, 5
        %v1910 = vsel %vm1885, %v1908, %v1909
        %v1911 = vrot.slane %v1909, 4
        %v1912 = vrot.slane %v876, 5
        %v1913 = vsel %vm1885, %v1911, %v1912
        %v1914 = vrot.slane %v1839, 5
        %v1915 = vrot.slane %v1914, 4
        %v1916 = vrot.slane %v849, 5
        %v1917 = vsel %vm1885, %v1915, %v1916
        %v1918 = vrot.slane %v1916, 4
        %v1919 = vrot.slane %v877, 5
        %v1920 = vsel %vm1885, %v1918, %v1919
        %v1921 = vrot.slane %v1840, 5
        %v1922 = vrot.slane %v1921, 4
        %v1923 = vrot.slane %v851, 5
        %v1924 = vsel %vm1885, %v1922, %v1923
        %v1925 = vrot.slane %v1923, 4
        %v1926 = vrot.slane %v878, 5
        %v1927 = vsel %vm1885, %v1925, %v1926
        %v1928 = vrot.slane %v1841, 5
        %v1929 = vrot.slane %v1928, 4
        %v1930 = vrot.slane %v853, 5
        %v1931 = vsel %vm1885, %v1929, %v1930
        %v1932 = vrot.slane %v1930, 4
        %v1933 = vrot.slane %v879, 5
        %v1934 = vsel %vm1885, %v1932, %v1933
        %v1935 = vrot.slane %v1842, 5
        %v1936 = vrot.slane %v1935, 4
        %v1937 = vrot.slane %v855, 5
        %v1938 = vsel %vm1885, %v1936, %v1937
        %v1939 = vrot.slane %v1937, 4
        %v1940 = vrot.slane %v880, 5
        %v1941 = vsel %vm1885, %v1939, %v1940
        %v1942 = vrot.slane %v1843, 5
        %v1943 = vrot.slane %v1942, 4
        %v1944 = vrot.slane %v857, 5
        %v1945 = vsel %vm1885, %v1943, %v1944
        %v1946 = vrot.slane %v1944, 4
        %v1947 = vrot.slane %v881, 5
        %v1948 = vsel %vm1885, %v1946, %v1947
        %v1949 = vrot.slane %v1844, 5
        %v1950 = vrot.slane %v1949, 4
        %v1951 = vrot.slane %v859, 5
        %v1952 = vsel %vm1885, %v1950, %v1951
        %v1953 = vrot.slane %v1951, 4
        %v1954 = vrot.slane %v882, 5
        %v1955 = vsel %vm1885, %v1953, %v1954
        %v1956 = vrot.slane %v1845, 5
        %v1957 = vrot.slane %v1956, 4
        %v1958 = vrot.slane %v861, 5
        %v1959 = vsel %vm1885, %v1957, %v1958
        %v1960 = vrot.slane %v1958, 4
        %v1961 = vrot.slane %v883, 5
        %v1962 = vsel %vm1885, %v1960, %v1961
        %v1963 = vrot.slane %v1846, 5
        %v1964 = vrot.slane %v1963, 4
        %v1965 = vrot.slane %v863, 5
        %v1966 = vsel %vm1885, %v1964, %v1965
        %v1967 = vrot.slane %v1965, 4
        %v1968 = vrot.slane %v884, 5
        %v1969 = vsel %vm1885, %v1967, %v1968
        %v1970 = vrot.slane %v1847, 5
        %v1971 = vrot.slane %v1970, 4
        %v1972 = vrot.slane %v865, 5
        %v1973 = vsel %vm1885, %v1971, %v1972
        %v1974 = vrot.slane %v1972, 4
        %v1975 = vrot.slane %v885, 5
        %v1976 = vsel %vm1885, %v1974, %v1975
        %v1977 = vrot.slane %v1848, 5
        %v1978 = vrot.slane %v1977, 4
        %v1979 = vrot.slane %v867, 5
        %v1980 = vsel %vm1885, %v1978, %v1979
        %v1981 = vrot.slane %v1979, 4
        %v1982 = vrot.slane %v886, 5
        %v1983 = vsel %vm1885, %v1981, %v1982
        %v1984 = vrot.slane %v1849, 5
        %v1985 = vrot.slane %v1984, 4
        %v1986 = vrot.slane %v869, 5
        %v1987 = vsel %vm1885, %v1985, %v1986
        %v1988 = vrot.slane %v1986, 4
        %v1989 = vrot.slane %v887, 5
        %v1990 = vsel %vm1885, %v1988, %v1989
        %v1991 = vrot.slane %v1850, 5
        %v1992 = vrot.slane %v1991, 4
        %v1993 = vrot.slane %v871, 5
        %v1994 = vsel %vm1885, %v1992, %v1993
        %v1995 = vrot.slane %v1993, 4
        %v1996 = vrot.slane %v888, 5
        %v1997 = vsel %vm1885, %v1995, %v1996
        %v1998 = vld [vmem:[%s1 + $0x4] sm:$0x3]
        %v1999 = vunpack.c.l.b16 %v1889
        %v2000 = vunpack.c.l.b16 %v1892
        %v2001 = vunpack.c.l.b16 %v1896
        %v2002 = vunpack.c.l.b16 %v1899
        %v2003 = vunpack.c.l.b16 %v1903
        %v2004 = vunpack.c.l.b16 %v1906
        %v2005 = vunpack.c.l.b16 %v1910
        %v2006 = vunpack.c.l.b16 %v1913
        %v2007 = vunpack.c.l.b16 %v1917
        %v2008 = vunpack.c.l.b16 %v1920
        %v2009 = vunpack.c.l.b16 %v1924
        %v2010 = vunpack.c.l.b16 %v1927
        %v2011 = vunpack.c.l.b16 %v1931
        %v2012 = vunpack.c.l.b16 %v1934
        %v2013 = vunpack.c.l.b16 %v1938
        %v2014 = vunpack.c.l.b16 %v1941
        %v2015 = vunpack.c.l.b16 %v1945
        %v2016 = vunpack.c.l.b16 %v1948
        %v2017 = vunpack.c.l.b16 %v1952
        %v2018 = vunpack.c.l.b16 %v1955
        %v2019 = vunpack.c.l.b16 %v1959
        %v2020 = vunpack.c.l.b16 %v1962
        %v2021 = vunpack.c.l.b16 %v1966
        %v2022 = vunpack.c.l.b16 %v1969
        %v2023 = vunpack.c.l.b16 %v1973
        %v2024 = vunpack.c.l.b16 %v1976
        %v2025 = vunpack.c.l.b16 %v1980
        %v2026 = vunpack.c.l.b16 %v1983
        %v2027 = vunpack.c.l.b16 %v1987
        %v2028 = vunpack.c.l.b16 %v1990
        %v2029 = vunpack.c.l.b16 %v1994
        %v2030 = vunpack.c.l.b16 %v1997
        %v2031 = vpack.c.b16 %v2000, %v1999
        %v2032 = vpack.c.b16 %v2002, %v2001
        %v2033 = vpack.c.b16 %v2004, %v2003
        %v2034 = vpack.c.b16 %v2006, %v2005
        %v2035 = vpack.c.b16 %v2008, %v2007
        %v2036 = vpack.c.b16 %v2010, %v2009
        %v2037 = vpack.c.b16 %v2012, %v2011
        %v2038 = vpack.c.b16 %v2014, %v2013
        %v2039 = vpack.c.b16 %v2016, %v2015
        %v2040 = vpack.c.b16 %v2018, %v2017
        %v2041 = vpack.c.b16 %v2020, %v2019
        %v2042 = vpack.c.b16 %v2022, %v2021
        %v2043 = vpack.c.b16 %v2024, %v2023
        %v2044 = vpack.c.b16 %v2026, %v2025
        %v2045 = vpack.c.b16 %v2028, %v2027
        %v2046 = vpack.c.b16 %v2030, %v2029
        %v2048 = vsel %vm1329, %v2031, 0
        %v2051 = vsel %vm1329, %v2032, 0
        %v2054 = vsel %vm1329, %v2033, 0
        %v2057 = vsel %vm1329, %v2034, 0
        %v2060 = vsel %vm1329, %v2035, 0
        %v2063 = vsel %vm1329, %v2036, 0
        %v2066 = vsel %vm1329, %v2037, 0
        %v2069 = vsel %vm1329, %v2038, 0
        %v2072 = vsel %vm1329, %v2039, 0
        %v2075 = vsel %vm1329, %v2040, 0
        %v2078 = vsel %vm1329, %v2041, 0
        %v2081 = vsel %vm1329, %v2042, 0
        %v2084 = vsel %vm1329, %v2043, 0
        %v2087 = vsel %vm1329, %v2044, 0
        %v2090 = vsel %vm1329, %v2045, 0
        %v2093 = vsel %vm1329, %v2046, 0
        %v2096 = vsel %vm1378, %v1998, 0
        %2098 = vmatprep.subr.bf16.mxu0 0
        %2099 = vmatpush1.bf16.msra.mxu0 0
        %2100 = vmatprep.subr.bf16.mxu0 0
        %2101 = vmatpush1.bf16.msra.mxu0 0
        %2102 = vmatprep.subr.bf16.mxu0 0
        %2103 = vmatpush1.bf16.msra.mxu0 0
        %2104 = vmatprep.subr.bf16.mxu0 0
        %2105 = vmatpush1.bf16.msra.mxu0 0
        %2106 = vmatprep.subr.bf16.mxu0 0
        %2107 = vmatpush1.bf16.msra.mxu0 0
        %2108 = vmatprep.subr.bf16.mxu0 0
        %2109 = vmatpush1.bf16.msra.mxu0 0
        %2110 = vmatprep.subr.bf16.mxu0 0
        %2111 = vmatpush1.bf16.msra.mxu0 0
        %2112 = vmatprep.subr.bf16.mxu0 0
        %2113 = vmatpush1.bf16.msra.mxu0 %v2096
        %2114 = vmatprep.subr.bf16.mxu0 0
        %2115 = vmatpush2.bf16.msra.mxu0 0
        %2116 = vmatprep.subr.bf16.mxu0 0
        %2117 = vmatpush2.bf16.msra.mxu0 0
        %2118 = vmatprep.subr.bf16.mxu0 0
        %2119 = vmatpush2.bf16.msra.mxu0 0
        %2120 = vmatprep.subr.bf16.mxu0 0
        %2121 = vmatpush2.bf16.msra.mxu0 0
        %2122 = vmatprep.subr.bf16.mxu0 0
        %2123 = vmatpush2.bf16.msra.mxu0 0
        %2124 = vmatprep.subr.bf16.mxu0 0
        %2125 = vmatpush2.bf16.msra.mxu0 0
        %2126 = vmatprep.subr.bf16.mxu0 0
        %2127 = vmatpush2.bf16.msra.mxu0 0
        %2128 = vmatprep.subr.bf16.mxu0 0
        %2129 = vmatpush2.bf16.msra.mxu0 0
        %2130 = vmatprep.mubr.bf16.mxu0 0
        %2131 = vmatmul.mubr.bf16.gmra.mxu0 %v2048
        %v2132 = vpop.f32.mrf.mxu0
        %v2133 = vadd.f32 0.0, %v2132
        %v2134 = vpop.f32.mrf.mxu0
        %v2135 = vpop.f32.mrf.mxu0
        %v2136 = vadd.f32 0.0, %v2135
        %v2137 = vpop.f32.mrf.mxu0
        %2138 = vmatprep.mubr.bf16.mxu0 0
        %2139 = vmatmul.mubr.bf16.gmra.mxu0 %v2051
        %v2140 = vpop.f32.mrf.mxu0
        %v2141 = vadd.f32 0.0, %v2140
        %v2142 = vpop.f32.mrf.mxu0
        %v2143 = vpop.f32.mrf.mxu0
        %v2144 = vadd.f32 0.0, %v2143
        %v2145 = vpop.f32.mrf.mxu0
        %2146 = vmatprep.mubr.bf16.mxu0 0
        %2147 = vmatmul.mubr.bf16.gmra.mxu0 %v2054
        %v2148 = vpop.f32.mrf.mxu0
        %v2149 = vadd.f32 0.0, %v2148
        %v2150 = vpop.f32.mrf.mxu0
        %v2151 = vpop.f32.mrf.mxu0
        %v2152 = vadd.f32 0.0, %v2151
        %v2153 = vpop.f32.mrf.mxu0
        %2154 = vmatprep.mubr.bf16.mxu0 0
        %2155 = vmatmul.mubr.bf16.gmra.mxu0 %v2057
        %v2156 = vpop.f32.mrf.mxu0
        %v2157 = vadd.f32 0.0, %v2156
        %v2158 = vpop.f32.mrf.mxu0
        %v2159 = vpop.f32.mrf.mxu0
        %v2160 = vadd.f32 0.0, %v2159
        %v2161 = vpop.f32.mrf.mxu0
        %2162 = vmatprep.mubr.bf16.mxu0 0
        %2163 = vmatmul.mubr.bf16.gmra.mxu0 %v2060
        %v2164 = vpop.f32.mrf.mxu0
        %v2165 = vadd.f32 0.0, %v2164
        %v2166 = vpop.f32.mrf.mxu0
        %v2167 = vpop.f32.mrf.mxu0
        %v2168 = vadd.f32 0.0, %v2167
        %v2169 = vpop.f32.mrf.mxu0
        %2170 = vmatprep.mubr.bf16.mxu0 0
        %2171 = vmatmul.mubr.bf16.gmra.mxu0 %v2063
        %v2172 = vpop.f32.mrf.mxu0
        %v2173 = vadd.f32 0.0, %v2172
        %v2174 = vpop.f32.mrf.mxu0
        %v2175 = vpop.f32.mrf.mxu0
        %v2176 = vadd.f32 0.0, %v2175
        %v2177 = vpop.f32.mrf.mxu0
        %2178 = vmatprep.mubr.bf16.mxu0 0
        %2179 = vmatmul.mubr.bf16.gmra.mxu0 %v2066
        %v2180 = vpop.f32.mrf.mxu0
        %v2181 = vadd.f32 0.0, %v2180
        %v2182 = vpop.f32.mrf.mxu0
        %v2183 = vpop.f32.mrf.mxu0
        %v2184 = vadd.f32 0.0, %v2183
        %v2185 = vpop.f32.mrf.mxu0
        %2186 = vmatprep.mubr.bf16.mxu0 0
        %2187 = vmatmul.mubr.bf16.gmra.mxu0 %v2069
        %v2188 = vpop.f32.mrf.mxu0
        %v2189 = vadd.f32 0.0, %v2188
        %v2190 = vpop.f32.mrf.mxu0
        %v2191 = vpop.f32.mrf.mxu0
        %v2192 = vadd.f32 0.0, %v2191
        %v2193 = vpop.f32.mrf.mxu0
        %2194 = vmatprep.mubr.bf16.mxu0 0
        %2195 = vmatmul.mubr.bf16.gmra.mxu0 %v2072
        %v2196 = vpop.f32.mrf.mxu0
        %v2197 = vadd.f32 0.0, %v2196
        %v2198 = vpop.f32.mrf.mxu0
        %v2199 = vpop.f32.mrf.mxu0
        %v2200 = vadd.f32 0.0, %v2199
        %v2201 = vpop.f32.mrf.mxu0
        %2202 = vmatprep.mubr.bf16.mxu0 0
        %2203 = vmatmul.mubr.bf16.gmra.mxu0 %v2075
        %v2204 = vpop.f32.mrf.mxu0
        %v2205 = vadd.f32 0.0, %v2204
        %v2206 = vpop.f32.mrf.mxu0
        %v2207 = vpop.f32.mrf.mxu0
        %v2208 = vadd.f32 0.0, %v2207
        %v2209 = vpop.f32.mrf.mxu0
        %2210 = vmatprep.mubr.bf16.mxu0 0
        %2211 = vmatmul.mubr.bf16.gmra.mxu0 %v2078
        %v2212 = vpop.f32.mrf.mxu0
        %v2213 = vadd.f32 0.0, %v2212
        %v2214 = vpop.f32.mrf.mxu0
        %v2215 = vpop.f32.mrf.mxu0
        %v2216 = vadd.f32 0.0, %v2215
        %v2217 = vpop.f32.mrf.mxu0
        %2218 = vmatprep.mubr.bf16.mxu0 0
        %2219 = vmatmul.mubr.bf16.gmra.mxu0 %v2081
        %v2220 = vpop.f32.mrf.mxu0
        %v2221 = vadd.f32 0.0, %v2220
        %v2222 = vpop.f32.mrf.mxu0
        %v2223 = vpop.f32.mrf.mxu0
        %v2224 = vadd.f32 0.0, %v2223
        %v2225 = vpop.f32.mrf.mxu0
        %2226 = vmatprep.mubr.bf16.mxu0 0
        %2227 = vmatmul.mubr.bf16.gmra.mxu0 %v2084
        %v2228 = vpop.f32.mrf.mxu0
        %v2229 = vadd.f32 0.0, %v2228
        %v2230 = vpop.f32.mrf.mxu0
        %v2231 = vpop.f32.mrf.mxu0
        %v2232 = vadd.f32 0.0, %v2231
        %v2233 = vpop.f32.mrf.mxu0
        %2234 = vmatprep.mubr.bf16.mxu0 0
        %2235 = vmatmul.mubr.bf16.gmra.mxu0 %v2087
        %v2236 = vpop.f32.mrf.mxu0
        %v2237 = vadd.f32 0.0, %v2236
        %v2238 = vpop.f32.mrf.mxu0
        %v2239 = vpop.f32.mrf.mxu0
        %v2240 = vadd.f32 0.0, %v2239
        %v2241 = vpop.f32.mrf.mxu0
        %2242 = vmatprep.mubr.bf16.mxu0 0
        %2243 = vmatmul.mubr.bf16.gmra.mxu0 %v2090
        %v2244 = vpop.f32.mrf.mxu0
        %v2245 = vadd.f32 0.0, %v2244
        %v2246 = vpop.f32.mrf.mxu0
        %v2247 = vpop.f32.mrf.mxu0
        %v2248 = vadd.f32 0.0, %v2247
        %v2249 = vpop.f32.mrf.mxu0
        %2250 = vmatprep.mubr.bf16.mxu0 0
        %2251 = vmatmul.mubr.bf16.gmra.mxu0 %v2093
        %v2252 = vpop.f32.mrf.mxu0
        %v2253 = vadd.f32 0.0, %v2252
        %v2254 = vpop.f32.mrf.mxu0
        %v2255 = vpop.f32.mrf.mxu0
        %v2256 = vadd.f32 0.0, %v2255
        %v2257 = vpop.f32.mrf.mxu0
        %2258 = vdwg.mxu0
        %v2259 = vadd.f32 %v1709, %v2133
        %v2260 = vadd.f32 %v1712, %v2136
        %v2261 = vadd.f32 %v1717, %v2141
        %v2262 = vadd.f32 %v1720, %v2144
        %v2263 = vadd.f32 %v1725, %v2149
        %v2264 = vadd.f32 %v1728, %v2152
        %v2265 = vadd.f32 %v1733, %v2157
        %v2266 = vadd.f32 %v1736, %v2160
        %v2267 = vadd.f32 %v1741, %v2165
        %v2268 = vadd.f32 %v1744, %v2168
        %v2269 = vadd.f32 %v1749, %v2173
        %v2270 = vadd.f32 %v1752, %v2176
        %v2271 = vadd.f32 %v1757, %v2181
        %v2272 = vadd.f32 %v1760, %v2184
        %v2273 = vadd.f32 %v1765, %v2189
        %v2274 = vadd.f32 %v1768, %v2192
        %v2275 = vadd.f32 %v1773, %v2197
        %v2276 = vadd.f32 %v1776, %v2200
        %v2277 = vadd.f32 %v1781, %v2205
        %v2278 = vadd.f32 %v1784, %v2208
        %v2279 = vadd.f32 %v1789, %v2213
        %v2280 = vadd.f32 %v1792, %v2216
        %v2281 = vadd.f32 %v1797, %v2221
        %v2282 = vadd.f32 %v1800, %v2224
        %v2283 = vadd.f32 %v1805, %v2229
        %v2284 = vadd.f32 %v1808, %v2232
        %v2285 = vadd.f32 %v1813, %v2237
        %v2286 = vadd.f32 %v1816, %v2240
        %v2287 = vadd.f32 %v1821, %v2245
        %v2288 = vadd.f32 %v1824, %v2248
        %v2289 = vadd.f32 %v1829, %v2253
        %v2290 = vadd.f32 %v1832, %v2256
        %v2291 = vld [vmem:[%s725] sm:$0xf]
        %v2292 = vld [vmem:[%s725 + $0x4] sm:$0xf]
        %v2293 = vld [vmem:[%s725 + $0xc] sm:$0xf]
        %v2294 = vld [vmem:[%s725 + $0x10] sm:$0xf]
        %v2295 = vld [vmem:[%s725 + $0x18] sm:$0xf]
        %v2296 = vld [vmem:[%s725 + $0x1c] sm:$0xf]
        %v2297 = vld [vmem:[%s725 + $0x24] sm:$0xf]
        %v2298 = vld [vmem:[%s725 + $0x28] sm:$0xf]
        %v2299 = vld [vmem:[%s725 + $0x30] sm:$0xf]
        %v2300 = vld [vmem:[%s725 + $0x34] sm:$0xf]
        %v2301 = vld [vmem:[%s725 + $0x3c] sm:$0xf]
        %v2302 = vld [vmem:[%s725 + $0x40] sm:$0xf]
        %v2303 = vld [vmem:[%s725 + $0x48] sm:$0xf]
        %v2304 = vld [vmem:[%s725 + $0x4c] sm:$0xf]
        %v2305 = vld [vmem:[%s725 + $0x54] sm:$0xf]
        %v2306 = vld [vmem:[%s725 + $0x58] sm:$0xf]
        %v2307 = vld [vmem:[%s725 + $0x60] sm:$0xf]
        %v2308 = vld [vmem:[%s725 + $0x64] sm:$0xf]
        %v2309 = vld [vmem:[%s725 + $0x6c] sm:$0xf]
        %v2310 = vld [vmem:[%s725 + $0x70] sm:$0xf]
        %v2311 = vld [vmem:[%s725 + $0x78] sm:$0xf]
        %v2312 = vld [vmem:[%s725 + $0x7c] sm:$0xf]
        %v2313 = vld [vmem:[%s725 + $0x84] sm:$0xf]
        %v2314 = vld [vmem:[%s725 + $0x88] sm:$0xf]
        %v2315 = vld [vmem:[%s725 + $0x90] sm:$0xf]
        %v2316 = vld [vmem:[%s725 + $0x94] sm:$0xf]
        %v2317 = vld [vmem:[%s725 + $0x9c] sm:$0xf]
        %v2318 = vld [vmem:[%s725 + $0xa0] sm:$0xf]
        %v2319 = vld [vmem:[%s725 + $0xa8] sm:$0xf]
        %v2320 = vld [vmem:[%s725 + $0xac] sm:$0xf]
        %v2321 = vld [vmem:[%s725 + $0xb4] sm:$0xf]
        %v2322 = vld [vmem:[%s725 + $0xb8] sm:$0xf]
        %v2323 = vld [vmem:[%s1 + $0x4] sm:$0xc]
        %v2356 = vunpack.c.l.b16 %v2291
        %v2357 = vunpack.c.l.b16 %v2292
        %v2358 = vunpack.c.l.b16 %v2293
        %v2359 = vunpack.c.l.b16 %v2294
        %v2360 = vunpack.c.l.b16 %v2295
        %v2361 = vunpack.c.l.b16 %v2296
        %v2362 = vunpack.c.l.b16 %v2297
        %v2363 = vunpack.c.l.b16 %v2298
        %v2364 = vunpack.c.l.b16 %v2299
        %v2365 = vunpack.c.l.b16 %v2300
        %v2366 = vunpack.c.l.b16 %v2301
        %v2367 = vunpack.c.l.b16 %v2302
        %v2368 = vunpack.c.l.b16 %v2303
        %v2369 = vunpack.c.l.b16 %v2304
        %v2370 = vunpack.c.l.b16 %v2305
        %v2371 = vunpack.c.l.b16 %v2306
        %v2372 = vunpack.c.l.b16 %v2307
        %v2373 = vunpack.c.l.b16 %v2308
        %v2374 = vunpack.c.l.b16 %v2309
        %v2375 = vunpack.c.l.b16 %v2310
        %v2376 = vunpack.c.l.b16 %v2311
        %v2377 = vunpack.c.l.b16 %v2312
        %v2378 = vunpack.c.l.b16 %v2313
        %v2379 = vunpack.c.l.b16 %v2314
        %v2380 = vunpack.c.l.b16 %v2315
        %v2381 = vunpack.c.l.b16 %v2316
        %v2382 = vunpack.c.l.b16 %v2317
        %v2383 = vunpack.c.l.b16 %v2318
        %v2384 = vunpack.c.l.b16 %v2319
        %v2385 = vunpack.c.l.b16 %v2320
        %v2386 = vunpack.c.l.b16 %v2321
        %v2387 = vunpack.c.l.b16 %v2322
        %v2388 = vpack.c.b16 %v2357, %v2356
        %v2389 = vpack.c.b16 %v2359, %v2358
        %v2390 = vpack.c.b16 %v2361, %v2360
        %v2391 = vpack.c.b16 %v2363, %v2362
        %v2392 = vpack.c.b16 %v2365, %v2364
        %v2393 = vpack.c.b16 %v2367, %v2366
        %v2394 = vpack.c.b16 %v2369, %v2368
        %v2395 = vpack.c.b16 %v2371, %v2370
        %v2396 = vpack.c.b16 %v2373, %v2372
        %v2397 = vpack.c.b16 %v2375, %v2374
        %v2398 = vpack.c.b16 %v2377, %v2376
        %v2399 = vpack.c.b16 %v2379, %v2378
        %v2400 = vpack.c.b16 %v2381, %v2380
        %v2401 = vpack.c.b16 %v2383, %v2382
        %v2402 = vpack.c.b16 %v2385, %v2384
        %v2403 = vpack.c.b16 %v2387, %v2386
        %v2405 = vunpack.c.l.b16 %v2323
        %v2406 = vpack.c.b16 %v2405, %v2405
        %v2407 = vrot.slane %v2406, 2
        %v2409 = vsel %vm1329, %v2388, 0
        %v2412 = vsel %vm1329, %v2389, 0
        %v2415 = vsel %vm1329, %v2390, 0
        %v2418 = vsel %vm1329, %v2391, 0
        %v2421 = vsel %vm1329, %v2392, 0
        %v2424 = vsel %vm1329, %v2393, 0
        %v2427 = vsel %vm1329, %v2394, 0
        %v2430 = vsel %vm1329, %v2395, 0
        %v2433 = vsel %vm1329, %v2396, 0
        %v2436 = vsel %vm1329, %v2397, 0
        %v2439 = vsel %vm1329, %v2398, 0
        %v2442 = vsel %vm1329, %v2399, 0
        %v2445 = vsel %vm1329, %v2400, 0
        %v2448 = vsel %vm1329, %v2401, 0
        %v2451 = vsel %vm1329, %v2402, 0
        %v2454 = vsel %vm1329, %v2403, 0
        %v2457 = vsel %vm1378, %v2407, 0
        %2459 = vmatprep.subr.bf16.mxu0 0
        %2460 = vmatpush1.bf16.msra.mxu0 0
        %2461 = vmatprep.subr.bf16.mxu0 0
        %2462 = vmatpush1.bf16.msra.mxu0 0
        %2463 = vmatprep.subr.bf16.mxu0 0
        %2464 = vmatpush1.bf16.msra.mxu0 0
        %2465 = vmatprep.subr.bf16.mxu0 0
        %2466 = vmatpush1.bf16.msra.mxu0 0
        %2467 = vmatprep.subr.bf16.mxu0 0
        %2468 = vmatpush1.bf16.msra.mxu0 0
        %2469 = vmatprep.subr.bf16.mxu0 0
        %2470 = vmatpush1.bf16.msra.mxu0 0
        %2471 = vmatprep.subr.bf16.mxu0 0
        %2472 = vmatpush1.bf16.msra.mxu0 0
        %2473 = vmatprep.subr.bf16.mxu0 0
        %2474 = vmatpush1.bf16.msra.mxu0 %v2457
        %2475 = vmatprep.subr.bf16.mxu0 0
        %2476 = vmatpush2.bf16.msra.mxu0 0
        %2477 = vmatprep.subr.bf16.mxu0 0
        %2478 = vmatpush2.bf16.msra.mxu0 0
        %2479 = vmatprep.subr.bf16.mxu0 0
        %2480 = vmatpush2.bf16.msra.mxu0 0
        %2481 = vmatprep.subr.bf16.mxu0 0
        %2482 = vmatpush2.bf16.msra.mxu0 0
        %2483 = vmatprep.subr.bf16.mxu0 0
        %2484 = vmatpush2.bf16.msra.mxu0 0
        %2485 = vmatprep.subr.bf16.mxu0 0
        %2486 = vmatpush2.bf16.msra.mxu0 0
        %2487 = vmatprep.subr.bf16.mxu0 0
        %2488 = vmatpush2.bf16.msra.mxu0 0
        %2489 = vmatprep.subr.bf16.mxu0 0
        %2490 = vmatpush2.bf16.msra.mxu0 0
        %2491 = vmatprep.mubr.bf16.mxu0 0
        %2492 = vmatmul.mubr.bf16.gmra.mxu0 %v2409
        %v2493 = vpop.f32.mrf.mxu0
        %v2494 = vadd.f32 0.0, %v2493
        %v2495 = vpop.f32.mrf.mxu0
        %v2496 = vpop.f32.mrf.mxu0
        %v2497 = vadd.f32 0.0, %v2496
        %v2498 = vpop.f32.mrf.mxu0
        %2499 = vmatprep.mubr.bf16.mxu0 0
        %2500 = vmatmul.mubr.bf16.gmra.mxu0 %v2412
        %v2501 = vpop.f32.mrf.mxu0
        %v2502 = vadd.f32 0.0, %v2501
        %v2503 = vpop.f32.mrf.mxu0
        %v2504 = vpop.f32.mrf.mxu0
        %v2505 = vadd.f32 0.0, %v2504
        %v2506 = vpop.f32.mrf.mxu0
        %2507 = vmatprep.mubr.bf16.mxu0 0
        %2508 = vmatmul.mubr.bf16.gmra.mxu0 %v2415
        %v2509 = vpop.f32.mrf.mxu0
        %v2510 = vadd.f32 0.0, %v2509
        %v2511 = vpop.f32.mrf.mxu0
        %v2512 = vpop.f32.mrf.mxu0
        %v2513 = vadd.f32 0.0, %v2512
        %v2514 = vpop.f32.mrf.mxu0
        %2515 = vmatprep.mubr.bf16.mxu0 0
        %2516 = vmatmul.mubr.bf16.gmra.mxu0 %v2418
        %v2517 = vpop.f32.mrf.mxu0
        %v2518 = vadd.f32 0.0, %v2517
        %v2519 = vpop.f32.mrf.mxu0
        %v2520 = vpop.f32.mrf.mxu0
        %v2521 = vadd.f32 0.0, %v2520
        %v2522 = vpop.f32.mrf.mxu0
        %2523 = vmatprep.mubr.bf16.mxu0 0
        %2524 = vmatmul.mubr.bf16.gmra.mxu0 %v2421
        %v2525 = vpop.f32.mrf.mxu0
        %v2526 = vadd.f32 0.0, %v2525
        %v2527 = vpop.f32.mrf.mxu0
        %v2528 = vpop.f32.mrf.mxu0
        %v2529 = vadd.f32 0.0, %v2528
        %v2530 = vpop.f32.mrf.mxu0
        %2531 = vmatprep.mubr.bf16.mxu0 0
        %2532 = vmatmul.mubr.bf16.gmra.mxu0 %v2424
        %v2533 = vpop.f32.mrf.mxu0
        %v2534 = vadd.f32 0.0, %v2533
        %v2535 = vpop.f32.mrf.mxu0
        %v2536 = vpop.f32.mrf.mxu0
        %v2537 = vadd.f32 0.0, %v2536
        %v2538 = vpop.f32.mrf.mxu0
        %2539 = vmatprep.mubr.bf16.mxu0 0
        %2540 = vmatmul.mubr.bf16.gmra.mxu0 %v2427
        %v2541 = vpop.f32.mrf.mxu0
        %v2542 = vadd.f32 0.0, %v2541
        %v2543 = vpop.f32.mrf.mxu0
        %v2544 = vpop.f32.mrf.mxu0
        %v2545 = vadd.f32 0.0, %v2544
        %v2546 = vpop.f32.mrf.mxu0
        %2547 = vmatprep.mubr.bf16.mxu0 0
        %2548 = vmatmul.mubr.bf16.gmra.mxu0 %v2430
        %v2549 = vpop.f32.mrf.mxu0
        %v2550 = vadd.f32 0.0, %v2549
        %v2551 = vpop.f32.mrf.mxu0
        %v2552 = vpop.f32.mrf.mxu0
        %v2553 = vadd.f32 0.0, %v2552
        %v2554 = vpop.f32.mrf.mxu0
        %2555 = vmatprep.mubr.bf16.mxu0 0
        %2556 = vmatmul.mubr.bf16.gmra.mxu0 %v2433
        %v2557 = vpop.f32.mrf.mxu0
        %v2558 = vadd.f32 0.0, %v2557
        %v2559 = vpop.f32.mrf.mxu0
        %v2560 = vpop.f32.mrf.mxu0
        %v2561 = vadd.f32 0.0, %v2560
        %v2562 = vpop.f32.mrf.mxu0
        %2563 = vmatprep.mubr.bf16.mxu0 0
        %2564 = vmatmul.mubr.bf16.gmra.mxu0 %v2436
        %v2565 = vpop.f32.mrf.mxu0
        %v2566 = vadd.f32 0.0, %v2565
        %v2567 = vpop.f32.mrf.mxu0
        %v2568 = vpop.f32.mrf.mxu0
        %v2569 = vadd.f32 0.0, %v2568
        %v2570 = vpop.f32.mrf.mxu0
        %2571 = vmatprep.mubr.bf16.mxu0 0
        %2572 = vmatmul.mubr.bf16.gmra.mxu0 %v2439
        %v2573 = vpop.f32.mrf.mxu0
        %v2574 = vadd.f32 0.0, %v2573
        %v2575 = vpop.f32.mrf.mxu0
        %v2576 = vpop.f32.mrf.mxu0
        %v2577 = vadd.f32 0.0, %v2576
        %v2578 = vpop.f32.mrf.mxu0
        %2579 = vmatprep.mubr.bf16.mxu0 0
        %2580 = vmatmul.mubr.bf16.gmra.mxu0 %v2442
        %v2581 = vpop.f32.mrf.mxu0
        %v2582 = vadd.f32 0.0, %v2581
        %v2583 = vpop.f32.mrf.mxu0
        %v2584 = vpop.f32.mrf.mxu0
        %v2585 = vadd.f32 0.0, %v2584
        %v2586 = vpop.f32.mrf.mxu0
        %2587 = vmatprep.mubr.bf16.mxu0 0
        %2588 = vmatmul.mubr.bf16.gmra.mxu0 %v2445
        %v2589 = vpop.f32.mrf.mxu0
        %v2590 = vadd.f32 0.0, %v2589
        %v2591 = vpop.f32.mrf.mxu0
        %v2592 = vpop.f32.mrf.mxu0
        %v2593 = vadd.f32 0.0, %v2592
        %v2594 = vpop.f32.mrf.mxu0
        %2595 = vmatprep.mubr.bf16.mxu0 0
        %2596 = vmatmul.mubr.bf16.gmra.mxu0 %v2448
        %v2597 = vpop.f32.mrf.mxu0
        %v2598 = vadd.f32 0.0, %v2597
        %v2599 = vpop.f32.mrf.mxu0
        %v2600 = vpop.f32.mrf.mxu0
        %v2601 = vadd.f32 0.0, %v2600
        %v2602 = vpop.f32.mrf.mxu0
        %2603 = vmatprep.mubr.bf16.mxu0 0
        %2604 = vmatmul.mubr.bf16.gmra.mxu0 %v2451
        %v2605 = vpop.f32.mrf.mxu0
        %v2606 = vadd.f32 0.0, %v2605
        %v2607 = vpop.f32.mrf.mxu0
        %v2608 = vpop.f32.mrf.mxu0
        %v2609 = vadd.f32 0.0, %v2608
        %v2610 = vpop.f32.mrf.mxu0
        %2611 = vmatprep.mubr.bf16.mxu0 0
        %2612 = vmatmul.mubr.bf16.gmra.mxu0 %v2454
        %v2613 = vpop.f32.mrf.mxu0
        %v2614 = vadd.f32 0.0, %v2613
        %v2615 = vpop.f32.mrf.mxu0
        %v2616 = vpop.f32.mrf.mxu0
        %v2617 = vadd.f32 0.0, %v2616
        %v2618 = vpop.f32.mrf.mxu0
        %2619 = vdwg.mxu0
        %v2620 = vadd.f32 %v2259, %v2494
        %v2621 = vadd.f32 %v2260, %v2497
        %v2622 = vadd.f32 %v2261, %v2502
        %v2623 = vadd.f32 %v2262, %v2505
        %v2624 = vadd.f32 %v2263, %v2510
        %v2625 = vadd.f32 %v2264, %v2513
        %v2626 = vadd.f32 %v2265, %v2518
        %v2627 = vadd.f32 %v2266, %v2521
        %v2628 = vadd.f32 %v2267, %v2526
        %v2629 = vadd.f32 %v2268, %v2529
        %v2630 = vadd.f32 %v2269, %v2534
        %v2631 = vadd.f32 %v2270, %v2537
        %v2632 = vadd.f32 %v2271, %v2542
        %v2633 = vadd.f32 %v2272, %v2545
        %v2634 = vadd.f32 %v2273, %v2550
        %v2635 = vadd.f32 %v2274, %v2553
        %v2636 = vadd.f32 %v2275, %v2558
        %v2637 = vadd.f32 %v2276, %v2561
        %v2638 = vadd.f32 %v2277, %v2566
        %v2639 = vadd.f32 %v2278, %v2569
        %v2640 = vadd.f32 %v2279, %v2574
        %v2641 = vadd.f32 %v2280, %v2577
        %v2642 = vadd.f32 %v2281, %v2582
        %v2643 = vadd.f32 %v2282, %v2585
        %v2644 = vadd.f32 %v2283, %v2590
        %v2645 = vadd.f32 %v2284, %v2593
        %v2646 = vadd.f32 %v2285, %v2598
        %v2647 = vadd.f32 %v2286, %v2601
        %v2648 = vadd.f32 %v2287, %v2606
        %v2649 = vadd.f32 %v2288, %v2609
        %v2650 = vadd.f32 %v2289, %v2614
        %v2651 = vadd.f32 %v2290, %v2617
        %v2652 = vld [vmem:[%s725] sm:$0xf]
        %v2653 = vld [vmem:[%s725 + $0x4] sm:$0xf]
        %v2654 = vld [vmem:[%s725 + $0x8] sm:$0x1]
        %v2655 = vld [vmem:[%s725 + $0xc] sm:$0xf]
        %v2656 = vld [vmem:[%s725 + $0x10] sm:$0xf]
        %v2657 = vld [vmem:[%s725 + $0x14] sm:$0x1]
        %v2658 = vld [vmem:[%s725 + $0x18] sm:$0xf]
        %v2659 = vld [vmem:[%s725 + $0x1c] sm:$0xf]
        %v2660 = vld [vmem:[%s725 + $0x20] sm:$0x1]
        %v2661 = vld [vmem:[%s725 + $0x24] sm:$0xf]
        %v2662 = vld [vmem:[%s725 + $0x28] sm:$0xf]
        %v2663 = vld [vmem:[%s725 + $0x2c] sm:$0x1]
        %v2664 = vld [vmem:[%s725 + $0x30] sm:$0xf]
        %v2665 = vld [vmem:[%s725 + $0x34] sm:$0xf]
        %v2666 = vld [vmem:[%s725 + $0x38] sm:$0x1]
        %v2667 = vld [vmem:[%s725 + $0x3c] sm:$0xf]
        %v2668 = vld [vmem:[%s725 + $0x40] sm:$0xf]
        %v2669 = vld [vmem:[%s725 + $0x44] sm:$0x1]
        %v2670 = vld [vmem:[%s725 + $0x48] sm:$0xf]
        %v2671 = vld [vmem:[%s725 + $0x4c] sm:$0xf]
        %v2672 = vld [vmem:[%s725 + $0x50] sm:$0x1]
        %v2673 = vld [vmem:[%s725 + $0x54] sm:$0xf]
        %v2674 = vld [vmem:[%s725 + $0x58] sm:$0xf]
        %v2675 = vld [vmem:[%s725 + $0x5c] sm:$0x1]
        %v2676 = vld [vmem:[%s725 + $0x60] sm:$0xf]
        %v2677 = vld [vmem:[%s725 + $0x64] sm:$0xf]
        %v2678 = vld [vmem:[%s725 + $0x68] sm:$0x1]
        %v2679 = vld [vmem:[%s725 + $0x6c] sm:$0xf]
        %v2680 = vld [vmem:[%s725 + $0x70] sm:$0xf]
        %v2681 = vld [vmem:[%s725 + $0x74] sm:$0x1]
        %v2682 = vld [vmem:[%s725 + $0x78] sm:$0xf]
        %v2683 = vld [vmem:[%s725 + $0x7c] sm:$0xf]
        %v2684 = vld [vmem:[%s725 + $0x80] sm:$0x1]
        %v2685 = vld [vmem:[%s725 + $0x84] sm:$0xf]
        %v2686 = vld [vmem:[%s725 + $0x88] sm:$0xf]
        %v2687 = vld [vmem:[%s725 + $0x8c] sm:$0x1]
        %v2688 = vld [vmem:[%s725 + $0x90] sm:$0xf]
        %v2689 = vld [vmem:[%s725 + $0x94] sm:$0xf]
        %v2690 = vld [vmem:[%s725 + $0x98] sm:$0x1]
        %v2691 = vld [vmem:[%s725 + $0x9c] sm:$0xf]
        %v2692 = vld [vmem:[%s725 + $0xa0] sm:$0xf]
        %v2693 = vld [vmem:[%s725 + $0xa4] sm:$0x1]
        %v2694 = vld [vmem:[%s725 + $0xa8] sm:$0xf]
        %v2695 = vld [vmem:[%s725 + $0xac] sm:$0xf]
        %v2696 = vld [vmem:[%s725 + $0xb0] sm:$0x1]
        %v2697 = vld [vmem:[%s725 + $0xb4] sm:$0xf]
        %v2698 = vld [vmem:[%s725 + $0xb8] sm:$0xf]
        %v2699 = vld [vmem:[%s725 + $0xbc] sm:$0x1]
        %v2701 = vshrl.u32 %v2652, 16
        %v2703 = vrot.slane %v2701, 4
        %v2704 = vshll.u32 %v2652, 16
        %v2706 = vrot.slane %v2704, 5
        %v2707 = vor.u32 %v2703, %v2706
        %v2708 = vrot.slane %v2707, 4
        %v2710 = vshll.u32 %v2653, 16
        %v2712 = vrot.slane %v2710, 5
        %v2713 = vsel %vm891, %v2708, %v2712
        %v2714 = vshrl.u32 %v2653, 16
        %v2716 = vrot.slane %v2714, 4
        %v2717 = vor.u32 %v2716, %v2712
        %v2718 = vrot.slane %v2717, 4
        %v2720 = vshll.u32 %v2654, 16
        %v2722 = vrot.slane %v2720, 5
        %v2723 = vsel %vm891, %v2718, %v2722
        %v2725 = vshrl.u32 %v2655, 16
        %v2727 = vrot.slane %v2725, 4
        %v2728 = vshll.u32 %v2655, 16
        %v2730 = vrot.slane %v2728, 5
        %v2731 = vor.u32 %v2727, %v2730
        %v2732 = vrot.slane %v2731, 4
        %v2734 = vshll.u32 %v2656, 16
        %v2736 = vrot.slane %v2734, 5
        %v2737 = vsel %vm891, %v2732, %v2736
        %v2738 = vshrl.u32 %v2656, 16
        %v2740 = vrot.slane %v2738, 4
        %v2741 = vor.u32 %v2740, %v2736
        %v2742 = vrot.slane %v2741, 4
        %v2744 = vshll.u32 %v2657, 16
        %v2746 = vrot.slane %v2744, 5
        %v2747 = vsel %vm891, %v2742, %v2746
        %v2749 = vshrl.u32 %v2658, 16
        %v2751 = vrot.slane %v2749, 4
        %v2752 = vshll.u32 %v2658, 16
        %v2754 = vrot.slane %v2752, 5
        %v2755 = vor.u32 %v2751, %v2754
        %v2756 = vrot.slane %v2755, 4
        %v2758 = vshll.u32 %v2659, 16
        %v2760 = vrot.slane %v2758, 5
        %v2761 = vsel %vm891, %v2756, %v2760
        %v2762 = vshrl.u32 %v2659, 16
        %v2764 = vrot.slane %v2762, 4
        %v2765 = vor.u32 %v2764, %v2760
        %v2766 = vrot.slane %v2765, 4
        %v2768 = vshll.u32 %v2660, 16
        %v2770 = vrot.slane %v2768, 5
        %v2771 = vsel %vm891, %v2766, %v2770
        %v2773 = vshrl.u32 %v2661, 16
        %v2775 = vrot.slane %v2773, 4
        %v2776 = vshll.u32 %v2661, 16
        %v2778 = vrot.slane %v2776, 5
        %v2779 = vor.u32 %v2775, %v2778
        %v2780 = vrot.slane %v2779, 4
        %v2782 = vshll.u32 %v2662, 16
        %v2784 = vrot.slane %v2782, 5
        %v2785 = vsel %vm891, %v2780, %v2784
        %v2786 = vshrl.u32 %v2662, 16
        %v2788 = vrot.slane %v2786, 4
        %v2789 = vor.u32 %v2788, %v2784
        %v2790 = vrot.slane %v2789, 4
        %v2792 = vshll.u32 %v2663, 16
        %v2794 = vrot.slane %v2792, 5
        %v2795 = vsel %vm891, %v2790, %v2794
        %v2797 = vshrl.u32 %v2664, 16
        %v2799 = vrot.slane %v2797, 4
        %v2800 = vshll.u32 %v2664, 16
        %v2802 = vrot.slane %v2800, 5
        %v2803 = vor.u32 %v2799, %v2802
        %v2804 = vrot.slane %v2803, 4
        %v2806 = vshll.u32 %v2665, 16
        %v2808 = vrot.slane %v2806, 5
        %v2809 = vsel %vm891, %v2804, %v2808
        %v2810 = vshrl.u32 %v2665, 16
        %v2812 = vrot.slane %v2810, 4
        %v2813 = vor.u32 %v2812, %v2808
        %v2814 = vrot.slane %v2813, 4
        %v2816 = vshll.u32 %v2666, 16
        %v2818 = vrot.slane %v2816, 5
        %v2819 = vsel %vm891, %v2814, %v2818
        %v2821 = vshrl.u32 %v2667, 16
        %v2823 = vrot.slane %v2821, 4
        %v2824 = vshll.u32 %v2667, 16
        %v2826 = vrot.slane %v2824, 5
        %v2827 = vor.u32 %v2823, %v2826
        %v2828 = vrot.slane %v2827, 4
        %v2830 = vshll.u32 %v2668, 16
        %v2832 = vrot.slane %v2830, 5
        %v2833 = vsel %vm891, %v2828, %v2832
        %v2834 = vshrl.u32 %v2668, 16
        %v2836 = vrot.slane %v2834, 4
        %v2837 = vor.u32 %v2836, %v2832
        %v2838 = vrot.slane %v2837, 4
        %v2840 = vshll.u32 %v2669, 16
        %v2842 = vrot.slane %v2840, 5
        %v2843 = vsel %vm891, %v2838, %v2842
        %v2845 = vshrl.u32 %v2670, 16
        %v2847 = vrot.slane %v2845, 4
        %v2848 = vshll.u32 %v2670, 16
        %v2850 = vrot.slane %v2848, 5
        %v2851 = vor.u32 %v2847, %v2850
        %v2852 = vrot.slane %v2851, 4
        %v2854 = vshll.u32 %v2671, 16
        %v2856 = vrot.slane %v2854, 5
        %v2857 = vsel %vm891, %v2852, %v2856
        %v2858 = vshrl.u32 %v2671, 16
        %v2860 = vrot.slane %v2858, 4
        %v2861 = vor.u32 %v2860, %v2856
        %v2862 = vrot.slane %v2861, 4
        %v2864 = vshll.u32 %v2672, 16
        %v2866 = vrot.slane %v2864, 5
        %v2867 = vsel %vm891, %v2862, %v2866
        %v2869 = vshrl.u32 %v2673, 16
        %v2871 = vrot.slane %v2869, 4
        %v2872 = vshll.u32 %v2673, 16
        %v2874 = vrot.slane %v2872, 5
        %v2875 = vor.u32 %v2871, %v2874
        %v2876 = vrot.slane %v2875, 4
        %v2878 = vshll.u32 %v2674, 16
        %v2880 = vrot.slane %v2878, 5
        %v2881 = vsel %vm891, %v2876, %v2880
        %v2882 = vshrl.u32 %v2674, 16
        %v2884 = vrot.slane %v2882, 4
        %v2885 = vor.u32 %v2884, %v2880
        %v2886 = vrot.slane %v2885, 4
        %v2888 = vshll.u32 %v2675, 16
        %v2890 = vrot.slane %v2888, 5
        %v2891 = vsel %vm891, %v2886, %v2890
        %v2893 = vshrl.u32 %v2676, 16
        %v2895 = vrot.slane %v2893, 4
        %v2896 = vshll.u32 %v2676, 16
        %v2898 = vrot.slane %v2896, 5
        %v2899 = vor.u32 %v2895, %v2898
        %v2900 = vrot.slane %v2899, 4
        %v2902 = vshll.u32 %v2677, 16
        %v2904 = vrot.slane %v2902, 5
        %v2905 = vsel %vm891, %v2900, %v2904
        %v2906 = vshrl.u32 %v2677, 16
        %v2908 = vrot.slane %v2906, 4
        %v2909 = vor.u32 %v2908, %v2904
        %v2910 = vrot.slane %v2909, 4
        %v2912 = vshll.u32 %v2678, 16
        %v2914 = vrot.slane %v2912, 5
        %v2915 = vsel %vm891, %v2910, %v2914
        %v2917 = vshrl.u32 %v2679, 16
        %v2919 = vrot.slane %v2917, 4
        %v2920 = vshll.u32 %v2679, 16
        %v2922 = vrot.slane %v2920, 5
        %v2923 = vor.u32 %v2919, %v2922
        %v2924 = vrot.slane %v2923, 4
        %v2926 = vshll.u32 %v2680, 16
        %v2928 = vrot.slane %v2926, 5
        %v2929 = vsel %vm891, %v2924, %v2928
        %v2930 = vshrl.u32 %v2680, 16
        %v2932 = vrot.slane %v2930, 4
        %v2933 = vor.u32 %v2932, %v2928
        %v2934 = vrot.slane %v2933, 4
        %v2936 = vshll.u32 %v2681, 16
        %v2938 = vrot.slane %v2936, 5
        %v2939 = vsel %vm891, %v2934, %v2938
        %v2941 = vshrl.u32 %v2682, 16
        %v2943 = vrot.slane %v2941, 4
        %v2944 = vshll.u32 %v2682, 16
        %v2946 = vrot.slane %v2944, 5
        %v2947 = vor.u32 %v2943, %v2946
        %v2948 = vrot.slane %v2947, 4
        %v2950 = vshll.u32 %v2683, 16
        %v2952 = vrot.slane %v2950, 5
        %v2953 = vsel %vm891, %v2948, %v2952
        %v2954 = vshrl.u32 %v2683, 16
        %v2956 = vrot.slane %v2954, 4
        %v2957 = vor.u32 %v2956, %v2952
        %v2958 = vrot.slane %v2957, 4
        %v2960 = vshll.u32 %v2684, 16
        %v2962 = vrot.slane %v2960, 5
        %v2963 = vsel %vm891, %v2958, %v2962
        %v2965 = vshrl.u32 %v2685, 16
        %v2967 = vrot.slane %v2965, 4
        %v2968 = vshll.u32 %v2685, 16
        %v2970 = vrot.slane %v2968, 5
        %v2971 = vor.u32 %v2967, %v2970
        %v2972 = vrot.slane %v2971, 4
        %v2974 = vshll.u32 %v2686, 16
        %v2976 = vrot.slane %v2974, 5
        %v2977 = vsel %vm891, %v2972, %v2976
        %v2978 = vshrl.u32 %v2686, 16
        %v2980 = vrot.slane %v2978, 4
        %v2981 = vor.u32 %v2980, %v2976
        %v2982 = vrot.slane %v2981, 4
        %v2984 = vshll.u32 %v2687, 16
        %v2986 = vrot.slane %v2984, 5
        %v2987 = vsel %vm891, %v2982, %v2986
        %v2989 = vshrl.u32 %v2688, 16
        %v2991 = vrot.slane %v2989, 4
        %v2992 = vshll.u32 %v2688, 16
        %v2994 = vrot.slane %v2992, 5
        %v2995 = vor.u32 %v2991, %v2994
        %v2996 = vrot.slane %v2995, 4
        %v2998 = vshll.u32 %v2689, 16
        %v3000 = vrot.slane %v2998, 5
        %v3001 = vsel %vm891, %v2996, %v3000
        %v3002 = vshrl.u32 %v2689, 16
        %v3004 = vrot.slane %v3002, 4
        %v3005 = vor.u32 %v3004, %v3000
        %v3006 = vrot.slane %v3005, 4
        %v3008 = vshll.u32 %v2690, 16
        %v3010 = vrot.slane %v3008, 5
        %v3011 = vsel %vm891, %v3006, %v3010
        %v3013 = vshrl.u32 %v2691, 16
        %v3015 = vrot.slane %v3013, 4
        %v3016 = vshll.u32 %v2691, 16
        %v3018 = vrot.slane %v3016, 5
        %v3019 = vor.u32 %v3015, %v3018
        %v3020 = vrot.slane %v3019, 4
        %v3022 = vshll.u32 %v2692, 16
        %v3024 = vrot.slane %v3022, 5
        %v3025 = vsel %vm891, %v3020, %v3024
        %v3026 = vshrl.u32 %v2692, 16
        %v3028 = vrot.slane %v3026, 4
        %v3029 = vor.u32 %v3028, %v3024
        %v3030 = vrot.slane %v3029, 4
        %v3032 = vshll.u32 %v2693, 16
        %v3034 = vrot.slane %v3032, 5
        %v3035 = vsel %vm891, %v3030, %v3034
        %v3037 = vshrl.u32 %v2694, 16
        %v3039 = vrot.slane %v3037, 4
        %v3040 = vshll.u32 %v2694, 16
        %v3042 = vrot.slane %v3040, 5
        %v3043 = vor.u32 %v3039, %v3042
        %v3044 = vrot.slane %v3043, 4
        %v3046 = vshll.u32 %v2695, 16
        %v3048 = vrot.slane %v3046, 5
        %v3049 = vsel %vm891, %v3044, %v3048
        %v3050 = vshrl.u32 %v2695, 16
        %v3052 = vrot.slane %v3050, 4
        %v3053 = vor.u32 %v3052, %v3048
        %v3054 = vrot.slane %v3053, 4
        %v3056 = vshll.u32 %v2696, 16
        %v3058 = vrot.slane %v3056, 5
        %v3059 = vsel %vm891, %v3054, %v3058
        %v3061 = vshrl.u32 %v2697, 16
        %v3063 = vrot.slane %v3061, 4
        %v3064 = vshll.u32 %v2697, 16
        %v3066 = vrot.slane %v3064, 5
        %v3067 = vor.u32 %v3063, %v3066
        %v3068 = vrot.slane %v3067, 4
        %v3070 = vshll.u32 %v2698, 16
        %v3072 = vrot.slane %v3070, 5
        %v3073 = vsel %vm891, %v3068, %v3072
        %v3074 = vshrl.u32 %v2698, 16
        %v3076 = vrot.slane %v3074, 4
        %v3077 = vor.u32 %v3076, %v3072
        %v3078 = vrot.slane %v3077, 4
        %v3080 = vshll.u32 %v2699, 16
        %v3082 = vrot.slane %v3080, 5
        %v3083 = vsel %vm891, %v3078, %v3082
        %v3084 = vld [vmem:[%s1 + $0x8] sm:$0x3]
        %v3085 = vunpack.c.l.b16 %v2713
        %v3086 = vunpack.c.l.b16 %v2723
        %v3087 = vunpack.c.l.b16 %v2737
        %v3088 = vunpack.c.l.b16 %v2747
        %v3089 = vunpack.c.l.b16 %v2761
        %v3090 = vunpack.c.l.b16 %v2771
        %v3091 = vunpack.c.l.b16 %v2785
        %v3092 = vunpack.c.l.b16 %v2795
        %v3093 = vunpack.c.l.b16 %v2809
        %v3094 = vunpack.c.l.b16 %v2819
        %v3095 = vunpack.c.l.b16 %v2833
        %v3096 = vunpack.c.l.b16 %v2843
        %v3097 = vunpack.c.l.b16 %v2857
        %v3098 = vunpack.c.l.b16 %v2867
        %v3099 = vunpack.c.l.b16 %v2881
        %v3100 = vunpack.c.l.b16 %v2891
        %v3101 = vunpack.c.l.b16 %v2905
        %v3102 = vunpack.c.l.b16 %v2915
        %v3103 = vunpack.c.l.b16 %v2929
        %v3104 = vunpack.c.l.b16 %v2939
        %v3105 = vunpack.c.l.b16 %v2953
        %v3106 = vunpack.c.l.b16 %v2963
        %v3107 = vunpack.c.l.b16 %v2977
        %v3108 = vunpack.c.l.b16 %v2987
        %v3109 = vunpack.c.l.b16 %v3001
        %v3110 = vunpack.c.l.b16 %v3011
        %v3111 = vunpack.c.l.b16 %v3025
        %v3112 = vunpack.c.l.b16 %v3035
        %v3113 = vunpack.c.l.b16 %v3049
        %v3114 = vunpack.c.l.b16 %v3059
        %v3115 = vunpack.c.l.b16 %v3073
        %v3116 = vunpack.c.l.b16 %v3083
        %v3117 = vpack.c.b16 %v3086, %v3085
        %v3118 = vpack.c.b16 %v3088, %v3087
        %v3119 = vpack.c.b16 %v3090, %v3089
        %v3120 = vpack.c.b16 %v3092, %v3091
        %v3121 = vpack.c.b16 %v3094, %v3093
        %v3122 = vpack.c.b16 %v3096, %v3095
        %v3123 = vpack.c.b16 %v3098, %v3097
        %v3124 = vpack.c.b16 %v3100, %v3099
        %v3125 = vpack.c.b16 %v3102, %v3101
        %v3126 = vpack.c.b16 %v3104, %v3103
        %v3127 = vpack.c.b16 %v3106, %v3105
        %v3128 = vpack.c.b16 %v3108, %v3107
        %v3129 = vpack.c.b16 %v3110, %v3109
        %v3130 = vpack.c.b16 %v3112, %v3111
        %v3131 = vpack.c.b16 %v3114, %v3113
        %v3132 = vpack.c.b16 %v3116, %v3115
        %v3134 = vsel %vm1329, %v3117, 0
        %v3137 = vsel %vm1329, %v3118, 0
        %v3140 = vsel %vm1329, %v3119, 0
        %v3143 = vsel %vm1329, %v3120, 0
        %v3146 = vsel %vm1329, %v3121, 0
        %v3149 = vsel %vm1329, %v3122, 0
        %v3152 = vsel %vm1329, %v3123, 0
        %v3155 = vsel %vm1329, %v3124, 0
        %v3158 = vsel %vm1329, %v3125, 0
        %v3161 = vsel %vm1329, %v3126, 0
        %v3164 = vsel %vm1329, %v3127, 0
        %v3167 = vsel %vm1329, %v3128, 0
        %v3170 = vsel %vm1329, %v3129, 0
        %v3173 = vsel %vm1329, %v3130, 0
        %v3176 = vsel %vm1329, %v3131, 0
        %v3179 = vsel %vm1329, %v3132, 0
        %v3182 = vsel %vm1378, %v3084, 0
        %3184 = vmatprep.subr.bf16.mxu0 0
        %3185 = vmatpush1.bf16.msra.mxu0 0
        %3186 = vmatprep.subr.bf16.mxu0 0
        %3187 = vmatpush1.bf16.msra.mxu0 0
        %3188 = vmatprep.subr.bf16.mxu0 0
        %3189 = vmatpush1.bf16.msra.mxu0 0
        %3190 = vmatprep.subr.bf16.mxu0 0
        %3191 = vmatpush1.bf16.msra.mxu0 0
        %3192 = vmatprep.subr.bf16.mxu0 0
        %3193 = vmatpush1.bf16.msra.mxu0 0
        %3194 = vmatprep.subr.bf16.mxu0 0
        %3195 = vmatpush1.bf16.msra.mxu0 0
        %3196 = vmatprep.subr.bf16.mxu0 0
        %3197 = vmatpush1.bf16.msra.mxu0 0
        %3198 = vmatprep.subr.bf16.mxu0 0
        %3199 = vmatpush1.bf16.msra.mxu0 %v3182
        %3200 = vmatprep.subr.bf16.mxu0 0
        %3201 = vmatpush2.bf16.msra.mxu0 0
        %3202 = vmatprep.subr.bf16.mxu0 0
        %3203 = vmatpush2.bf16.msra.mxu0 0
        %3204 = vmatprep.subr.bf16.mxu0 0
        %3205 = vmatpush2.bf16.msra.mxu0 0
        %3206 = vmatprep.subr.bf16.mxu0 0
        %3207 = vmatpush2.bf16.msra.mxu0 0
        %3208 = vmatprep.subr.bf16.mxu0 0
        %3209 = vmatpush2.bf16.msra.mxu0 0
        %3210 = vmatprep.subr.bf16.mxu0 0
        %3211 = vmatpush2.bf16.msra.mxu0 0
        %3212 = vmatprep.subr.bf16.mxu0 0
        %3213 = vmatpush2.bf16.msra.mxu0 0
        %3214 = vmatprep.subr.bf16.mxu0 0
        %3215 = vmatpush2.bf16.msra.mxu0 0
        %3216 = vmatprep.mubr.bf16.mxu0 0
        %3217 = vmatmul.mubr.bf16.gmra.mxu0 %v3134
        %v3218 = vpop.f32.mrf.mxu0
        %v3219 = vadd.f32 0.0, %v3218
        %v3220 = vpop.f32.mrf.mxu0
        %v3221 = vpop.f32.mrf.mxu0
        %v3222 = vadd.f32 0.0, %v3221
        %v3223 = vpop.f32.mrf.mxu0
        %3224 = vmatprep.mubr.bf16.mxu0 0
        %3225 = vmatmul.mubr.bf16.gmra.mxu0 %v3137
        %v3226 = vpop.f32.mrf.mxu0
        %v3227 = vadd.f32 0.0, %v3226
        %v3228 = vpop.f32.mrf.mxu0
        %v3229 = vpop.f32.mrf.mxu0
        %v3230 = vadd.f32 0.0, %v3229
        %v3231 = vpop.f32.mrf.mxu0
        %3232 = vmatprep.mubr.bf16.mxu0 0
        %3233 = vmatmul.mubr.bf16.gmra.mxu0 %v3140
        %v3234 = vpop.f32.mrf.mxu0
        %v3235 = vadd.f32 0.0, %v3234
        %v3236 = vpop.f32.mrf.mxu0
        %v3237 = vpop.f32.mrf.mxu0
        %v3238 = vadd.f32 0.0, %v3237
        %v3239 = vpop.f32.mrf.mxu0
        %3240 = vmatprep.mubr.bf16.mxu0 0
        %3241 = vmatmul.mubr.bf16.gmra.mxu0 %v3143
        %v3242 = vpop.f32.mrf.mxu0
        %v3243 = vadd.f32 0.0, %v3242
        %v3244 = vpop.f32.mrf.mxu0
        %v3245 = vpop.f32.mrf.mxu0
        %v3246 = vadd.f32 0.0, %v3245
        %v3247 = vpop.f32.mrf.mxu0
        %3248 = vmatprep.mubr.bf16.mxu0 0
        %3249 = vmatmul.mubr.bf16.gmra.mxu0 %v3146
        %v3250 = vpop.f32.mrf.mxu0
        %v3251 = vadd.f32 0.0, %v3250
        %v3252 = vpop.f32.mrf.mxu0
        %v3253 = vpop.f32.mrf.mxu0
        %v3254 = vadd.f32 0.0, %v3253
        %v3255 = vpop.f32.mrf.mxu0
        %3256 = vmatprep.mubr.bf16.mxu0 0
        %3257 = vmatmul.mubr.bf16.gmra.mxu0 %v3149
        %v3258 = vpop.f32.mrf.mxu0
        %v3259 = vadd.f32 0.0, %v3258
        %v3260 = vpop.f32.mrf.mxu0
        %v3261 = vpop.f32.mrf.mxu0
        %v3262 = vadd.f32 0.0, %v3261
        %v3263 = vpop.f32.mrf.mxu0
        %3264 = vmatprep.mubr.bf16.mxu0 0
        %3265 = vmatmul.mubr.bf16.gmra.mxu0 %v3152
        %v3266 = vpop.f32.mrf.mxu0
        %v3267 = vadd.f32 0.0, %v3266
        %v3268 = vpop.f32.mrf.mxu0
        %v3269 = vpop.f32.mrf.mxu0
        %v3270 = vadd.f32 0.0, %v3269
        %v3271 = vpop.f32.mrf.mxu0
        %3272 = vmatprep.mubr.bf16.mxu0 0
        %3273 = vmatmul.mubr.bf16.gmra.mxu0 %v3155
        %v3274 = vpop.f32.mrf.mxu0
        %v3275 = vadd.f32 0.0, %v3274
        %v3276 = vpop.f32.mrf.mxu0
        %v3277 = vpop.f32.mrf.mxu0
        %v3278 = vadd.f32 0.0, %v3277
        %v3279 = vpop.f32.mrf.mxu0
        %3280 = vmatprep.mubr.bf16.mxu0 0
        %3281 = vmatmul.mubr.bf16.gmra.mxu0 %v3158
        %v3282 = vpop.f32.mrf.mxu0
        %v3283 = vadd.f32 0.0, %v3282
        %v3284 = vpop.f32.mrf.mxu0
        %v3285 = vpop.f32.mrf.mxu0
        %v3286 = vadd.f32 0.0, %v3285
        %v3287 = vpop.f32.mrf.mxu0
        %3288 = vmatprep.mubr.bf16.mxu0 0
        %3289 = vmatmul.mubr.bf16.gmra.mxu0 %v3161
        %v3290 = vpop.f32.mrf.mxu0
        %v3291 = vadd.f32 0.0, %v3290
        %v3292 = vpop.f32.mrf.mxu0
        %v3293 = vpop.f32.mrf.mxu0
        %v3294 = vadd.f32 0.0, %v3293
        %v3295 = vpop.f32.mrf.mxu0
        %3296 = vmatprep.mubr.bf16.mxu0 0
        %3297 = vmatmul.mubr.bf16.gmra.mxu0 %v3164
        %v3298 = vpop.f32.mrf.mxu0
        %v3299 = vadd.f32 0.0, %v3298
        %v3300 = vpop.f32.mrf.mxu0
        %v3301 = vpop.f32.mrf.mxu0
        %v3302 = vadd.f32 0.0, %v3301
        %v3303 = vpop.f32.mrf.mxu0
        %3304 = vmatprep.mubr.bf16.mxu0 0
        %3305 = vmatmul.mubr.bf16.gmra.mxu0 %v3167
        %v3306 = vpop.f32.mrf.mxu0
        %v3307 = vadd.f32 0.0, %v3306
        %v3308 = vpop.f32.mrf.mxu0
        %v3309 = vpop.f32.mrf.mxu0
        %v3310 = vadd.f32 0.0, %v3309
        %v3311 = vpop.f32.mrf.mxu0
        %3312 = vmatprep.mubr.bf16.mxu0 0
        %3313 = vmatmul.mubr.bf16.gmra.mxu0 %v3170
        %v3314 = vpop.f32.mrf.mxu0
        %v3315 = vadd.f32 0.0, %v3314
        %v3316 = vpop.f32.mrf.mxu0
        %v3317 = vpop.f32.mrf.mxu0
        %v3318 = vadd.f32 0.0, %v3317
        %v3319 = vpop.f32.mrf.mxu0
        %3320 = vmatprep.mubr.bf16.mxu0 0
        %3321 = vmatmul.mubr.bf16.gmra.mxu0 %v3173
        %v3322 = vpop.f32.mrf.mxu0
        %v3323 = vadd.f32 0.0, %v3322
        %v3324 = vpop.f32.mrf.mxu0
        %v3325 = vpop.f32.mrf.mxu0
        %v3326 = vadd.f32 0.0, %v3325
        %v3327 = vpop.f32.mrf.mxu0
        %3328 = vmatprep.mubr.bf16.mxu0 0
        %3329 = vmatmul.mubr.bf16.gmra.mxu0 %v3176
        %v3330 = vpop.f32.mrf.mxu0
        %v3331 = vadd.f32 0.0, %v3330
        %v3332 = vpop.f32.mrf.mxu0
        %v3333 = vpop.f32.mrf.mxu0
        %v3334 = vadd.f32 0.0, %v3333
        %v3335 = vpop.f32.mrf.mxu0
        %3336 = vmatprep.mubr.bf16.mxu0 0
        %3337 = vmatmul.mubr.bf16.gmra.mxu0 %v3179
        %v3338 = vpop.f32.mrf.mxu0
        %v3339 = vadd.f32 0.0, %v3338
        %v3340 = vpop.f32.mrf.mxu0
        %v3341 = vpop.f32.mrf.mxu0
        %v3342 = vadd.f32 0.0, %v3341
        %v3343 = vpop.f32.mrf.mxu0
        %3344 = vdwg.mxu0
        %v3345 = vadd.f32 %v2620, %v3219
        %v3346 = vadd.f32 %v2621, %v3222
        %v3347 = vadd.f32 %v2622, %v3227
        %v3348 = vadd.f32 %v2623, %v3230
        %v3349 = vadd.f32 %v2624, %v3235
        %v3350 = vadd.f32 %v2625, %v3238
        %v3351 = vadd.f32 %v2626, %v3243
        %v3352 = vadd.f32 %v2627, %v3246
        %v3353 = vadd.f32 %v2628, %v3251
        %v3354 = vadd.f32 %v2629, %v3254
        %v3355 = vadd.f32 %v2630, %v3259
        %v3356 = vadd.f32 %v2631, %v3262
        %v3357 = vadd.f32 %v2632, %v3267
        %v3358 = vadd.f32 %v2633, %v3270
        %v3359 = vadd.f32 %v2634, %v3275
        %v3360 = vadd.f32 %v2635, %v3278
        %v3361 = vadd.f32 %v2636, %v3283
        %v3362 = vadd.f32 %v2637, %v3286
        %v3363 = vadd.f32 %v2638, %v3291
        %v3364 = vadd.f32 %v2639, %v3294
        %v3365 = vadd.f32 %v2640, %v3299
        %v3366 = vadd.f32 %v2641, %v3302
        %v3367 = vadd.f32 %v2642, %v3307
        %v3368 = vadd.f32 %v2643, %v3310
        %v3369 = vadd.f32 %v2644, %v3315
        %v3370 = vadd.f32 %v2645, %v3318
        %v3371 = vadd.f32 %v2646, %v3323
        %v3372 = vadd.f32 %v2647, %v3326
        %v3373 = vadd.f32 %v2648, %v3331
        %v3374 = vadd.f32 %v2649, %v3334
        %v3375 = vadd.f32 %v2650, %v3339
        %v3376 = vadd.f32 %v2651, %v3342
        %v3377 = vld [vmem:[%s725] sm:$0xe]
        %v3378 = vld [vmem:[%s725 + $0xc] sm:$0xe]
        %v3379 = vld [vmem:[%s725 + $0x18] sm:$0xe]
        %v3380 = vld [vmem:[%s725 + $0x24] sm:$0xe]
        %v3381 = vld [vmem:[%s725 + $0x30] sm:$0xe]
        %v3382 = vld [vmem:[%s725 + $0x3c] sm:$0xe]
        %v3383 = vld [vmem:[%s725 + $0x48] sm:$0xe]
        %v3384 = vld [vmem:[%s725 + $0x54] sm:$0xe]
        %v3385 = vld [vmem:[%s725 + $0x60] sm:$0xe]
        %v3386 = vld [vmem:[%s725 + $0x6c] sm:$0xe]
        %v3387 = vld [vmem:[%s725 + $0x78] sm:$0xe]
        %v3388 = vld [vmem:[%s725 + $0x84] sm:$0xe]
        %v3389 = vld [vmem:[%s725 + $0x90] sm:$0xe]
        %v3390 = vld [vmem:[%s725 + $0x9c] sm:$0xe]
        %v3391 = vld [vmem:[%s725 + $0xa8] sm:$0xe]
        %v3392 = vld [vmem:[%s725 + $0xb4] sm:$0xe]
        %v3441 = vrot.slane %v3377, 5
        %v3442 = vrot.slane %v3441, 4
        %v3443 = vrot.slane %v2653, 5
        %v3444 = vsel %vm1885, %v3442, %v3443
        %v3445 = vrot.slane %v3443, 4
        %v3446 = vrot.slane %v2654, 5
        %v3447 = vsel %vm1885, %v3445, %v3446
        %v3448 = vrot.slane %v3378, 5
        %v3449 = vrot.slane %v3448, 4
        %v3450 = vrot.slane %v2656, 5
        %v3451 = vsel %vm1885, %v3449, %v3450
        %v3452 = vrot.slane %v3450, 4
        %v3453 = vrot.slane %v2657, 5
        %v3454 = vsel %vm1885, %v3452, %v3453
        %v3455 = vrot.slane %v3379, 5
        %v3456 = vrot.slane %v3455, 4
        %v3457 = vrot.slane %v2659, 5
        %v3458 = vsel %vm1885, %v3456, %v3457
        %v3459 = vrot.slane %v3457, 4
        %v3460 = vrot.slane %v2660, 5
        %v3461 = vsel %vm1885, %v3459, %v3460
        %v3462 = vrot.slane %v3380, 5
        %v3463 = vrot.slane %v3462, 4
        %v3464 = vrot.slane %v2662, 5
        %v3465 = vsel %vm1885, %v3463, %v3464
        %v3466 = vrot.slane %v3464, 4
        %v3467 = vrot.slane %v2663, 5
        %v3468 = vsel %vm1885, %v3466, %v3467
        %v3469 = vrot.slane %v3381, 5
        %v3470 = vrot.slane %v3469, 4
        %v3471 = vrot.slane %v2665, 5
        %v3472 = vsel %vm1885, %v3470, %v3471
        %v3473 = vrot.slane %v3471, 4
        %v3474 = vrot.slane %v2666, 5
        %v3475 = vsel %vm1885, %v3473, %v3474
        %v3476 = vrot.slane %v3382, 5
        %v3477 = vrot.slane %v3476, 4
        %v3478 = vrot.slane %v2668, 5
        %v3479 = vsel %vm1885, %v3477, %v3478
        %v3480 = vrot.slane %v3478, 4
        %v3481 = vrot.slane %v2669, 5
        %v3482 = vsel %vm1885, %v3480, %v3481
        %v3483 = vrot.slane %v3383, 5
        %v3484 = vrot.slane %v3483, 4
        %v3485 = vrot.slane %v2671, 5
        %v3486 = vsel %vm1885, %v3484, %v3485
        %v3487 = vrot.slane %v3485, 4
        %v3488 = vrot.slane %v2672, 5
        %v3489 = vsel %vm1885, %v3487, %v3488
        %v3490 = vrot.slane %v3384, 5
        %v3491 = vrot.slane %v3490, 4
        %v3492 = vrot.slane %v2674, 5
        %v3493 = vsel %vm1885, %v3491, %v3492
        %v3494 = vrot.slane %v3492, 4
        %v3495 = vrot.slane %v2675, 5
        %v3496 = vsel %vm1885, %v3494, %v3495
        %v3497 = vrot.slane %v3385, 5
        %v3498 = vrot.slane %v3497, 4
        %v3499 = vrot.slane %v2677, 5
        %v3500 = vsel %vm1885, %v3498, %v3499
        %v3501 = vrot.slane %v3499, 4
        %v3502 = vrot.slane %v2678, 5
        %v3503 = vsel %vm1885, %v3501, %v3502
        %v3504 = vrot.slane %v3386, 5
        %v3505 = vrot.slane %v3504, 4
        %v3506 = vrot.slane %v2680, 5
        %v3507 = vsel %vm1885, %v3505, %v3506
        %v3508 = vrot.slane %v3506, 4
        %v3509 = vrot.slane %v2681, 5
        %v3510 = vsel %vm1885, %v3508, %v3509
        %v3511 = vrot.slane %v3387, 5
        %v3512 = vrot.slane %v3511, 4
        %v3513 = vrot.slane %v2683, 5
        %v3514 = vsel %vm1885, %v3512, %v3513
        %v3515 = vrot.slane %v3513, 4
        %v3516 = vrot.slane %v2684, 5
        %v3517 = vsel %vm1885, %v3515, %v3516
        %v3518 = vrot.slane %v3388, 5
        %v3519 = vrot.slane %v3518, 4
        %v3520 = vrot.slane %v2686, 5
        %v3521 = vsel %vm1885, %v3519, %v3520
        %v3522 = vrot.slane %v3520, 4
        %v3523 = vrot.slane %v2687, 5
        %v3524 = vsel %vm1885, %v3522, %v3523
        %v3525 = vrot.slane %v3389, 5
        %v3526 = vrot.slane %v3525, 4
        %v3527 = vrot.slane %v2689, 5
        %v3528 = vsel %vm1885, %v3526, %v3527
        %v3529 = vrot.slane %v3527, 4
        %v3530 = vrot.slane %v2690, 5
        %v3531 = vsel %vm1885, %v3529, %v3530
        %v3532 = vrot.slane %v3390, 5
        %v3533 = vrot.slane %v3532, 4
        %v3534 = vrot.slane %v2692, 5
        %v3535 = vsel %vm1885, %v3533, %v3534
        %v3536 = vrot.slane %v3534, 4
        %v3537 = vrot.slane %v2693, 5
        %v3538 = vsel %vm1885, %v3536, %v3537
        %v3539 = vrot.slane %v3391, 5
        %v3540 = vrot.slane %v3539, 4
        %v3541 = vrot.slane %v2695, 5
        %v3542 = vsel %vm1885, %v3540, %v3541
        %v3543 = vrot.slane %v3541, 4
        %v3544 = vrot.slane %v2696, 5
        %v3545 = vsel %vm1885, %v3543, %v3544
        %v3546 = vrot.slane %v3392, 5
        %v3547 = vrot.slane %v3546, 4
        %v3548 = vrot.slane %v2698, 5
        %v3549 = vsel %vm1885, %v3547, %v3548
        %v3550 = vrot.slane %v3548, 4
        %v3551 = vrot.slane %v2699, 5
        %v3552 = vsel %vm1885, %v3550, %v3551
        %v3553 = vld [vmem:[%s1 + $0x8] sm:$0xc]
        %v3554 = vunpack.c.l.b16 %v3444
        %v3555 = vunpack.c.l.b16 %v3447
        %v3556 = vunpack.c.l.b16 %v3451
        %v3557 = vunpack.c.l.b16 %v3454
        %v3558 = vunpack.c.l.b16 %v3458
        %v3559 = vunpack.c.l.b16 %v3461
        %v3560 = vunpack.c.l.b16 %v3465
        %v3561 = vunpack.c.l.b16 %v3468
        %v3562 = vunpack.c.l.b16 %v3472
        %v3563 = vunpack.c.l.b16 %v3475
        %v3564 = vunpack.c.l.b16 %v3479
        %v3565 = vunpack.c.l.b16 %v3482
        %v3566 = vunpack.c.l.b16 %v3486
        %v3567 = vunpack.c.l.b16 %v3489
        %v3568 = vunpack.c.l.b16 %v3493
        %v3569 = vunpack.c.l.b16 %v3496
        %v3570 = vunpack.c.l.b16 %v3500
        %v3571 = vunpack.c.l.b16 %v3503
        %v3572 = vunpack.c.l.b16 %v3507
        %v3573 = vunpack.c.l.b16 %v3510
        %v3574 = vunpack.c.l.b16 %v3514
        %v3575 = vunpack.c.l.b16 %v3517
        %v3576 = vunpack.c.l.b16 %v3521
        %v3577 = vunpack.c.l.b16 %v3524
        %v3578 = vunpack.c.l.b16 %v3528
        %v3579 = vunpack.c.l.b16 %v3531
        %v3580 = vunpack.c.l.b16 %v3535
        %v3581 = vunpack.c.l.b16 %v3538
        %v3582 = vunpack.c.l.b16 %v3542
        %v3583 = vunpack.c.l.b16 %v3545
        %v3584 = vunpack.c.l.b16 %v3549
        %v3585 = vunpack.c.l.b16 %v3552
        %v3586 = vpack.c.b16 %v3555, %v3554
        %v3587 = vpack.c.b16 %v3557, %v3556
        %v3588 = vpack.c.b16 %v3559, %v3558
        %v3589 = vpack.c.b16 %v3561, %v3560
        %v3590 = vpack.c.b16 %v3563, %v3562
        %v3591 = vpack.c.b16 %v3565, %v3564
        %v3592 = vpack.c.b16 %v3567, %v3566
        %v3593 = vpack.c.b16 %v3569, %v3568
        %v3594 = vpack.c.b16 %v3571, %v3570
        %v3595 = vpack.c.b16 %v3573, %v3572
        %v3596 = vpack.c.b16 %v3575, %v3574
        %v3597 = vpack.c.b16 %v3577, %v3576
        %v3598 = vpack.c.b16 %v3579, %v3578
        %v3599 = vpack.c.b16 %v3581, %v3580
        %v3600 = vpack.c.b16 %v3583, %v3582
        %v3601 = vpack.c.b16 %v3585, %v3584
        %v3603 = vunpack.c.l.b16 %v3553
        %v3604 = vpack.c.b16 %v3603, %v3603
        %v3605 = vrot.slane %v3604, 2
        %v3607 = vsel %vm1329, %v3586, 0
        %v3610 = vsel %vm1329, %v3587, 0
        %v3613 = vsel %vm1329, %v3588, 0
        %v3616 = vsel %vm1329, %v3589, 0
        %v3619 = vsel %vm1329, %v3590, 0
        %v3622 = vsel %vm1329, %v3591, 0
        %v3625 = vsel %vm1329, %v3592, 0
        %v3628 = vsel %vm1329, %v3593, 0
        %v3631 = vsel %vm1329, %v3594, 0
        %v3634 = vsel %vm1329, %v3595, 0
        %v3637 = vsel %vm1329, %v3596, 0
        %v3640 = vsel %vm1329, %v3597, 0
        %v3643 = vsel %vm1329, %v3598, 0
        %v3646 = vsel %vm1329, %v3599, 0
        %v3649 = vsel %vm1329, %v3600, 0
        %v3652 = vsel %vm1329, %v3601, 0
        %v3655 = vsel %vm1378, %v3605, 0
        %3657 = vmatprep.subr.bf16.mxu0 0
        %3658 = vmatpush1.bf16.msra.mxu0 0
        %3659 = vmatprep.subr.bf16.mxu0 0
        %3660 = vmatpush1.bf16.msra.mxu0 0
        %3661 = vmatprep.subr.bf16.mxu0 0
        %3662 = vmatpush1.bf16.msra.mxu0 0
        %3663 = vmatprep.subr.bf16.mxu0 0
        %3664 = vmatpush1.bf16.msra.mxu0 0
        %3665 = vmatprep.subr.bf16.mxu0 0
        %3666 = vmatpush1.bf16.msra.mxu0 0
        %3667 = vmatprep.subr.bf16.mxu0 0
        %3668 = vmatpush1.bf16.msra.mxu0 0
        %3669 = vmatprep.subr.bf16.mxu0 0
        %3670 = vmatpush1.bf16.msra.mxu0 0
        %3671 = vmatprep.subr.bf16.mxu0 0
        %3672 = vmatpush1.bf16.msra.mxu0 %v3655
        %3673 = vmatprep.subr.bf16.mxu0 0
        %3674 = vmatpush2.bf16.msra.mxu0 0
        %3675 = vmatprep.subr.bf16.mxu0 0
        %3676 = vmatpush2.bf16.msra.mxu0 0
        %3677 = vmatprep.subr.bf16.mxu0 0
        %3678 = vmatpush2.bf16.msra.mxu0 0
        %3679 = vmatprep.subr.bf16.mxu0 0
        %3680 = vmatpush2.bf16.msra.mxu0 0
        %3681 = vmatprep.subr.bf16.mxu0 0
        %3682 = vmatpush2.bf16.msra.mxu0 0
        %3683 = vmatprep.subr.bf16.mxu0 0
        %3684 = vmatpush2.bf16.msra.mxu0 0
        %3685 = vmatprep.subr.bf16.mxu0 0
        %3686 = vmatpush2.bf16.msra.mxu0 0
        %3687 = vmatprep.subr.bf16.mxu0 0
        %3688 = vmatpush2.bf16.msra.mxu0 0
        %3689 = vmatprep.mubr.bf16.mxu0 0
        %3690 = vmatmul.mubr.bf16.gmra.mxu0 %v3607
        %v3691 = vpop.f32.mrf.mxu0
        %v3692 = vadd.f32 0.0, %v3691
        %v3693 = vpop.f32.mrf.mxu0
        %v3694 = vpop.f32.mrf.mxu0
        %v3695 = vadd.f32 0.0, %v3694
        %v3696 = vpop.f32.mrf.mxu0
        %3697 = vmatprep.mubr.bf16.mxu0 0
        %3698 = vmatmul.mubr.bf16.gmra.mxu0 %v3610
        %v3699 = vpop.f32.mrf.mxu0
        %v3700 = vadd.f32 0.0, %v3699
        %v3701 = vpop.f32.mrf.mxu0
        %v3702 = vpop.f32.mrf.mxu0
        %v3703 = vadd.f32 0.0, %v3702
        %v3704 = vpop.f32.mrf.mxu0
        %3705 = vmatprep.mubr.bf16.mxu0 0
        %3706 = vmatmul.mubr.bf16.gmra.mxu0 %v3613
        %v3707 = vpop.f32.mrf.mxu0
        %v3708 = vadd.f32 0.0, %v3707
        %v3709 = vpop.f32.mrf.mxu0
        %v3710 = vpop.f32.mrf.mxu0
        %v3711 = vadd.f32 0.0, %v3710
        %v3712 = vpop.f32.mrf.mxu0
        %3713 = vmatprep.mubr.bf16.mxu0 0
        %3714 = vmatmul.mubr.bf16.gmra.mxu0 %v3616
        %v3715 = vpop.f32.mrf.mxu0
        %v3716 = vadd.f32 0.0, %v3715
        %v3717 = vpop.f32.mrf.mxu0
        %v3718 = vpop.f32.mrf.mxu0
        %v3719 = vadd.f32 0.0, %v3718
        %v3720 = vpop.f32.mrf.mxu0
        %3721 = vmatprep.mubr.bf16.mxu0 0
        %3722 = vmatmul.mubr.bf16.gmra.mxu0 %v3619
        %v3723 = vpop.f32.mrf.mxu0
        %v3724 = vadd.f32 0.0, %v3723
        %v3725 = vpop.f32.mrf.mxu0
        %v3726 = vpop.f32.mrf.mxu0
        %v3727 = vadd.f32 0.0, %v3726
        %v3728 = vpop.f32.mrf.mxu0
        %3729 = vmatprep.mubr.bf16.mxu0 0
        %3730 = vmatmul.mubr.bf16.gmra.mxu0 %v3622
        %v3731 = vpop.f32.mrf.mxu0
        %v3732 = vadd.f32 0.0, %v3731
        %v3733 = vpop.f32.mrf.mxu0
        %v3734 = vpop.f32.mrf.mxu0
        %v3735 = vadd.f32 0.0, %v3734
        %v3736 = vpop.f32.mrf.mxu0
        %3737 = vmatprep.mubr.bf16.mxu0 0
        %3738 = vmatmul.mubr.bf16.gmra.mxu0 %v3625
        %v3739 = vpop.f32.mrf.mxu0
        %v3740 = vadd.f32 0.0, %v3739
        %v3741 = vpop.f32.mrf.mxu0
        %v3742 = vpop.f32.mrf.mxu0
        %v3743 = vadd.f32 0.0, %v3742
        %v3744 = vpop.f32.mrf.mxu0
        %3745 = vmatprep.mubr.bf16.mxu0 0
        %3746 = vmatmul.mubr.bf16.gmra.mxu0 %v3628
        %v3747 = vpop.f32.mrf.mxu0
        %v3748 = vadd.f32 0.0, %v3747
        %v3749 = vpop.f32.mrf.mxu0
        %v3750 = vpop.f32.mrf.mxu0
        %v3751 = vadd.f32 0.0, %v3750
        %v3752 = vpop.f32.mrf.mxu0
        %3753 = vmatprep.mubr.bf16.mxu0 0
        %3754 = vmatmul.mubr.bf16.gmra.mxu0 %v3631
        %v3755 = vpop.f32.mrf.mxu0
        %v3756 = vadd.f32 0.0, %v3755
        %v3757 = vpop.f32.mrf.mxu0
        %v3758 = vpop.f32.mrf.mxu0
        %v3759 = vadd.f32 0.0, %v3758
        %v3760 = vpop.f32.mrf.mxu0
        %3761 = vmatprep.mubr.bf16.mxu0 0
        %3762 = vmatmul.mubr.bf16.gmra.mxu0 %v3634
        %v3763 = vpop.f32.mrf.mxu0
        %v3764 = vadd.f32 0.0, %v3763
        %v3765 = vpop.f32.mrf.mxu0
        %v3766 = vpop.f32.mrf.mxu0
        %v3767 = vadd.f32 0.0, %v3766
        %v3768 = vpop.f32.mrf.mxu0
        %3769 = vmatprep.mubr.bf16.mxu0 0
        %3770 = vmatmul.mubr.bf16.gmra.mxu0 %v3637
        %v3771 = vpop.f32.mrf.mxu0
        %v3772 = vadd.f32 0.0, %v3771
        %v3773 = vpop.f32.mrf.mxu0
        %v3774 = vpop.f32.mrf.mxu0
        %v3775 = vadd.f32 0.0, %v3774
        %v3776 = vpop.f32.mrf.mxu0
        %3777 = vmatprep.mubr.bf16.mxu0 0
        %3778 = vmatmul.mubr.bf16.gmra.mxu0 %v3640
        %v3779 = vpop.f32.mrf.mxu0
        %v3780 = vadd.f32 0.0, %v3779
        %v3781 = vpop.f32.mrf.mxu0
        %v3782 = vpop.f32.mrf.mxu0
        %v3783 = vadd.f32 0.0, %v3782
        %v3784 = vpop.f32.mrf.mxu0
        %3785 = vmatprep.mubr.bf16.mxu0 0
        %3786 = vmatmul.mubr.bf16.gmra.mxu0 %v3643
        %v3787 = vpop.f32.mrf.mxu0
        %v3788 = vadd.f32 0.0, %v3787
        %v3789 = vpop.f32.mrf.mxu0
        %v3790 = vpop.f32.mrf.mxu0
        %v3791 = vadd.f32 0.0, %v3790
        %v3792 = vpop.f32.mrf.mxu0
        %3793 = vmatprep.mubr.bf16.mxu0 0
        %3794 = vmatmul.mubr.bf16.gmra.mxu0 %v3646
        %v3795 = vpop.f32.mrf.mxu0
        %v3796 = vadd.f32 0.0, %v3795
        %v3797 = vpop.f32.mrf.mxu0
        %v3798 = vpop.f32.mrf.mxu0
        %v3799 = vadd.f32 0.0, %v3798
        %v3800 = vpop.f32.mrf.mxu0
        %3801 = vmatprep.mubr.bf16.mxu0 0
        %3802 = vmatmul.mubr.bf16.gmra.mxu0 %v3649
        %v3803 = vpop.f32.mrf.mxu0
        %v3804 = vadd.f32 0.0, %v3803
        %v3805 = vpop.f32.mrf.mxu0
        %v3806 = vpop.f32.mrf.mxu0
        %v3807 = vadd.f32 0.0, %v3806
        %v3808 = vpop.f32.mrf.mxu0
        %3809 = vmatprep.mubr.bf16.mxu0 0
        %3810 = vmatmul.mubr.bf16.gmra.mxu0 %v3652
        %v3811 = vpop.f32.mrf.mxu0
        %v3812 = vadd.f32 0.0, %v3811
        %v3813 = vpop.f32.mrf.mxu0
        %v3814 = vpop.f32.mrf.mxu0
        %v3815 = vadd.f32 0.0, %v3814
        %v3816 = vpop.f32.mrf.mxu0
        %3817 = vdwg.mxu0
        %v3818 = vadd.f32 %v3345, %v3692
        %v3819 = vadd.f32 %v3346, %v3695
        %v3820 = vadd.f32 %v3347, %v3700
        %v3821 = vadd.f32 %v3348, %v3703
        %v3822 = vadd.f32 %v3349, %v3708
        %v3823 = vadd.f32 %v3350, %v3711
        %v3824 = vadd.f32 %v3351, %v3716
        %v3825 = vadd.f32 %v3352, %v3719
        %v3826 = vadd.f32 %v3353, %v3724
        %v3827 = vadd.f32 %v3354, %v3727
        %v3828 = vadd.f32 %v3355, %v3732
        %v3829 = vadd.f32 %v3356, %v3735
        %v3830 = vadd.f32 %v3357, %v3740
        %v3831 = vadd.f32 %v3358, %v3743
        %v3832 = vadd.f32 %v3359, %v3748
        %v3833 = vadd.f32 %v3360, %v3751
        %v3834 = vadd.f32 %v3361, %v3756
        %v3835 = vadd.f32 %v3362, %v3759
        %v3836 = vadd.f32 %v3363, %v3764
        %v3837 = vadd.f32 %v3364, %v3767
        %v3838 = vadd.f32 %v3365, %v3772
        %v3839 = vadd.f32 %v3366, %v3775
        %v3840 = vadd.f32 %v3367, %v3780
        %v3841 = vadd.f32 %v3368, %v3783
        %v3842 = vadd.f32 %v3369, %v3788
        %v3843 = vadd.f32 %v3370, %v3791
        %v3844 = vadd.f32 %v3371, %v3796
        %v3845 = vadd.f32 %v3372, %v3799
        %v3846 = vadd.f32 %v3373, %v3804
        %v3847 = vadd.f32 %v3374, %v3807
        %v3848 = vadd.f32 %v3375, %v3812
        %v3849 = vadd.f32 %v3376, %v3815
        %s3850 = scalar_lea.vmem [#allocation2], 24
        %v3851 = vld [vmem:[%s3850] sm:$0xf]
        %v3852 = vld [vmem:[%s3850 + $0x4] sm:$0xf]
        %v3853 = vld [vmem:[%s3850 + $0xc] sm:$0xf]
        %v3854 = vld [vmem:[%s3850 + $0x10] sm:$0xf]
        %v3855 = vld [vmem:[%s3850 + $0x18] sm:$0xf]
        %v3856 = vld [vmem:[%s3850 + $0x1c] sm:$0xf]
        %v3857 = vld [vmem:[%s3850 + $0x24] sm:$0xf]
        %v3858 = vld [vmem:[%s3850 + $0x28] sm:$0xf]
        %v3859 = vld [vmem:[%s3850 + $0x30] sm:$0xf]
        %v3860 = vld [vmem:[%s3850 + $0x34] sm:$0xf]
        %v3861 = vld [vmem:[%s3850 + $0x3c] sm:$0xf]
        %v3862 = vld [vmem:[%s3850 + $0x40] sm:$0xf]
        %v3863 = vld [vmem:[%s3850 + $0x48] sm:$0xf]
        %v3864 = vld [vmem:[%s3850 + $0x4c] sm:$0xf]
        %v3865 = vld [vmem:[%s3850 + $0x54] sm:$0xf]
        %v3866 = vld [vmem:[%s3850 + $0x58] sm:$0xf]
        %v3867 = vld [vmem:[%s3850 + $0x60] sm:$0xf]
        %v3868 = vld [vmem:[%s3850 + $0x64] sm:$0xf]
        %v3869 = vld [vmem:[%s3850 + $0x6c] sm:$0xf]
        %v3870 = vld [vmem:[%s3850 + $0x70] sm:$0xf]
        %v3871 = vld [vmem:[%s3850 + $0x78] sm:$0xf]
        %v3872 = vld [vmem:[%s3850 + $0x7c] sm:$0xf]
        %v3873 = vld [vmem:[%s3850 + $0x84] sm:$0xf]
        %v3874 = vld [vmem:[%s3850 + $0x88] sm:$0xf]
        %v3875 = vld [vmem:[%s3850 + $0x90] sm:$0xf]
        %v3876 = vld [vmem:[%s3850 + $0x94] sm:$0xf]
        %v3877 = vld [vmem:[%s3850 + $0x9c] sm:$0xf]
        %v3878 = vld [vmem:[%s3850 + $0xa0] sm:$0xf]
        %v3879 = vld [vmem:[%s3850 + $0xa8] sm:$0xf]
        %v3880 = vld [vmem:[%s3850 + $0xac] sm:$0xf]
        %v3881 = vld [vmem:[%s3850 + $0xb4] sm:$0xf]
        %v3882 = vld [vmem:[%s3850 + $0xb8] sm:$0xf]
        %v3883 = vld [vmem:[%s1 + $0xc] sm:$0x3]
        %v3916 = vunpack.c.l.b16 %v3851
        %v3917 = vunpack.c.l.b16 %v3852
        %v3918 = vunpack.c.l.b16 %v3853
        %v3919 = vunpack.c.l.b16 %v3854
        %v3920 = vunpack.c.l.b16 %v3855
        %v3921 = vunpack.c.l.b16 %v3856
        %v3922 = vunpack.c.l.b16 %v3857
        %v3923 = vunpack.c.l.b16 %v3858
        %v3924 = vunpack.c.l.b16 %v3859
        %v3925 = vunpack.c.l.b16 %v3860
        %v3926 = vunpack.c.l.b16 %v3861
        %v3927 = vunpack.c.l.b16 %v3862
        %v3928 = vunpack.c.l.b16 %v3863
        %v3929 = vunpack.c.l.b16 %v3864
        %v3930 = vunpack.c.l.b16 %v3865
        %v3931 = vunpack.c.l.b16 %v3866
        %v3932 = vunpack.c.l.b16 %v3867
        %v3933 = vunpack.c.l.b16 %v3868
        %v3934 = vunpack.c.l.b16 %v3869
        %v3935 = vunpack.c.l.b16 %v3870
        %v3936 = vunpack.c.l.b16 %v3871
        %v3937 = vunpack.c.l.b16 %v3872
        %v3938 = vunpack.c.l.b16 %v3873
        %v3939 = vunpack.c.l.b16 %v3874
        %v3940 = vunpack.c.l.b16 %v3875
        %v3941 = vunpack.c.l.b16 %v3876
        %v3942 = vunpack.c.l.b16 %v3877
        %v3943 = vunpack.c.l.b16 %v3878
        %v3944 = vunpack.c.l.b16 %v3879
        %v3945 = vunpack.c.l.b16 %v3880
        %v3946 = vunpack.c.l.b16 %v3881
        %v3947 = vunpack.c.l.b16 %v3882
        %v3948 = vpack.c.b16 %v3917, %v3916
        %v3949 = vpack.c.b16 %v3919, %v3918
        %v3950 = vpack.c.b16 %v3921, %v3920
        %v3951 = vpack.c.b16 %v3923, %v3922
        %v3952 = vpack.c.b16 %v3925, %v3924
        %v3953 = vpack.c.b16 %v3927, %v3926
        %v3954 = vpack.c.b16 %v3929, %v3928
        %v3955 = vpack.c.b16 %v3931, %v3930
        %v3956 = vpack.c.b16 %v3933, %v3932
        %v3957 = vpack.c.b16 %v3935, %v3934
        %v3958 = vpack.c.b16 %v3937, %v3936
        %v3959 = vpack.c.b16 %v3939, %v3938
        %v3960 = vpack.c.b16 %v3941, %v3940
        %v3961 = vpack.c.b16 %v3943, %v3942
        %v3962 = vpack.c.b16 %v3945, %v3944
        %v3963 = vpack.c.b16 %v3947, %v3946
        %v3965 = vsel %vm1329, %v3948, 0
        %v3968 = vsel %vm1329, %v3949, 0
        %v3971 = vsel %vm1329, %v3950, 0
        %v3974 = vsel %vm1329, %v3951, 0
        %v3977 = vsel %vm1329, %v3952, 0
        %v3980 = vsel %vm1329, %v3953, 0
        %v3983 = vsel %vm1329, %v3954, 0
        %v3986 = vsel %vm1329, %v3955, 0
        %v3989 = vsel %vm1329, %v3956, 0
        %v3992 = vsel %vm1329, %v3957, 0
        %v3995 = vsel %vm1329, %v3958, 0
        %v3998 = vsel %vm1329, %v3959, 0
        %v4001 = vsel %vm1329, %v3960, 0
        %v4004 = vsel %vm1329, %v3961, 0
        %v4007 = vsel %vm1329, %v3962, 0
        %v4010 = vsel %vm1329, %v3963, 0
        %v4013 = vsel %vm1378, %v3883, 0
        %4015 = vmatprep.subr.bf16.mxu0 0
        %4016 = vmatpush1.bf16.msra.mxu0 0
        %4017 = vmatprep.subr.bf16.mxu0 0
        %4018 = vmatpush1.bf16.msra.mxu0 0
        %4019 = vmatprep.subr.bf16.mxu0 0
        %4020 = vmatpush1.bf16.msra.mxu0 0
        %4021 = vmatprep.subr.bf16.mxu0 0
        %4022 = vmatpush1.bf16.msra.mxu0 0
        %4023 = vmatprep.subr.bf16.mxu0 0
        %4024 = vmatpush1.bf16.msra.mxu0 0
        %4025 = vmatprep.subr.bf16.mxu0 0
        %4026 = vmatpush1.bf16.msra.mxu0 0
        %4027 = vmatprep.subr.bf16.mxu0 0
        %4028 = vmatpush1.bf16.msra.mxu0 0
        %4029 = vmatprep.subr.bf16.mxu0 0
        %4030 = vmatpush1.bf16.msra.mxu0 %v4013
        %4031 = vmatprep.subr.bf16.mxu0 0
        %4032 = vmatpush2.bf16.msra.mxu0 0
        %4033 = vmatprep.subr.bf16.mxu0 0
        %4034 = vmatpush2.bf16.msra.mxu0 0
        %4035 = vmatprep.subr.bf16.mxu0 0
        %4036 = vmatpush2.bf16.msra.mxu0 0
        %4037 = vmatprep.subr.bf16.mxu0 0
        %4038 = vmatpush2.bf16.msra.mxu0 0
        %4039 = vmatprep.subr.bf16.mxu0 0
        %4040 = vmatpush2.bf16.msra.mxu0 0
        %4041 = vmatprep.subr.bf16.mxu0 0
        %4042 = vmatpush2.bf16.msra.mxu0 0
        %4043 = vmatprep.subr.bf16.mxu0 0
        %4044 = vmatpush2.bf16.msra.mxu0 0
        %4045 = vmatprep.subr.bf16.mxu0 0
        %4046 = vmatpush2.bf16.msra.mxu0 0
        %4047 = vmatprep.mubr.bf16.mxu0 0
        %4048 = vmatmul.mubr.bf16.gmra.mxu0 %v3965
        %v4049 = vpop.f32.mrf.mxu0
        %v4050 = vadd.f32 0.0, %v4049
        %v4051 = vpop.f32.mrf.mxu0
        %v4052 = vpop.f32.mrf.mxu0
        %v4053 = vadd.f32 0.0, %v4052
        %v4054 = vpop.f32.mrf.mxu0
        %4055 = vmatprep.mubr.bf16.mxu0 0
        %4056 = vmatmul.mubr.bf16.gmra.mxu0 %v3968
        %v4057 = vpop.f32.mrf.mxu0
        %v4058 = vadd.f32 0.0, %v4057
        %v4059 = vpop.f32.mrf.mxu0
        %v4060 = vpop.f32.mrf.mxu0
        %v4061 = vadd.f32 0.0, %v4060
        %v4062 = vpop.f32.mrf.mxu0
        %4063 = vmatprep.mubr.bf16.mxu0 0
        %4064 = vmatmul.mubr.bf16.gmra.mxu0 %v3971
        %v4065 = vpop.f32.mrf.mxu0
        %v4066 = vadd.f32 0.0, %v4065
        %v4067 = vpop.f32.mrf.mxu0
        %v4068 = vpop.f32.mrf.mxu0
        %v4069 = vadd.f32 0.0, %v4068
        %v4070 = vpop.f32.mrf.mxu0
        %4071 = vmatprep.mubr.bf16.mxu0 0
        %4072 = vmatmul.mubr.bf16.gmra.mxu0 %v3974
        %v4073 = vpop.f32.mrf.mxu0
        %v4074 = vadd.f32 0.0, %v4073
        %v4075 = vpop.f32.mrf.mxu0
        %v4076 = vpop.f32.mrf.mxu0
        %v4077 = vadd.f32 0.0, %v4076
        %v4078 = vpop.f32.mrf.mxu0
        %4079 = vmatprep.mubr.bf16.mxu0 0
        %4080 = vmatmul.mubr.bf16.gmra.mxu0 %v3977
        %v4081 = vpop.f32.mrf.mxu0
        %v4082 = vadd.f32 0.0, %v4081
        %v4083 = vpop.f32.mrf.mxu0
        %v4084 = vpop.f32.mrf.mxu0
        %v4085 = vadd.f32 0.0, %v4084
        %v4086 = vpop.f32.mrf.mxu0
        %4087 = vmatprep.mubr.bf16.mxu0 0
        %4088 = vmatmul.mubr.bf16.gmra.mxu0 %v3980
        %v4089 = vpop.f32.mrf.mxu0
        %v4090 = vadd.f32 0.0, %v4089
        %v4091 = vpop.f32.mrf.mxu0
        %v4092 = vpop.f32.mrf.mxu0
        %v4093 = vadd.f32 0.0, %v4092
        %v4094 = vpop.f32.mrf.mxu0
        %4095 = vmatprep.mubr.bf16.mxu0 0
        %4096 = vmatmul.mubr.bf16.gmra.mxu0 %v3983
        %v4097 = vpop.f32.mrf.mxu0
        %v4098 = vadd.f32 0.0, %v4097
        %v4099 = vpop.f32.mrf.mxu0
        %v4100 = vpop.f32.mrf.mxu0
        %v4101 = vadd.f32 0.0, %v4100
        %v4102 = vpop.f32.mrf.mxu0
        %4103 = vmatprep.mubr.bf16.mxu0 0
        %4104 = vmatmul.mubr.bf16.gmra.mxu0 %v3986
        %v4105 = vpop.f32.mrf.mxu0
        %v4106 = vadd.f32 0.0, %v4105
        %v4107 = vpop.f32.mrf.mxu0
        %v4108 = vpop.f32.mrf.mxu0
        %v4109 = vadd.f32 0.0, %v4108
        %v4110 = vpop.f32.mrf.mxu0
        %4111 = vmatprep.mubr.bf16.mxu0 0
        %4112 = vmatmul.mubr.bf16.gmra.mxu0 %v3989
        %v4113 = vpop.f32.mrf.mxu0
        %v4114 = vadd.f32 0.0, %v4113
        %v4115 = vpop.f32.mrf.mxu0
        %v4116 = vpop.f32.mrf.mxu0
        %v4117 = vadd.f32 0.0, %v4116
        %v4118 = vpop.f32.mrf.mxu0
        %4119 = vmatprep.mubr.bf16.mxu0 0
        %4120 = vmatmul.mubr.bf16.gmra.mxu0 %v3992
        %v4121 = vpop.f32.mrf.mxu0
        %v4122 = vadd.f32 0.0, %v4121
        %v4123 = vpop.f32.mrf.mxu0
        %v4124 = vpop.f32.mrf.mxu0
        %v4125 = vadd.f32 0.0, %v4124
        %v4126 = vpop.f32.mrf.mxu0
        %4127 = vmatprep.mubr.bf16.mxu0 0
        %4128 = vmatmul.mubr.bf16.gmra.mxu0 %v3995
        %v4129 = vpop.f32.mrf.mxu0
        %v4130 = vadd.f32 0.0, %v4129
        %v4131 = vpop.f32.mrf.mxu0
        %v4132 = vpop.f32.mrf.mxu0
        %v4133 = vadd.f32 0.0, %v4132
        %v4134 = vpop.f32.mrf.mxu0
        %4135 = vmatprep.mubr.bf16.mxu0 0
        %4136 = vmatmul.mubr.bf16.gmra.mxu0 %v3998
        %v4137 = vpop.f32.mrf.mxu0
        %v4138 = vadd.f32 0.0, %v4137
        %v4139 = vpop.f32.mrf.mxu0
        %v4140 = vpop.f32.mrf.mxu0
        %v4141 = vadd.f32 0.0, %v4140
        %v4142 = vpop.f32.mrf.mxu0
        %4143 = vmatprep.mubr.bf16.mxu0 0
        %4144 = vmatmul.mubr.bf16.gmra.mxu0 %v4001
        %v4145 = vpop.f32.mrf.mxu0
        %v4146 = vadd.f32 0.0, %v4145
        %v4147 = vpop.f32.mrf.mxu0
        %v4148 = vpop.f32.mrf.mxu0
        %v4149 = vadd.f32 0.0, %v4148
        %v4150 = vpop.f32.mrf.mxu0
        %4151 = vmatprep.mubr.bf16.mxu0 0
        %4152 = vmatmul.mubr.bf16.gmra.mxu0 %v4004
        %v4153 = vpop.f32.mrf.mxu0
        %v4154 = vadd.f32 0.0, %v4153
        %v4155 = vpop.f32.mrf.mxu0
        %v4156 = vpop.f32.mrf.mxu0
        %v4157 = vadd.f32 0.0, %v4156
        %v4158 = vpop.f32.mrf.mxu0
        %4159 = vmatprep.mubr.bf16.mxu0 0
        %4160 = vmatmul.mubr.bf16.gmra.mxu0 %v4007
        %v4161 = vpop.f32.mrf.mxu0
        %v4162 = vadd.f32 0.0, %v4161
        %v4163 = vpop.f32.mrf.mxu0
        %v4164 = vpop.f32.mrf.mxu0
        %v4165 = vadd.f32 0.0, %v4164
        %v4166 = vpop.f32.mrf.mxu0
        %4167 = vmatprep.mubr.bf16.mxu0 0
        %4168 = vmatmul.mubr.bf16.gmra.mxu0 %v4010
        %v4169 = vpop.f32.mrf.mxu0
        %v4170 = vadd.f32 0.0, %v4169
        %v4171 = vpop.f32.mrf.mxu0
        %v4172 = vpop.f32.mrf.mxu0
        %v4173 = vadd.f32 0.0, %v4172
        %v4174 = vpop.f32.mrf.mxu0
        %4175 = vdwg.mxu0
        %v4176 = vadd.f32 %v3818, %v4050
        %v4177 = vadd.f32 %v3819, %v4053
        %v4178 = vadd.f32 %v3820, %v4058
        %v4179 = vadd.f32 %v3821, %v4061
        %v4180 = vadd.f32 %v3822, %v4066
        %v4181 = vadd.f32 %v3823, %v4069
        %v4182 = vadd.f32 %v3824, %v4074
        %v4183 = vadd.f32 %v3825, %v4077
        %v4184 = vadd.f32 %v3826, %v4082
        %v4185 = vadd.f32 %v3827, %v4085
        %v4186 = vadd.f32 %v3828, %v4090
        %v4187 = vadd.f32 %v3829, %v4093
        %v4188 = vadd.f32 %v3830, %v4098
        %v4189 = vadd.f32 %v3831, %v4101
        %v4190 = vadd.f32 %v3832, %v4106
        %v4191 = vadd.f32 %v3833, %v4109
        %v4192 = vadd.f32 %v3834, %v4114
        %v4193 = vadd.f32 %v3835, %v4117
        %v4194 = vadd.f32 %v3836, %v4122
        %v4195 = vadd.f32 %v3837, %v4125
        %v4196 = vadd.f32 %v3838, %v4130
        %v4197 = vadd.f32 %v3839, %v4133
        %v4198 = vadd.f32 %v3840, %v4138
        %v4199 = vadd.f32 %v3841, %v4141
        %v4200 = vadd.f32 %v3842, %v4146
        %v4201 = vadd.f32 %v3843, %v4149
        %v4202 = vadd.f32 %v3844, %v4154
        %v4203 = vadd.f32 %v3845, %v4157
        %v4204 = vadd.f32 %v3846, %v4162
        %v4205 = vadd.f32 %v3847, %v4165
        %v4206 = vadd.f32 %v3848, %v4170
        %v4207 = vadd.f32 %v3849, %v4173
        %v4208 = vld [vmem:[%s3850] sm:$0xf]
        %v4209 = vld [vmem:[%s3850 + $0x4] sm:$0xf]
        %v4210 = vld [vmem:[%s3850 + $0x8] sm:$0x1]
        %v4211 = vld [vmem:[%s3850 + $0xc] sm:$0xf]
        %v4212 = vld [vmem:[%s3850 + $0x10] sm:$0xf]
        %v4213 = vld [vmem:[%s3850 + $0x14] sm:$0x1]
        %v4214 = vld [vmem:[%s3850 + $0x18] sm:$0xf]
        %v4215 = vld [vmem:[%s3850 + $0x1c] sm:$0xf]
        %v4216 = vld [vmem:[%s3850 + $0x20] sm:$0x1]
        %v4217 = vld [vmem:[%s3850 + $0x24] sm:$0xf]
        %v4218 = vld [vmem:[%s3850 + $0x28] sm:$0xf]
        %v4219 = vld [vmem:[%s3850 + $0x2c] sm:$0x1]
        %v4220 = vld [vmem:[%s3850 + $0x30] sm:$0xf]
        %v4221 = vld [vmem:[%s3850 + $0x34] sm:$0xf]
        %v4222 = vld [vmem:[%s3850 + $0x38] sm:$0x1]
        %v4223 = vld [vmem:[%s3850 + $0x3c] sm:$0xf]
        %v4224 = vld [vmem:[%s3850 + $0x40] sm:$0xf]
        %v4225 = vld [vmem:[%s3850 + $0x44] sm:$0x1]
        %v4226 = vld [vmem:[%s3850 + $0x48] sm:$0xf]
        %v4227 = vld [vmem:[%s3850 + $0x4c] sm:$0xf]
        %v4228 = vld [vmem:[%s3850 + $0x50] sm:$0x1]
        %v4229 = vld [vmem:[%s3850 + $0x54] sm:$0xf]
        %v4230 = vld [vmem:[%s3850 + $0x58] sm:$0xf]
        %v4231 = vld [vmem:[%s3850 + $0x5c] sm:$0x1]
        %v4232 = vld [vmem:[%s3850 + $0x60] sm:$0xf]
        %v4233 = vld [vmem:[%s3850 + $0x64] sm:$0xf]
        %v4234 = vld [vmem:[%s3850 + $0x68] sm:$0x1]
        %v4235 = vld [vmem:[%s3850 + $0x6c] sm:$0xf]
        %v4236 = vld [vmem:[%s3850 + $0x70] sm:$0xf]
        %v4237 = vld [vmem:[%s3850 + $0x74] sm:$0x1]
        %v4238 = vld [vmem:[%s3850 + $0x78] sm:$0xf]
        %v4239 = vld [vmem:[%s3850 + $0x7c] sm:$0xf]
        %v4240 = vld [vmem:[%s3850 + $0x80] sm:$0x1]
        %v4241 = vld [vmem:[%s3850 + $0x84] sm:$0xf]
        %v4242 = vld [vmem:[%s3850 + $0x88] sm:$0xf]
        %v4243 = vld [vmem:[%s3850 + $0x8c] sm:$0x1]
        %v4244 = vld [vmem:[%s3850 + $0x90] sm:$0xf]
        %v4245 = vld [vmem:[%s3850 + $0x94] sm:$0xf]
        %v4246 = vld [vmem:[%s3850 + $0x98] sm:$0x1]
        %v4247 = vld [vmem:[%s3850 + $0x9c] sm:$0xf]
        %v4248 = vld [vmem:[%s3850 + $0xa0] sm:$0xf]
        %v4249 = vld [vmem:[%s3850 + $0xa4] sm:$0x1]
        %v4250 = vld [vmem:[%s3850 + $0xa8] sm:$0xf]
        %v4251 = vld [vmem:[%s3850 + $0xac] sm:$0xf]
        %v4252 = vld [vmem:[%s3850 + $0xb0] sm:$0x1]
        %v4253 = vld [vmem:[%s3850 + $0xb4] sm:$0xf]
        %v4254 = vld [vmem:[%s3850 + $0xb8] sm:$0xf]
        %v4255 = vld [vmem:[%s3850 + $0xbc] sm:$0x1]
        %v4257 = vshrl.u32 %v4208, 16
        %v4259 = vrot.slane %v4257, 4
        %v4260 = vshll.u32 %v4208, 16
        %v4262 = vrot.slane %v4260, 5
        %v4263 = vor.u32 %v4259, %v4262
        %v4264 = vrot.slane %v4263, 4
        %v4266 = vshll.u32 %v4209, 16
        %v4268 = vrot.slane %v4266, 5
        %v4269 = vsel %vm891, %v4264, %v4268
        %v4270 = vshrl.u32 %v4209, 16
        %v4272 = vrot.slane %v4270, 4
        %v4273 = vor.u32 %v4272, %v4268
        %v4274 = vrot.slane %v4273, 4
        %v4276 = vshll.u32 %v4210, 16
        %v4278 = vrot.slane %v4276, 5
        %v4279 = vsel %vm891, %v4274, %v4278
        %v4281 = vshrl.u32 %v4211, 16
        %v4283 = vrot.slane %v4281, 4
        %v4284 = vshll.u32 %v4211, 16
        %v4286 = vrot.slane %v4284, 5
        %v4287 = vor.u32 %v4283, %v4286
        %v4288 = vrot.slane %v4287, 4
        %v4290 = vshll.u32 %v4212, 16
        %v4292 = vrot.slane %v4290, 5
        %v4293 = vsel %vm891, %v4288, %v4292
        %v4294 = vshrl.u32 %v4212, 16
        %v4296 = vrot.slane %v4294, 4
        %v4297 = vor.u32 %v4296, %v4292
        %v4298 = vrot.slane %v4297, 4
        %v4300 = vshll.u32 %v4213, 16
        %v4302 = vrot.slane %v4300, 5
        %v4303 = vsel %vm891, %v4298, %v4302
        %v4305 = vshrl.u32 %v4214, 16
        %v4307 = vrot.slane %v4305, 4
        %v4308 = vshll.u32 %v4214, 16
        %v4310 = vrot.slane %v4308, 5
        %v4311 = vor.u32 %v4307, %v4310
        %v4312 = vrot.slane %v4311, 4
        %v4314 = vshll.u32 %v4215, 16
        %v4316 = vrot.slane %v4314, 5
        %v4317 = vsel %vm891, %v4312, %v4316
        %v4318 = vshrl.u32 %v4215, 16
        %v4320 = vrot.slane %v4318, 4
        %v4321 = vor.u32 %v4320, %v4316
        %v4322 = vrot.slane %v4321, 4
        %v4324 = vshll.u32 %v4216, 16
        %v4326 = vrot.slane %v4324, 5
        %v4327 = vsel %vm891, %v4322, %v4326
        %v4329 = vshrl.u32 %v4217, 16
        %v4331 = vrot.slane %v4329, 4
        %v4332 = vshll.u32 %v4217, 16
        %v4334 = vrot.slane %v4332, 5
        %v4335 = vor.u32 %v4331, %v4334
        %v4336 = vrot.slane %v4335, 4
        %v4338 = vshll.u32 %v4218, 16
        %v4340 = vrot.slane %v4338, 5
        %v4341 = vsel %vm891, %v4336, %v4340
        %v4342 = vshrl.u32 %v4218, 16
        %v4344 = vrot.slane %v4342, 4
        %v4345 = vor.u32 %v4344, %v4340
        %v4346 = vrot.slane %v4345, 4
        %v4348 = vshll.u32 %v4219, 16
        %v4350 = vrot.slane %v4348, 5
        %v4351 = vsel %vm891, %v4346, %v4350
        %v4353 = vshrl.u32 %v4220, 16
        %v4355 = vrot.slane %v4353, 4
        %v4356 = vshll.u32 %v4220, 16
        %v4358 = vrot.slane %v4356, 5
        %v4359 = vor.u32 %v4355, %v4358
        %v4360 = vrot.slane %v4359, 4
        %v4362 = vshll.u32 %v4221, 16
        %v4364 = vrot.slane %v4362, 5
        %v4365 = vsel %vm891, %v4360, %v4364
        %v4366 = vshrl.u32 %v4221, 16
        %v4368 = vrot.slane %v4366, 4
        %v4369 = vor.u32 %v4368, %v4364
        %v4370 = vrot.slane %v4369, 4
        %v4372 = vshll.u32 %v4222, 16
        %v4374 = vrot.slane %v4372, 5
        %v4375 = vsel %vm891, %v4370, %v4374
        %v4377 = vshrl.u32 %v4223, 16
        %v4379 = vrot.slane %v4377, 4
        %v4380 = vshll.u32 %v4223, 16
        %v4382 = vrot.slane %v4380, 5
        %v4383 = vor.u32 %v4379, %v4382
        %v4384 = vrot.slane %v4383, 4
        %v4386 = vshll.u32 %v4224, 16
        %v4388 = vrot.slane %v4386, 5
        %v4389 = vsel %vm891, %v4384, %v4388
        %v4390 = vshrl.u32 %v4224, 16
        %v4392 = vrot.slane %v4390, 4
        %v4393 = vor.u32 %v4392, %v4388
        %v4394 = vrot.slane %v4393, 4
        %v4396 = vshll.u32 %v4225, 16
        %v4398 = vrot.slane %v4396, 5
        %v4399 = vsel %vm891, %v4394, %v4398
        %v4401 = vshrl.u32 %v4226, 16
        %v4403 = vrot.slane %v4401, 4
        %v4404 = vshll.u32 %v4226, 16
        %v4406 = vrot.slane %v4404, 5
        %v4407 = vor.u32 %v4403, %v4406
        %v4408 = vrot.slane %v4407, 4
        %v4410 = vshll.u32 %v4227, 16
        %v4412 = vrot.slane %v4410, 5
        %v4413 = vsel %vm891, %v4408, %v4412
        %v4414 = vshrl.u32 %v4227, 16
        %v4416 = vrot.slane %v4414, 4
        %v4417 = vor.u32 %v4416, %v4412
        %v4418 = vrot.slane %v4417, 4
        %v4420 = vshll.u32 %v4228, 16
        %v4422 = vrot.slane %v4420, 5
        %v4423 = vsel %vm891, %v4418, %v4422
        %v4425 = vshrl.u32 %v4229, 16
        %v4427 = vrot.slane %v4425, 4
        %v4428 = vshll.u32 %v4229, 16
        %v4430 = vrot.slane %v4428, 5
        %v4431 = vor.u32 %v4427, %v4430
        %v4432 = vrot.slane %v4431, 4
        %v4434 = vshll.u32 %v4230, 16
        %v4436 = vrot.slane %v4434, 5
        %v4437 = vsel %vm891, %v4432, %v4436
        %v4438 = vshrl.u32 %v4230, 16
        %v4440 = vrot.slane %v4438, 4
        %v4441 = vor.u32 %v4440, %v4436
        %v4442 = vrot.slane %v4441, 4
        %v4444 = vshll.u32 %v4231, 16
        %v4446 = vrot.slane %v4444, 5
        %v4447 = vsel %vm891, %v4442, %v4446
        %v4449 = vshrl.u32 %v4232, 16
        %v4451 = vrot.slane %v4449, 4
        %v4452 = vshll.u32 %v4232, 16
        %v4454 = vrot.slane %v4452, 5
        %v4455 = vor.u32 %v4451, %v4454
        %v4456 = vrot.slane %v4455, 4
        %v4458 = vshll.u32 %v4233, 16
        %v4460 = vrot.slane %v4458, 5
        %v4461 = vsel %vm891, %v4456, %v4460
        %v4462 = vshrl.u32 %v4233, 16
        %v4464 = vrot.slane %v4462, 4
        %v4465 = vor.u32 %v4464, %v4460
        %v4466 = vrot.slane %v4465, 4
        %v4468 = vshll.u32 %v4234, 16
        %v4470 = vrot.slane %v4468, 5
        %v4471 = vsel %vm891, %v4466, %v4470
        %v4473 = vshrl.u32 %v4235, 16
        %v4475 = vrot.slane %v4473, 4
        %v4476 = vshll.u32 %v4235, 16
        %v4478 = vrot.slane %v4476, 5
        %v4479 = vor.u32 %v4475, %v4478
        %v4480 = vrot.slane %v4479, 4
        %v4482 = vshll.u32 %v4236, 16
        %v4484 = vrot.slane %v4482, 5
        %v4485 = vsel %vm891, %v4480, %v4484
        %v4486 = vshrl.u32 %v4236, 16
        %v4488 = vrot.slane %v4486, 4
        %v4489 = vor.u32 %v4488, %v4484
        %v4490 = vrot.slane %v4489, 4
        %v4492 = vshll.u32 %v4237, 16
        %v4494 = vrot.slane %v4492, 5
        %v4495 = vsel %vm891, %v4490, %v4494
        %v4497 = vshrl.u32 %v4238, 16
        %v4499 = vrot.slane %v4497, 4
        %v4500 = vshll.u32 %v4238, 16
        %v4502 = vrot.slane %v4500, 5
        %v4503 = vor.u32 %v4499, %v4502
        %v4504 = vrot.slane %v4503, 4
        %v4506 = vshll.u32 %v4239, 16
        %v4508 = vrot.slane %v4506, 5
        %v4509 = vsel %vm891, %v4504, %v4508
        %v4510 = vshrl.u32 %v4239, 16
        %v4512 = vrot.slane %v4510, 4
        %v4513 = vor.u32 %v4512, %v4508
        %v4514 = vrot.slane %v4513, 4
        %v4516 = vshll.u32 %v4240, 16
        %v4518 = vrot.slane %v4516, 5
        %v4519 = vsel %vm891, %v4514, %v4518
        %v4521 = vshrl.u32 %v4241, 16
        %v4523 = vrot.slane %v4521, 4
        %v4524 = vshll.u32 %v4241, 16
        %v4526 = vrot.slane %v4524, 5
        %v4527 = vor.u32 %v4523, %v4526
        %v4528 = vrot.slane %v4527, 4
        %v4530 = vshll.u32 %v4242, 16
        %v4532 = vrot.slane %v4530, 5
        %v4533 = vsel %vm891, %v4528, %v4532
        %v4534 = vshrl.u32 %v4242, 16
        %v4536 = vrot.slane %v4534, 4
        %v4537 = vor.u32 %v4536, %v4532
        %v4538 = vrot.slane %v4537, 4
        %v4540 = vshll.u32 %v4243, 16
        %v4542 = vrot.slane %v4540, 5
        %v4543 = vsel %vm891, %v4538, %v4542
        %v4545 = vshrl.u32 %v4244, 16
        %v4547 = vrot.slane %v4545, 4
        %v4548 = vshll.u32 %v4244, 16
        %v4550 = vrot.slane %v4548, 5
        %v4551 = vor.u32 %v4547, %v4550
        %v4552 = vrot.slane %v4551, 4
        %v4554 = vshll.u32 %v4245, 16
        %v4556 = vrot.slane %v4554, 5
        %v4557 = vsel %vm891, %v4552, %v4556
        %v4558 = vshrl.u32 %v4245, 16
        %v4560 = vrot.slane %v4558, 4
        %v4561 = vor.u32 %v4560, %v4556
        %v4562 = vrot.slane %v4561, 4
        %v4564 = vshll.u32 %v4246, 16
        %v4566 = vrot.slane %v4564, 5
        %v4567 = vsel %vm891, %v4562, %v4566
        %v4569 = vshrl.u32 %v4247, 16
        %v4571 = vrot.slane %v4569, 4
        %v4572 = vshll.u32 %v4247, 16
        %v4574 = vrot.slane %v4572, 5
        %v4575 = vor.u32 %v4571, %v4574
        %v4576 = vrot.slane %v4575, 4
        %v4578 = vshll.u32 %v4248, 16
        %v4580 = vrot.slane %v4578, 5
        %v4581 = vsel %vm891, %v4576, %v4580
        %v4582 = vshrl.u32 %v4248, 16
        %v4584 = vrot.slane %v4582, 4
        %v4585 = vor.u32 %v4584, %v4580
        %v4586 = vrot.slane %v4585, 4
        %v4588 = vshll.u32 %v4249, 16
        %v4590 = vrot.slane %v4588, 5
        %v4591 = vsel %vm891, %v4586, %v4590
        %v4593 = vshrl.u32 %v4250, 16
        %v4595 = vrot.slane %v4593, 4
        %v4596 = vshll.u32 %v4250, 16
        %v4598 = vrot.slane %v4596, 5
        %v4599 = vor.u32 %v4595, %v4598
        %v4600 = vrot.slane %v4599, 4
        %v4602 = vshll.u32 %v4251, 16
        %v4604 = vrot.slane %v4602, 5
        %v4605 = vsel %vm891, %v4600, %v4604
        %v4606 = vshrl.u32 %v4251, 16
        %v4608 = vrot.slane %v4606, 4
        %v4609 = vor.u32 %v4608, %v4604
        %v4610 = vrot.slane %v4609, 4
        %v4612 = vshll.u32 %v4252, 16
        %v4614 = vrot.slane %v4612, 5
        %v4615 = vsel %vm891, %v4610, %v4614
        %v4617 = vshrl.u32 %v4253, 16
        %v4619 = vrot.slane %v4617, 4
        %v4620 = vshll.u32 %v4253, 16
        %v4622 = vrot.slane %v4620, 5
        %v4623 = vor.u32 %v4619, %v4622
        %v4624 = vrot.slane %v4623, 4
        %v4626 = vshll.u32 %v4254, 16
        %v4628 = vrot.slane %v4626, 5
        %v4629 = vsel %vm891, %v4624, %v4628
        %v4630 = vshrl.u32 %v4254, 16
        %v4632 = vrot.slane %v4630, 4
        %v4633 = vor.u32 %v4632, %v4628
        %v4634 = vrot.slane %v4633, 4
        %v4636 = vshll.u32 %v4255, 16
        %v4638 = vrot.slane %v4636, 5
        %v4639 = vsel %vm891, %v4634, %v4638
        %v4640 = vld [vmem:[%s1 + $0xc] sm:$0xc]
        %v4641 = vunpack.c.l.b16 %v4269
        %v4642 = vunpack.c.l.b16 %v4279
        %v4643 = vunpack.c.l.b16 %v4293
        %v4644 = vunpack.c.l.b16 %v4303
        %v4645 = vunpack.c.l.b16 %v4317
        %v4646 = vunpack.c.l.b16 %v4327
        %v4647 = vunpack.c.l.b16 %v4341
        %v4648 = vunpack.c.l.b16 %v4351
        %v4649 = vunpack.c.l.b16 %v4365
        %v4650 = vunpack.c.l.b16 %v4375
        %v4651 = vunpack.c.l.b16 %v4389
        %v4652 = vunpack.c.l.b16 %v4399
        %v4653 = vunpack.c.l.b16 %v4413
        %v4654 = vunpack.c.l.b16 %v4423
        %v4655 = vunpack.c.l.b16 %v4437
        %v4656 = vunpack.c.l.b16 %v4447
        %v4657 = vunpack.c.l.b16 %v4461
        %v4658 = vunpack.c.l.b16 %v4471
        %v4659 = vunpack.c.l.b16 %v4485
        %v4660 = vunpack.c.l.b16 %v4495
        %v4661 = vunpack.c.l.b16 %v4509
        %v4662 = vunpack.c.l.b16 %v4519
        %v4663 = vunpack.c.l.b16 %v4533
        %v4664 = vunpack.c.l.b16 %v4543
        %v4665 = vunpack.c.l.b16 %v4557
        %v4666 = vunpack.c.l.b16 %v4567
        %v4667 = vunpack.c.l.b16 %v4581
        %v4668 = vunpack.c.l.b16 %v4591
        %v4669 = vunpack.c.l.b16 %v4605
        %v4670 = vunpack.c.l.b16 %v4615
        %v4671 = vunpack.c.l.b16 %v4629
        %v4672 = vunpack.c.l.b16 %v4639
        %v4673 = vpack.c.b16 %v4642, %v4641
        %v4674 = vpack.c.b16 %v4644, %v4643
        %v4675 = vpack.c.b16 %v4646, %v4645
        %v4676 = vpack.c.b16 %v4648, %v4647
        %v4677 = vpack.c.b16 %v4650, %v4649
        %v4678 = vpack.c.b16 %v4652, %v4651
        %v4679 = vpack.c.b16 %v4654, %v4653
        %v4680 = vpack.c.b16 %v4656, %v4655
        %v4681 = vpack.c.b16 %v4658, %v4657
        %v4682 = vpack.c.b16 %v4660, %v4659
        %v4683 = vpack.c.b16 %v4662, %v4661
        %v4684 = vpack.c.b16 %v4664, %v4663
        %v4685 = vpack.c.b16 %v4666, %v4665
        %v4686 = vpack.c.b16 %v4668, %v4667
        %v4687 = vpack.c.b16 %v4670, %v4669
        %v4688 = vpack.c.b16 %v4672, %v4671
        %v4690 = vunpack.c.l.b16 %v4640
        %v4691 = vpack.c.b16 %v4690, %v4690
        %v4692 = vrot.slane %v4691, 2
        %v4694 = vsel %vm1329, %v4673, 0
        %v4697 = vsel %vm1329, %v4674, 0
        %v4700 = vsel %vm1329, %v4675, 0
        %v4703 = vsel %vm1329, %v4676, 0
        %v4706 = vsel %vm1329, %v4677, 0
        %v4709 = vsel %vm1329, %v4678, 0
        %v4712 = vsel %vm1329, %v4679, 0
        %v4715 = vsel %vm1329, %v4680, 0
        %v4718 = vsel %vm1329, %v4681, 0
        %v4721 = vsel %vm1329, %v4682, 0
        %v4724 = vsel %vm1329, %v4683, 0
        %v4727 = vsel %vm1329, %v4684, 0
        %v4730 = vsel %vm1329, %v4685, 0
        %v4733 = vsel %vm1329, %v4686, 0
        %v4736 = vsel %vm1329, %v4687, 0
        %v4739 = vsel %vm1329, %v4688, 0
        %v4742 = vsel %vm1378, %v4692, 0
        %4744 = vmatprep.subr.bf16.mxu0 0
        %4745 = vmatpush1.bf16.msra.mxu0 0
        %4746 = vmatprep.subr.bf16.mxu0 0
        %4747 = vmatpush1.bf16.msra.mxu0 0
        %4748 = vmatprep.subr.bf16.mxu0 0
        %4749 = vmatpush1.bf16.msra.mxu0 0
        %4750 = vmatprep.subr.bf16.mxu0 0
        %4751 = vmatpush1.bf16.msra.mxu0 0
        %4752 = vmatprep.subr.bf16.mxu0 0
        %4753 = vmatpush1.bf16.msra.mxu0 0
        %4754 = vmatprep.subr.bf16.mxu0 0
        %4755 = vmatpush1.bf16.msra.mxu0 0
        %4756 = vmatprep.subr.bf16.mxu0 0
        %4757 = vmatpush1.bf16.msra.mxu0 0
        %4758 = vmatprep.subr.bf16.mxu0 0
        %4759 = vmatpush1.bf16.msra.mxu0 %v4742
        %4760 = vmatprep.subr.bf16.mxu0 0
        %4761 = vmatpush2.bf16.msra.mxu0 0
        %4762 = vmatprep.subr.bf16.mxu0 0
        %4763 = vmatpush2.bf16.msra.mxu0 0
        %4764 = vmatprep.subr.bf16.mxu0 0
        %4765 = vmatpush2.bf16.msra.mxu0 0
        %4766 = vmatprep.subr.bf16.mxu0 0
        %4767 = vmatpush2.bf16.msra.mxu0 0
        %4768 = vmatprep.subr.bf16.mxu0 0
        %4769 = vmatpush2.bf16.msra.mxu0 0
        %4770 = vmatprep.subr.bf16.mxu0 0
        %4771 = vmatpush2.bf16.msra.mxu0 0
        %4772 = vmatprep.subr.bf16.mxu0 0
        %4773 = vmatpush2.bf16.msra.mxu0 0
        %4774 = vmatprep.subr.bf16.mxu0 0
        %4775 = vmatpush2.bf16.msra.mxu0 0
        %4776 = vmatprep.mubr.bf16.mxu0 0
        %4777 = vmatmul.mubr.bf16.gmra.mxu0 %v4694
        %v4778 = vpop.f32.mrf.mxu0
        %v4779 = vadd.f32 0.0, %v4778
        %v4780 = vpop.f32.mrf.mxu0
        %v4781 = vpop.f32.mrf.mxu0
        %v4782 = vadd.f32 0.0, %v4781
        %v4783 = vpop.f32.mrf.mxu0
        %4784 = vmatprep.mubr.bf16.mxu0 0
        %4785 = vmatmul.mubr.bf16.gmra.mxu0 %v4697
        %v4786 = vpop.f32.mrf.mxu0
        %v4787 = vadd.f32 0.0, %v4786
        %v4788 = vpop.f32.mrf.mxu0
        %v4789 = vpop.f32.mrf.mxu0
        %v4790 = vadd.f32 0.0, %v4789
        %v4791 = vpop.f32.mrf.mxu0
        %4792 = vmatprep.mubr.bf16.mxu0 0
        %4793 = vmatmul.mubr.bf16.gmra.mxu0 %v4700
        %v4794 = vpop.f32.mrf.mxu0
        %v4795 = vadd.f32 0.0, %v4794
        %v4796 = vpop.f32.mrf.mxu0
        %v4797 = vpop.f32.mrf.mxu0
        %v4798 = vadd.f32 0.0, %v4797
        %v4799 = vpop.f32.mrf.mxu0
        %4800 = vmatprep.mubr.bf16.mxu0 0
        %4801 = vmatmul.mubr.bf16.gmra.mxu0 %v4703
        %v4802 = vpop.f32.mrf.mxu0
        %v4803 = vadd.f32 0.0, %v4802
        %v4804 = vpop.f32.mrf.mxu0
        %v4805 = vpop.f32.mrf.mxu0
        %v4806 = vadd.f32 0.0, %v4805
        %v4807 = vpop.f32.mrf.mxu0
        %4808 = vmatprep.mubr.bf16.mxu0 0
        %4809 = vmatmul.mubr.bf16.gmra.mxu0 %v4706
        %v4810 = vpop.f32.mrf.mxu0
        %v4811 = vadd.f32 0.0, %v4810
        %v4812 = vpop.f32.mrf.mxu0
        %v4813 = vpop.f32.mrf.mxu0
        %v4814 = vadd.f32 0.0, %v4813
        %v4815 = vpop.f32.mrf.mxu0
        %4816 = vmatprep.mubr.bf16.mxu0 0
        %4817 = vmatmul.mubr.bf16.gmra.mxu0 %v4709
        %v4818 = vpop.f32.mrf.mxu0
        %v4819 = vadd.f32 0.0, %v4818
        %v4820 = vpop.f32.mrf.mxu0
        %v4821 = vpop.f32.mrf.mxu0
        %v4822 = vadd.f32 0.0, %v4821
        %v4823 = vpop.f32.mrf.mxu0
        %4824 = vmatprep.mubr.bf16.mxu0 0
        %4825 = vmatmul.mubr.bf16.gmra.mxu0 %v4712
        %v4826 = vpop.f32.mrf.mxu0
        %v4827 = vadd.f32 0.0, %v4826
        %v4828 = vpop.f32.mrf.mxu0
        %v4829 = vpop.f32.mrf.mxu0
        %v4830 = vadd.f32 0.0, %v4829
        %v4831 = vpop.f32.mrf.mxu0
        %4832 = vmatprep.mubr.bf16.mxu0 0
        %4833 = vmatmul.mubr.bf16.gmra.mxu0 %v4715
        %v4834 = vpop.f32.mrf.mxu0
        %v4835 = vadd.f32 0.0, %v4834
        %v4836 = vpop.f32.mrf.mxu0
        %v4837 = vpop.f32.mrf.mxu0
        %v4838 = vadd.f32 0.0, %v4837
        %v4839 = vpop.f32.mrf.mxu0
        %4840 = vmatprep.mubr.bf16.mxu0 0
        %4841 = vmatmul.mubr.bf16.gmra.mxu0 %v4718
        %v4842 = vpop.f32.mrf.mxu0
        %v4843 = vadd.f32 0.0, %v4842
        %v4844 = vpop.f32.mrf.mxu0
        %v4845 = vpop.f32.mrf.mxu0
        %v4846 = vadd.f32 0.0, %v4845
        %v4847 = vpop.f32.mrf.mxu0
        %4848 = vmatprep.mubr.bf16.mxu0 0
        %4849 = vmatmul.mubr.bf16.gmra.mxu0 %v4721
        %v4850 = vpop.f32.mrf.mxu0
        %v4851 = vadd.f32 0.0, %v4850
        %v4852 = vpop.f32.mrf.mxu0
        %v4853 = vpop.f32.mrf.mxu0
        %v4854 = vadd.f32 0.0, %v4853
        %v4855 = vpop.f32.mrf.mxu0
        %4856 = vmatprep.mubr.bf16.mxu0 0
        %4857 = vmatmul.mubr.bf16.gmra.mxu0 %v4724
        %v4858 = vpop.f32.mrf.mxu0
        %v4859 = vadd.f32 0.0, %v4858
        %v4860 = vpop.f32.mrf.mxu0
        %v4861 = vpop.f32.mrf.mxu0
        %v4862 = vadd.f32 0.0, %v4861
        %v4863 = vpop.f32.mrf.mxu0
        %4864 = vmatprep.mubr.bf16.mxu0 0
        %4865 = vmatmul.mubr.bf16.gmra.mxu0 %v4727
        %v4866 = vpop.f32.mrf.mxu0
        %v4867 = vadd.f32 0.0, %v4866
        %v4868 = vpop.f32.mrf.mxu0
        %v4869 = vpop.f32.mrf.mxu0
        %v4870 = vadd.f32 0.0, %v4869
        %v4871 = vpop.f32.mrf.mxu0
        %4872 = vmatprep.mubr.bf16.mxu0 0
        %4873 = vmatmul.mubr.bf16.gmra.mxu0 %v4730
        %v4874 = vpop.f32.mrf.mxu0
        %v4875 = vadd.f32 0.0, %v4874
        %v4876 = vpop.f32.mrf.mxu0
        %v4877 = vpop.f32.mrf.mxu0
        %v4878 = vadd.f32 0.0, %v4877
        %v4879 = vpop.f32.mrf.mxu0
        %4880 = vmatprep.mubr.bf16.mxu0 0
        %4881 = vmatmul.mubr.bf16.gmra.mxu0 %v4733
        %v4882 = vpop.f32.mrf.mxu0
        %v4883 = vadd.f32 0.0, %v4882
        %v4884 = vpop.f32.mrf.mxu0
        %v4885 = vpop.f32.mrf.mxu0
        %v4886 = vadd.f32 0.0, %v4885
        %v4887 = vpop.f32.mrf.mxu0
        %4888 = vmatprep.mubr.bf16.mxu0 0
        %4889 = vmatmul.mubr.bf16.gmra.mxu0 %v4736
        %v4890 = vpop.f32.mrf.mxu0
        %v4891 = vadd.f32 0.0, %v4890
        %v4892 = vpop.f32.mrf.mxu0
        %v4893 = vpop.f32.mrf.mxu0
        %v4894 = vadd.f32 0.0, %v4893
        %v4895 = vpop.f32.mrf.mxu0
        %4896 = vmatprep.mubr.bf16.mxu0 0
        %4897 = vmatmul.mubr.bf16.gmra.mxu0 %v4739
        %v4898 = vpop.f32.mrf.mxu0
        %v4899 = vadd.f32 0.0, %v4898
        %v4900 = vpop.f32.mrf.mxu0
        %v4901 = vpop.f32.mrf.mxu0
        %v4902 = vadd.f32 0.0, %v4901
        %v4903 = vpop.f32.mrf.mxu0
        %4904 = vdwg.mxu0
        %v4905 = vadd.f32 %v4176, %v4779
        %v4906 = vadd.f32 %v4177, %v4782
        %v4907 = vadd.f32 %v4178, %v4787
        %v4908 = vadd.f32 %v4179, %v4790
        %v4909 = vadd.f32 %v4180, %v4795
        %v4910 = vadd.f32 %v4181, %v4798
        %v4911 = vadd.f32 %v4182, %v4803
        %v4912 = vadd.f32 %v4183, %v4806
        %v4913 = vadd.f32 %v4184, %v4811
        %v4914 = vadd.f32 %v4185, %v4814
        %v4915 = vadd.f32 %v4186, %v4819
        %v4916 = vadd.f32 %v4187, %v4822
        %v4917 = vadd.f32 %v4188, %v4827
        %v4918 = vadd.f32 %v4189, %v4830
        %v4919 = vadd.f32 %v4190, %v4835
        %v4920 = vadd.f32 %v4191, %v4838
        %v4921 = vadd.f32 %v4192, %v4843
        %v4922 = vadd.f32 %v4193, %v4846
        %v4923 = vadd.f32 %v4194, %v4851
        %v4924 = vadd.f32 %v4195, %v4854
        %v4925 = vadd.f32 %v4196, %v4859
        %v4926 = vadd.f32 %v4197, %v4862
        %v4927 = vadd.f32 %v4198, %v4867
        %v4928 = vadd.f32 %v4199, %v4870
        %v4929 = vadd.f32 %v4200, %v4875
        %v4930 = vadd.f32 %v4201, %v4878
        %v4931 = vadd.f32 %v4202, %v4883
        %v4932 = vadd.f32 %v4203, %v4886
        %v4933 = vadd.f32 %v4204, %v4891
        %v4934 = vadd.f32 %v4205, %v4894
        %v4935 = vadd.f32 %v4206, %v4899
        %v4936 = vadd.f32 %v4207, %v4902
        %v4937 = vld [vmem:[%s3850] sm:$0xe]
        %v4938 = vld [vmem:[%s3850 + $0xc] sm:$0xe]
        %v4939 = vld [vmem:[%s3850 + $0x18] sm:$0xe]
        %v4940 = vld [vmem:[%s3850 + $0x24] sm:$0xe]
        %v4941 = vld [vmem:[%s3850 + $0x30] sm:$0xe]
        %v4942 = vld [vmem:[%s3850 + $0x3c] sm:$0xe]
        %v4943 = vld [vmem:[%s3850 + $0x48] sm:$0xe]
        %v4944 = vld [vmem:[%s3850 + $0x54] sm:$0xe]
        %v4945 = vld [vmem:[%s3850 + $0x60] sm:$0xe]
        %v4946 = vld [vmem:[%s3850 + $0x6c] sm:$0xe]
        %v4947 = vld [vmem:[%s3850 + $0x78] sm:$0xe]
        %v4948 = vld [vmem:[%s3850 + $0x84] sm:$0xe]
        %v4949 = vld [vmem:[%s3850 + $0x90] sm:$0xe]
        %v4950 = vld [vmem:[%s3850 + $0x9c] sm:$0xe]
        %v4951 = vld [vmem:[%s3850 + $0xa8] sm:$0xe]
        %v4952 = vld [vmem:[%s3850 + $0xb4] sm:$0xe]
        %v5001 = vrot.slane %v4937, 5
        %v5002 = vrot.slane %v5001, 4
        %v5003 = vrot.slane %v4209, 5
        %v5004 = vsel %vm1885, %v5002, %v5003
        %v5005 = vrot.slane %v5003, 4
        %v5006 = vrot.slane %v4210, 5
        %v5007 = vsel %vm1885, %v5005, %v5006
        %v5008 = vrot.slane %v4938, 5
        %v5009 = vrot.slane %v5008, 4
        %v5010 = vrot.slane %v4212, 5
        %v5011 = vsel %vm1885, %v5009, %v5010
        %v5012 = vrot.slane %v5010, 4
        %v5013 = vrot.slane %v4213, 5
        %v5014 = vsel %vm1885, %v5012, %v5013
        %v5015 = vrot.slane %v4939, 5
        %v5016 = vrot.slane %v5015, 4
        %v5017 = vrot.slane %v4215, 5
        %v5018 = vsel %vm1885, %v5016, %v5017
        %v5019 = vrot.slane %v5017, 4
        %v5020 = vrot.slane %v4216, 5
        %v5021 = vsel %vm1885, %v5019, %v5020
        %v5022 = vrot.slane %v4940, 5
        %v5023 = vrot.slane %v5022, 4
        %v5024 = vrot.slane %v4218, 5
        %v5025 = vsel %vm1885, %v5023, %v5024
        %v5026 = vrot.slane %v5024, 4
        %v5027 = vrot.slane %v4219, 5
        %v5028 = vsel %vm1885, %v5026, %v5027
        %v5029 = vrot.slane %v4941, 5
        %v5030 = vrot.slane %v5029, 4
        %v5031 = vrot.slane %v4221, 5
        %v5032 = vsel %vm1885, %v5030, %v5031
        %v5033 = vrot.slane %v5031, 4
        %v5034 = vrot.slane %v4222, 5
        %v5035 = vsel %vm1885, %v5033, %v5034
        %v5036 = vrot.slane %v4942, 5
        %v5037 = vrot.slane %v5036, 4
        %v5038 = vrot.slane %v4224, 5
        %v5039 = vsel %vm1885, %v5037, %v5038
        %v5040 = vrot.slane %v5038, 4
        %v5041 = vrot.slane %v4225, 5
        %v5042 = vsel %vm1885, %v5040, %v5041
        %v5043 = vrot.slane %v4943, 5
        %v5044 = vrot.slane %v5043, 4
        %v5045 = vrot.slane %v4227, 5
        %v5046 = vsel %vm1885, %v5044, %v5045
        %v5047 = vrot.slane %v5045, 4
        %v5048 = vrot.slane %v4228, 5
        %v5049 = vsel %vm1885, %v5047, %v5048
        %v5050 = vrot.slane %v4944, 5
        %v5051 = vrot.slane %v5050, 4
        %v5052 = vrot.slane %v4230, 5
        %v5053 = vsel %vm1885, %v5051, %v5052
        %v5054 = vrot.slane %v5052, 4
        %v5055 = vrot.slane %v4231, 5
        %v5056 = vsel %vm1885, %v5054, %v5055
        %v5057 = vrot.slane %v4945, 5
        %v5058 = vrot.slane %v5057, 4
        %v5059 = vrot.slane %v4233, 5
        %v5060 = vsel %vm1885, %v5058, %v5059
        %v5061 = vrot.slane %v5059, 4
        %v5062 = vrot.slane %v4234, 5
        %v5063 = vsel %vm1885, %v5061, %v5062
        %v5064 = vrot.slane %v4946, 5
        %v5065 = vrot.slane %v5064, 4
        %v5066 = vrot.slane %v4236, 5
        %v5067 = vsel %vm1885, %v5065, %v5066
        %v5068 = vrot.slane %v5066, 4
        %v5069 = vrot.slane %v4237, 5
        %v5070 = vsel %vm1885, %v5068, %v5069
        %v5071 = vrot.slane %v4947, 5
        %v5072 = vrot.slane %v5071, 4
        %v5073 = vrot.slane %v4239, 5
        %v5074 = vsel %vm1885, %v5072, %v5073
        %v5075 = vrot.slane %v5073, 4
        %v5076 = vrot.slane %v4240, 5
        %v5077 = vsel %vm1885, %v5075, %v5076
        %v5078 = vrot.slane %v4948, 5
        %v5079 = vrot.slane %v5078, 4
        %v5080 = vrot.slane %v4242, 5
        %v5081 = vsel %vm1885, %v5079, %v5080
        %v5082 = vrot.slane %v5080, 4
        %v5083 = vrot.slane %v4243, 5
        %v5084 = vsel %vm1885, %v5082, %v5083
        %v5085 = vrot.slane %v4949, 5
        %v5086 = vrot.slane %v5085, 4
        %v5087 = vrot.slane %v4245, 5
        %v5088 = vsel %vm1885, %v5086, %v5087
        %v5089 = vrot.slane %v5087, 4
        %v5090 = vrot.slane %v4246, 5
        %v5091 = vsel %vm1885, %v5089, %v5090
        %v5092 = vrot.slane %v4950, 5
        %v5093 = vrot.slane %v5092, 4
        %v5094 = vrot.slane %v4248, 5
        %v5095 = vsel %vm1885, %v5093, %v5094
        %v5096 = vrot.slane %v5094, 4
        %v5097 = vrot.slane %v4249, 5
        %v5098 = vsel %vm1885, %v5096, %v5097
        %v5099 = vrot.slane %v4951, 5
        %v5100 = vrot.slane %v5099, 4
        %v5101 = vrot.slane %v4251, 5
        %v5102 = vsel %vm1885, %v5100, %v5101
        %v5103 = vrot.slane %v5101, 4
        %v5104 = vrot.slane %v4252, 5
        %v5105 = vsel %vm1885, %v5103, %v5104
        %v5106 = vrot.slane %v4952, 5
        %v5107 = vrot.slane %v5106, 4
        %v5108 = vrot.slane %v4254, 5
        %v5109 = vsel %vm1885, %v5107, %v5108
        %v5110 = vrot.slane %v5108, 4
        %v5111 = vrot.slane %v4255, 5
        %v5112 = vsel %vm1885, %v5110, %v5111
        %v5113 = vld [vmem:[%s1 + $0x10] sm:$0x3]
        %v5114 = vunpack.c.l.b16 %v5004
        %v5115 = vunpack.c.l.b16 %v5007
        %v5116 = vunpack.c.l.b16 %v5011
        %v5117 = vunpack.c.l.b16 %v5014
        %v5118 = vunpack.c.l.b16 %v5018
        %v5119 = vunpack.c.l.b16 %v5021
        %v5120 = vunpack.c.l.b16 %v5025
        %v5121 = vunpack.c.l.b16 %v5028
        %v5122 = vunpack.c.l.b16 %v5032
        %v5123 = vunpack.c.l.b16 %v5035
        %v5124 = vunpack.c.l.b16 %v5039
        %v5125 = vunpack.c.l.b16 %v5042
        %v5126 = vunpack.c.l.b16 %v5046
        %v5127 = vunpack.c.l.b16 %v5049
        %v5128 = vunpack.c.l.b16 %v5053
        %v5129 = vunpack.c.l.b16 %v5056
        %v5130 = vunpack.c.l.b16 %v5060
        %v5131 = vunpack.c.l.b16 %v5063
        %v5132 = vunpack.c.l.b16 %v5067
        %v5133 = vunpack.c.l.b16 %v5070
        %v5134 = vunpack.c.l.b16 %v5074
        %v5135 = vunpack.c.l.b16 %v5077
        %v5136 = vunpack.c.l.b16 %v5081
        %v5137 = vunpack.c.l.b16 %v5084
        %v5138 = vunpack.c.l.b16 %v5088
        %v5139 = vunpack.c.l.b16 %v5091
        %v5140 = vunpack.c.l.b16 %v5095
        %v5141 = vunpack.c.l.b16 %v5098
        %v5142 = vunpack.c.l.b16 %v5102
        %v5143 = vunpack.c.l.b16 %v5105
        %v5144 = vunpack.c.l.b16 %v5109
        %v5145 = vunpack.c.l.b16 %v5112
        %v5146 = vpack.c.b16 %v5115, %v5114
        %v5147 = vpack.c.b16 %v5117, %v5116
        %v5148 = vpack.c.b16 %v5119, %v5118
        %v5149 = vpack.c.b16 %v5121, %v5120
        %v5150 = vpack.c.b16 %v5123, %v5122
        %v5151 = vpack.c.b16 %v5125, %v5124
        %v5152 = vpack.c.b16 %v5127, %v5126
        %v5153 = vpack.c.b16 %v5129, %v5128
        %v5154 = vpack.c.b16 %v5131, %v5130
        %v5155 = vpack.c.b16 %v5133, %v5132
        %v5156 = vpack.c.b16 %v5135, %v5134
        %v5157 = vpack.c.b16 %v5137, %v5136
        %v5158 = vpack.c.b16 %v5139, %v5138
        %v5159 = vpack.c.b16 %v5141, %v5140
        %v5160 = vpack.c.b16 %v5143, %v5142
        %v5161 = vpack.c.b16 %v5145, %v5144
        %v5163 = vsel %vm1329, %v5146, 0
        %v5166 = vsel %vm1329, %v5147, 0
        %v5169 = vsel %vm1329, %v5148, 0
        %v5172 = vsel %vm1329, %v5149, 0
        %v5175 = vsel %vm1329, %v5150, 0
        %v5178 = vsel %vm1329, %v5151, 0
        %v5181 = vsel %vm1329, %v5152, 0
        %v5184 = vsel %vm1329, %v5153, 0
        %v5187 = vsel %vm1329, %v5154, 0
        %v5190 = vsel %vm1329, %v5155, 0
        %v5193 = vsel %vm1329, %v5156, 0
        %v5196 = vsel %vm1329, %v5157, 0
        %v5199 = vsel %vm1329, %v5158, 0
        %v5202 = vsel %vm1329, %v5159, 0
        %v5205 = vsel %vm1329, %v5160, 0
        %v5208 = vsel %vm1329, %v5161, 0
        %v5211 = vsel %vm1378, %v5113, 0
        %5213 = vmatprep.subr.bf16.mxu0 0
        %5214 = vmatpush1.bf16.msra.mxu0 0
        %5215 = vmatprep.subr.bf16.mxu0 0
        %5216 = vmatpush1.bf16.msra.mxu0 0
        %5217 = vmatprep.subr.bf16.mxu0 0
        %5218 = vmatpush1.bf16.msra.mxu0 0
        %5219 = vmatprep.subr.bf16.mxu0 0
        %5220 = vmatpush1.bf16.msra.mxu0 0
        %5221 = vmatprep.subr.bf16.mxu0 0
        %5222 = vmatpush1.bf16.msra.mxu0 0
        %5223 = vmatprep.subr.bf16.mxu0 0
        %5224 = vmatpush1.bf16.msra.mxu0 0
        %5225 = vmatprep.subr.bf16.mxu0 0
        %5226 = vmatpush1.bf16.msra.mxu0 0
        %5227 = vmatprep.subr.bf16.mxu0 0
        %5228 = vmatpush1.bf16.msra.mxu0 %v5211
        %5229 = vmatprep.subr.bf16.mxu0 0
        %5230 = vmatpush2.bf16.msra.mxu0 0
        %5231 = vmatprep.subr.bf16.mxu0 0
        %5232 = vmatpush2.bf16.msra.mxu0 0
        %5233 = vmatprep.subr.bf16.mxu0 0
        %5234 = vmatpush2.bf16.msra.mxu0 0
        %5235 = vmatprep.subr.bf16.mxu0 0
        %5236 = vmatpush2.bf16.msra.mxu0 0
        %5237 = vmatprep.subr.bf16.mxu0 0
        %5238 = vmatpush2.bf16.msra.mxu0 0
        %5239 = vmatprep.subr.bf16.mxu0 0
        %5240 = vmatpush2.bf16.msra.mxu0 0
        %5241 = vmatprep.subr.bf16.mxu0 0
        %5242 = vmatpush2.bf16.msra.mxu0 0
        %5243 = vmatprep.subr.bf16.mxu0 0
        %5244 = vmatpush2.bf16.msra.mxu0 0
        %5245 = vmatprep.mubr.bf16.mxu0 0
        %5246 = vmatmul.mubr.bf16.gmra.mxu0 %v5163
        %v5247 = vpop.f32.mrf.mxu0
        %v5248 = vadd.f32 0.0, %v5247
        %v5249 = vpop.f32.mrf.mxu0
        %v5250 = vpop.f32.mrf.mxu0
        %v5251 = vadd.f32 0.0, %v5250
        %v5252 = vpop.f32.mrf.mxu0
        %5253 = vmatprep.mubr.bf16.mxu0 0
        %5254 = vmatmul.mubr.bf16.gmra.mxu0 %v5166
        %v5255 = vpop.f32.mrf.mxu0
        %v5256 = vadd.f32 0.0, %v5255
        %v5257 = vpop.f32.mrf.mxu0
        %v5258 = vpop.f32.mrf.mxu0
        %v5259 = vadd.f32 0.0, %v5258
        %v5260 = vpop.f32.mrf.mxu0
        %5261 = vmatprep.mubr.bf16.mxu0 0
        %5262 = vmatmul.mubr.bf16.gmra.mxu0 %v5169
        %v5263 = vpop.f32.mrf.mxu0
        %v5264 = vadd.f32 0.0, %v5263
        %v5265 = vpop.f32.mrf.mxu0
        %v5266 = vpop.f32.mrf.mxu0
        %v5267 = vadd.f32 0.0, %v5266
        %v5268 = vpop.f32.mrf.mxu0
        %5269 = vmatprep.mubr.bf16.mxu0 0
        %5270 = vmatmul.mubr.bf16.gmra.mxu0 %v5172
        %v5271 = vpop.f32.mrf.mxu0
        %v5272 = vadd.f32 0.0, %v5271
        %v5273 = vpop.f32.mrf.mxu0
        %v5274 = vpop.f32.mrf.mxu0
        %v5275 = vadd.f32 0.0, %v5274
        %v5276 = vpop.f32.mrf.mxu0
        %5277 = vmatprep.mubr.bf16.mxu0 0
        %5278 = vmatmul.mubr.bf16.gmra.mxu0 %v5175
        %v5279 = vpop.f32.mrf.mxu0
        %v5280 = vadd.f32 0.0, %v5279
        %v5281 = vpop.f32.mrf.mxu0
        %v5282 = vpop.f32.mrf.mxu0
        %v5283 = vadd.f32 0.0, %v5282
        %v5284 = vpop.f32.mrf.mxu0
        %5285 = vmatprep.mubr.bf16.mxu0 0
        %5286 = vmatmul.mubr.bf16.gmra.mxu0 %v5178
        %v5287 = vpop.f32.mrf.mxu0
        %v5288 = vadd.f32 0.0, %v5287
        %v5289 = vpop.f32.mrf.mxu0
        %v5290 = vpop.f32.mrf.mxu0
        %v5291 = vadd.f32 0.0, %v5290
        %v5292 = vpop.f32.mrf.mxu0
        %5293 = vmatprep.mubr.bf16.mxu0 0
        %5294 = vmatmul.mubr.bf16.gmra.mxu0 %v5181
        %v5295 = vpop.f32.mrf.mxu0
        %v5296 = vadd.f32 0.0, %v5295
        %v5297 = vpop.f32.mrf.mxu0
        %v5298 = vpop.f32.mrf.mxu0
        %v5299 = vadd.f32 0.0, %v5298
        %v5300 = vpop.f32.mrf.mxu0
        %5301 = vmatprep.mubr.bf16.mxu0 0
        %5302 = vmatmul.mubr.bf16.gmra.mxu0 %v5184
        %v5303 = vpop.f32.mrf.mxu0
        %v5304 = vadd.f32 0.0, %v5303
        %v5305 = vpop.f32.mrf.mxu0
        %v5306 = vpop.f32.mrf.mxu0
        %v5307 = vadd.f32 0.0, %v5306
        %v5308 = vpop.f32.mrf.mxu0
        %5309 = vmatprep.mubr.bf16.mxu0 0
        %5310 = vmatmul.mubr.bf16.gmra.mxu0 %v5187
        %v5311 = vpop.f32.mrf.mxu0
        %v5312 = vadd.f32 0.0, %v5311
        %v5313 = vpop.f32.mrf.mxu0
        %v5314 = vpop.f32.mrf.mxu0
        %v5315 = vadd.f32 0.0, %v5314
        %v5316 = vpop.f32.mrf.mxu0
        %5317 = vmatprep.mubr.bf16.mxu0 0
        %5318 = vmatmul.mubr.bf16.gmra.mxu0 %v5190
        %v5319 = vpop.f32.mrf.mxu0
        %v5320 = vadd.f32 0.0, %v5319
        %v5321 = vpop.f32.mrf.mxu0
        %v5322 = vpop.f32.mrf.mxu0
        %v5323 = vadd.f32 0.0, %v5322
        %v5324 = vpop.f32.mrf.mxu0
        %5325 = vmatprep.mubr.bf16.mxu0 0
        %5326 = vmatmul.mubr.bf16.gmra.mxu0 %v5193
        %v5327 = vpop.f32.mrf.mxu0
        %v5328 = vadd.f32 0.0, %v5327
        %v5329 = vpop.f32.mrf.mxu0
        %v5330 = vpop.f32.mrf.mxu0
        %v5331 = vadd.f32 0.0, %v5330
        %v5332 = vpop.f32.mrf.mxu0
        %5333 = vmatprep.mubr.bf16.mxu0 0
        %5334 = vmatmul.mubr.bf16.gmra.mxu0 %v5196
        %v5335 = vpop.f32.mrf.mxu0
        %v5336 = vadd.f32 0.0, %v5335
        %v5337 = vpop.f32.mrf.mxu0
        %v5338 = vpop.f32.mrf.mxu0
        %v5339 = vadd.f32 0.0, %v5338
        %v5340 = vpop.f32.mrf.mxu0
        %5341 = vmatprep.mubr.bf16.mxu0 0
        %5342 = vmatmul.mubr.bf16.gmra.mxu0 %v5199
        %v5343 = vpop.f32.mrf.mxu0
        %v5344 = vadd.f32 0.0, %v5343
        %v5345 = vpop.f32.mrf.mxu0
        %v5346 = vpop.f32.mrf.mxu0
        %v5347 = vadd.f32 0.0, %v5346
        %v5348 = vpop.f32.mrf.mxu0
        %5349 = vmatprep.mubr.bf16.mxu0 0
        %5350 = vmatmul.mubr.bf16.gmra.mxu0 %v5202
        %v5351 = vpop.f32.mrf.mxu0
        %v5352 = vadd.f32 0.0, %v5351
        %v5353 = vpop.f32.mrf.mxu0
        %v5354 = vpop.f32.mrf.mxu0
        %v5355 = vadd.f32 0.0, %v5354
        %v5356 = vpop.f32.mrf.mxu0
        %5357 = vmatprep.mubr.bf16.mxu0 0
        %5358 = vmatmul.mubr.bf16.gmra.mxu0 %v5205
        %v5359 = vpop.f32.mrf.mxu0
        %v5360 = vadd.f32 0.0, %v5359
        %v5361 = vpop.f32.mrf.mxu0
        %v5362 = vpop.f32.mrf.mxu0
        %v5363 = vadd.f32 0.0, %v5362
        %v5364 = vpop.f32.mrf.mxu0
        %5365 = vmatprep.mubr.bf16.mxu0 0
        %5366 = vmatmul.mubr.bf16.gmra.mxu0 %v5208
        %v5367 = vpop.f32.mrf.mxu0
        %v5368 = vadd.f32 0.0, %v5367
        %v5369 = vpop.f32.mrf.mxu0
        %v5370 = vpop.f32.mrf.mxu0
        %v5371 = vadd.f32 0.0, %v5370
        %v5372 = vpop.f32.mrf.mxu0
        %5373 = vdwg.mxu0
        %v5374 = vadd.f32 %v4905, %v5248
        %v5375 = vadd.f32 %v4906, %v5251
        %v5376 = vadd.f32 %v4907, %v5256
        %v5377 = vadd.f32 %v4908, %v5259
        %v5378 = vadd.f32 %v4909, %v5264
        %v5379 = vadd.f32 %v4910, %v5267
        %v5380 = vadd.f32 %v4911, %v5272
        %v5381 = vadd.f32 %v4912, %v5275
        %v5382 = vadd.f32 %v4913, %v5280
        %v5383 = vadd.f32 %v4914, %v5283
        %v5384 = vadd.f32 %v4915, %v5288
        %v5385 = vadd.f32 %v4916, %v5291
        %v5386 = vadd.f32 %v4917, %v5296
        %v5387 = vadd.f32 %v4918, %v5299
        %v5388 = vadd.f32 %v4919, %v5304
        %v5389 = vadd.f32 %v4920, %v5307
        %v5390 = vadd.f32 %v4921, %v5312
        %v5391 = vadd.f32 %v4922, %v5315
        %v5392 = vadd.f32 %v4923, %v5320
        %v5393 = vadd.f32 %v4924, %v5323
        %v5394 = vadd.f32 %v4925, %v5328
        %v5395 = vadd.f32 %v4926, %v5331
        %v5396 = vadd.f32 %v4927, %v5336
        %v5397 = vadd.f32 %v4928, %v5339
        %v5398 = vadd.f32 %v4929, %v5344
        %v5399 = vadd.f32 %v4930, %v5347
        %v5400 = vadd.f32 %v4931, %v5352
        %v5401 = vadd.f32 %v4932, %v5355
        %v5402 = vadd.f32 %v4933, %v5360
        %v5403 = vadd.f32 %v4934, %v5363
        %v5404 = vadd.f32 %v4935, %v5368
        %v5405 = vadd.f32 %v4936, %v5371
        %v5406 = vpack.c.bf16 %v5375, %v5374
        %v5407 = vpack.c.bf16 %v5377, %v5376
        %v5408 = vpack.c.bf16 %v5379, %v5378
        %v5409 = vpack.c.bf16 %v5381, %v5380
        %v5410 = vpack.c.bf16 %v5383, %v5382
        %v5411 = vpack.c.bf16 %v5385, %v5384
        %v5412 = vpack.c.bf16 %v5387, %v5386
        %v5413 = vpack.c.bf16 %v5389, %v5388
        %v5414 = vpack.c.bf16 %v5391, %v5390
        %v5415 = vpack.c.bf16 %v5393, %v5392
        %v5416 = vpack.c.bf16 %v5395, %v5394
        %v5417 = vpack.c.bf16 %v5397, %v5396
        %v5418 = vpack.c.bf16 %v5399, %v5398
        %v5419 = vpack.c.bf16 %v5401, %v5400
        %v5420 = vpack.c.bf16 %v5403, %v5402
        %v5421 = vpack.c.bf16 %v5405, %v5404
        %v5438 = vunpack.c.l.b16 %v5406
        %v5439 = vunpack.c.h.b16 %v5406
        %v5440 = vunpack.c.l.b16 %v5407
        %v5441 = vunpack.c.h.b16 %v5407
        %v5442 = vunpack.c.l.b16 %v5408
        %v5443 = vunpack.c.h.b16 %v5408
        %v5444 = vunpack.c.l.b16 %v5409
        %v5445 = vunpack.c.h.b16 %v5409
        %v5446 = vunpack.c.l.b16 %v5410
        %v5447 = vunpack.c.h.b16 %v5410
        %v5448 = vunpack.c.l.b16 %v5411
        %v5449 = vunpack.c.h.b16 %v5411
        %v5450 = vunpack.c.l.b16 %v5412
        %v5451 = vunpack.c.h.b16 %v5412
        %v5452 = vunpack.c.l.b16 %v5413
        %v5453 = vunpack.c.h.b16 %v5413
        %v5454 = vunpack.c.l.b16 %v5414
        %v5455 = vunpack.c.h.b16 %v5414
        %v5456 = vunpack.c.l.b16 %v5415
        %v5457 = vunpack.c.h.b16 %v5415
        %v5458 = vunpack.c.l.b16 %v5416
        %v5459 = vunpack.c.h.b16 %v5416
        %v5460 = vunpack.c.l.b16 %v5417
        %v5461 = vunpack.c.h.b16 %v5417
        %v5462 = vunpack.c.l.b16 %v5418
        %v5463 = vunpack.c.h.b16 %v5418
        %v5464 = vunpack.c.l.b16 %v5419
        %v5465 = vunpack.c.h.b16 %v5419
        %v5466 = vunpack.c.l.b16 %v5420
        %v5467 = vunpack.c.h.b16 %v5420
        %v5468 = vunpack.c.l.b16 %v5421
        %v5469 = vunpack.c.h.b16 %v5421
        %v5470 = vpack.c.b16 %v5438, %v5438
        %v5471 = vpack.c.b16 %v5439, %v5439
        %v5472 = vpack.c.b16 %v5440, %v5440
        %v5473 = vpack.c.b16 %v5441, %v5441
        %v5474 = vpack.c.b16 %v5442, %v5442
        %v5475 = vpack.c.b16 %v5443, %v5443
        %v5476 = vpack.c.b16 %v5444, %v5444
        %v5477 = vpack.c.b16 %v5445, %v5445
        %v5478 = vpack.c.b16 %v5446, %v5446
        %v5479 = vpack.c.b16 %v5447, %v5447
        %v5480 = vpack.c.b16 %v5448, %v5448
        %v5481 = vpack.c.b16 %v5449, %v5449
        %v5482 = vpack.c.b16 %v5450, %v5450
        %v5483 = vpack.c.b16 %v5451, %v5451
        %v5484 = vpack.c.b16 %v5452, %v5452
        %v5485 = vpack.c.b16 %v5453, %v5453
        %v5486 = vpack.c.b16 %v5454, %v5454
        %v5487 = vpack.c.b16 %v5455, %v5455
        %v5488 = vpack.c.b16 %v5456, %v5456
        %v5489 = vpack.c.b16 %v5457, %v5457
        %v5490 = vpack.c.b16 %v5458, %v5458
        %v5491 = vpack.c.b16 %v5459, %v5459
        %v5492 = vpack.c.b16 %v5460, %v5460
        %v5493 = vpack.c.b16 %v5461, %v5461
        %v5494 = vpack.c.b16 %v5462, %v5462
        %v5495 = vpack.c.b16 %v5463, %v5463
        %v5496 = vpack.c.b16 %v5464, %v5464
        %v5497 = vpack.c.b16 %v5465, %v5465
        %v5498 = vpack.c.b16 %v5466, %v5466
        %v5499 = vpack.c.b16 %v5467, %v5467
        %v5500 = vpack.c.b16 %v5468, %v5468
        %v5501 = vpack.c.b16 %v5469, %v5469
        %vm5534 = vcmask 60416
        %5535 = vst.msk [vmem:[%s242] sm:$0xf] %vm5534, %v5470
        %5536 = vst.msk [vmem:[%s242 + $0x4] sm:$0xf] %vm5534, %v5471
        %5537 = vst.msk [vmem:[%s242 + $0x8] sm:$0xf] %vm5534, %v5472
        %5538 = vst.msk [vmem:[%s242 + $0xc] sm:$0xf] %vm5534, %v5473
        %5539 = vst.msk [vmem:[%s242 + $0x10] sm:$0xf] %vm5534, %v5474
        %5540 = vst.msk [vmem:[%s242 + $0x14] sm:$0xf] %vm5534, %v5475
        %5541 = vst.msk [vmem:[%s242 + $0x18] sm:$0xf] %vm5534, %v5476
        %5542 = vst.msk [vmem:[%s242 + $0x1c] sm:$0xf] %vm5534, %v5477
        %5543 = vst.msk [vmem:[%s242 + $0x20] sm:$0xf] %vm5534, %v5478
        %5544 = vst.msk [vmem:[%s242 + $0x24] sm:$0xf] %vm5534, %v5479
        %5545 = vst.msk [vmem:[%s242 + $0x28] sm:$0xf] %vm5534, %v5480
        %5546 = vst.msk [vmem:[%s242 + $0x2c] sm:$0xf] %vm5534, %v5481
        %5547 = vst.msk [vmem:[%s242 + $0x30] sm:$0xf] %vm5534, %v5482
        %5548 = vst.msk [vmem:[%s242 + $0x34] sm:$0xf] %vm5534, %v5483
        %5549 = vst.msk [vmem:[%s242 + $0x38] sm:$0xf] %vm5534, %v5484
        %5550 = vst.msk [vmem:[%s242 + $0x3c] sm:$0xf] %vm5534, %v5485
        %5551 = vst.msk [vmem:[%s242 + $0x40] sm:$0xf] %vm5534, %v5486
        %5552 = vst.msk [vmem:[%s242 + $0x44] sm:$0xf] %vm5534, %v5487
        %5553 = vst.msk [vmem:[%s242 + $0x48] sm:$0xf] %vm5534, %v5488
        %5554 = vst.msk [vmem:[%s242 + $0x4c] sm:$0xf] %vm5534, %v5489
        %5555 = vst.msk [vmem:[%s242 + $0x50] sm:$0xf] %vm5534, %v5490
        %5556 = vst.msk [vmem:[%s242 + $0x54] sm:$0xf] %vm5534, %v5491
        %5557 = vst.msk [vmem:[%s242 + $0x58] sm:$0xf] %vm5534, %v5492
        %5558 = vst.msk [vmem:[%s242 + $0x5c] sm:$0xf] %vm5534, %v5493
        %5559 = vst.msk [vmem:[%s242 + $0x60] sm:$0xf] %vm5534, %v5494
        %5560 = vst.msk [vmem:[%s242 + $0x64] sm:$0xf] %vm5534, %v5495
        %5561 = vst.msk [vmem:[%s242 + $0x68] sm:$0xf] %vm5534, %v5496
        %5562 = vst.msk [vmem:[%s242 + $0x6c] sm:$0xf] %vm5534, %v5497
        %5563 = vst.msk [vmem:[%s242 + $0x70] sm:$0xf] %vm5534, %v5498
        %5564 = vst.msk [vmem:[%s242 + $0x74] sm:$0xf] %vm5534, %v5499
        %5565 = vst.msk [vmem:[%s242 + $0x78] sm:$0xf] %vm5534, %v5500
        %5566 = vst.msk [vmem:[%s242 + $0x7c] sm:$0xf] %vm5534, %v5501
        %vm5567 = vcmask 64512
        %v5568 = vsel %vm5567, %v5374, 0.0
        %v5569 = vsel %vm5567, %v5375, 0.0
        %v5570 = vadd.f32 %v5568, %v5569
        %v5571 = vsel %vm5567, %v5376, 0.0
        %v5572 = vadd.f32 %v5570, %v5571
        %v5573 = vsel %vm5567, %v5377, 0.0
        %v5574 = vadd.f32 %v5572, %v5573
        %v5575 = vsel %vm5567, %v5378, 0.0
        %v5576 = vadd.f32 %v5574, %v5575
        %v5577 = vsel %vm5567, %v5379, 0.0
        %v5578 = vadd.f32 %v5576, %v5577
        %v5579 = vsel %vm5567, %v5380, 0.0
        %v5580 = vadd.f32 %v5578, %v5579
        %v5581 = vsel %vm5567, %v5381, 0.0
        %v5582 = vadd.f32 %v5580, %v5581
        %v5583 = vsel %vm5567, %v5382, 0.0
        %v5584 = vadd.f32 %v5582, %v5583
        %v5585 = vsel %vm5567, %v5383, 0.0
        %v5586 = vadd.f32 %v5584, %v5585
        %v5587 = vsel %vm5567, %v5384, 0.0
        %v5588 = vadd.f32 %v5586, %v5587
        %v5589 = vsel %vm5567, %v5385, 0.0
        %v5590 = vadd.f32 %v5588, %v5589
        %v5591 = vsel %vm5567, %v5386, 0.0
        %v5592 = vadd.f32 %v5590, %v5591
        %v5593 = vsel %vm5567, %v5387, 0.0
        %v5594 = vadd.f32 %v5592, %v5593
        %v5595 = vsel %vm5567, %v5388, 0.0
        %v5596 = vadd.f32 %v5594, %v5595
        %v5597 = vsel %vm5567, %v5389, 0.0
        %v5598 = vadd.f32 %v5596, %v5597
        %v5599 = vsel %vm5567, %v5390, 0.0
        %v5600 = vadd.f32 %v5598, %v5599
        %v5601 = vsel %vm5567, %v5391, 0.0
        %v5602 = vadd.f32 %v5600, %v5601
        %v5603 = vsel %vm5567, %v5392, 0.0
        %v5604 = vadd.f32 %v5602, %v5603
        %v5605 = vsel %vm5567, %v5393, 0.0
        %v5606 = vadd.f32 %v5604, %v5605
        %v5607 = vsel %vm5567, %v5394, 0.0
        %v5608 = vadd.f32 %v5606, %v5607
        %v5609 = vsel %vm5567, %v5395, 0.0
        %v5610 = vadd.f32 %v5608, %v5609
        %v5611 = vsel %vm5567, %v5396, 0.0
        %v5612 = vadd.f32 %v5610, %v5611
        %v5613 = vsel %vm5567, %v5397, 0.0
        %v5614 = vadd.f32 %v5612, %v5613
        %v5615 = vsel %vm5567, %v5398, 0.0
        %v5616 = vadd.f32 %v5614, %v5615
        %v5617 = vsel %vm5567, %v5399, 0.0
        %v5618 = vadd.f32 %v5616, %v5617
        %v5619 = vsel %vm5567, %v5400, 0.0
        %v5620 = vadd.f32 %v5618, %v5619
        %v5621 = vsel %vm5567, %v5401, 0.0
        %v5622 = vadd.f32 %v5620, %v5621
        %v5623 = vsel %vm5567, %v5402, 0.0
        %v5624 = vadd.f32 %v5622, %v5623
        %v5625 = vsel %vm5567, %v5403, 0.0
        %v5626 = vadd.f32 %v5624, %v5625
        %v5627 = vsel %vm5567, %v5404, 0.0
        %v5628 = vadd.f32 %v5626, %v5627
        %v5629 = vsel %vm5567, %v5405, 0.0
        %v5630 = vadd.f32 %v5628, %v5629
        %v5631 = vrot.slane %v5630, 4
        %v5632 = vadd.f32 %v5630, %v5631
        %v5633 = vrot.slane %v5632, 2
        %v5634 = vadd.f32 %v5632, %v5633
        %v5635 = vrot.slane %v5634, 1
        %v5636 = vadd.f32 %v5634, %v5635
        %vm5637 = vcmask 57344
        %5638 = vst.msk [vmem:[%s232] sm:$0x1] %vm5637, %v5636
        %v5639 = vmul.f32 %v5374, %v5374
        %v5640 = vmul.f32 %v5375, %v5375
        %v5641 = vmul.f32 %v5376, %v5376
        %v5642 = vmul.f32 %v5377, %v5377
        %v5643 = vmul.f32 %v5378, %v5378
        %v5644 = vmul.f32 %v5379, %v5379
        %v5645 = vmul.f32 %v5380, %v5380
        %v5646 = vmul.f32 %v5381, %v5381
        %v5647 = vmul.f32 %v5382, %v5382
        %v5648 = vmul.f32 %v5383, %v5383
        %v5649 = vmul.f32 %v5384, %v5384
        %v5650 = vmul.f32 %v5385, %v5385
        %v5651 = vmul.f32 %v5386, %v5386
        %v5652 = vmul.f32 %v5387, %v5387
        %v5653 = vmul.f32 %v5388, %v5388
        %v5654 = vmul.f32 %v5389, %v5389
        %v5655 = vmul.f32 %v5390, %v5390
        %v5656 = vmul.f32 %v5391, %v5391
        %v5657 = vmul.f32 %v5392, %v5392
        %v5658 = vmul.f32 %v5393, %v5393
        %v5659 = vmul.f32 %v5394, %v5394
        %v5660 = vmul.f32 %v5395, %v5395
        %v5661 = vmul.f32 %v5396, %v5396
        %v5662 = vmul.f32 %v5397, %v5397
        %v5663 = vmul.f32 %v5398, %v5398
        %v5664 = vmul.f32 %v5399, %v5399
        %v5665 = vmul.f32 %v5400, %v5400
        %v5666 = vmul.f32 %v5401, %v5401
        %v5667 = vmul.f32 %v5402, %v5402
        %v5668 = vmul.f32 %v5403, %v5403
        %v5669 = vmul.f32 %v5404, %v5404
        %v5670 = vmul.f32 %v5405, %v5405
        %v5671 = vsel %vm5567, %v5639, 0.0
        %v5672 = vsel %vm5567, %v5640, 0.0
        %v5673 = vadd.f32 %v5671, %v5672
        %v5674 = vsel %vm5567, %v5641, 0.0
        %v5675 = vadd.f32 %v5673, %v5674
        %v5676 = vsel %vm5567, %v5642, 0.0
        %v5677 = vadd.f32 %v5675, %v5676
        %v5678 = vsel %vm5567, %v5643, 0.0
        %v5679 = vadd.f32 %v5677, %v5678
        %v5680 = vsel %vm5567, %v5644, 0.0
        %v5681 = vadd.f32 %v5679, %v5680
        %v5682 = vsel %vm5567, %v5645, 0.0
        %v5683 = vadd.f32 %v5681, %v5682
        %v5684 = vsel %vm5567, %v5646, 0.0
        %v5685 = vadd.f32 %v5683, %v5684
        %v5686 = vsel %vm5567, %v5647, 0.0
        %v5687 = vadd.f32 %v5685, %v5686
        %v5688 = vsel %vm5567, %v5648, 0.0
        %v5689 = vadd.f32 %v5687, %v5688
        %v5690 = vsel %vm5567, %v5649, 0.0
        %v5691 = vadd.f32 %v5689, %v5690
        %v5692 = vsel %vm5567, %v5650, 0.0
        %v5693 = vadd.f32 %v5691, %v5692
        %v5694 = vsel %vm5567, %v5651, 0.0
        %v5695 = vadd.f32 %v5693, %v5694
        %v5696 = vsel %vm5567, %v5652, 0.0
        %v5697 = vadd.f32 %v5695, %v5696
        %v5698 = vsel %vm5567, %v5653, 0.0
        %v5699 = vadd.f32 %v5697, %v5698
        %v5700 = vsel %vm5567, %v5654, 0.0
        %v5701 = vadd.f32 %v5699, %v5700
        %v5702 = vsel %vm5567, %v5655, 0.0
        %v5703 = vadd.f32 %v5701, %v5702
        %v5704 = vsel %vm5567, %v5656, 0.0
        %v5705 = vadd.f32 %v5703, %v5704
        %v5706 = vsel %vm5567, %v5657, 0.0
        %v5707 = vadd.f32 %v5705, %v5706
        %v5708 = vsel %vm5567, %v5658, 0.0
        %v5709 = vadd.f32 %v5707, %v5708
        %v5710 = vsel %vm5567, %v5659, 0.0
        %v5711 = vadd.f32 %v5709, %v5710
        %v5712 = vsel %vm5567, %v5660, 0.0
        %v5713 = vadd.f32 %v5711, %v5712
        %v5714 = vsel %vm5567, %v5661, 0.0
        %v5715 = vadd.f32 %v5713, %v5714
        %v5716 = vsel %vm5567, %v5662, 0.0
        %v5717 = vadd.f32 %v5715, %v5716
        %v5718 = vsel %vm5567, %v5663, 0.0
        %v5719 = vadd.f32 %v5717, %v5718
        %v5720 = vsel %vm5567, %v5664, 0.0
        %v5721 = vadd.f32 %v5719, %v5720
        %v5722 = vsel %vm5567, %v5665, 0.0
        %v5723 = vadd.f32 %v5721, %v5722
        %v5724 = vsel %vm5567, %v5666, 0.0
        %v5725 = vadd.f32 %v5723, %v5724
        %v5726 = vsel %vm5567, %v5667, 0.0
        %v5727 = vadd.f32 %v5725, %v5726
        %v5728 = vsel %vm5567, %v5668, 0.0
        %v5729 = vadd.f32 %v5727, %v5728
        %v5730 = vsel %vm5567, %v5669, 0.0
        %v5731 = vadd.f32 %v5729, %v5730
        %v5732 = vsel %vm5567, %v5670, 0.0
        %v5733 = vadd.f32 %v5731, %v5732
        %v5734 = vrot.slane %v5733, 4
        %v5735 = vadd.f32 %v5733, %v5734
        %v5736 = vrot.slane %v5735, 2
        %v5737 = vadd.f32 %v5735, %v5736
        %v5738 = vrot.slane %v5737, 1
        %v5739 = vadd.f32 %v5737, %v5738
        %5740 = vst.msk [vmem:[%s232 + $0x1] sm:$0x1] %vm5637, %v5739
        %v5741 = vld [vmem:[%s2] sm:$0x3]
        %v5743 = vsel %vm1378, %v5741, 0
        %5745 = vmatprep.subr.bf16.mxu0 0
        %5746 = vmatpush1.bf16.msra.mxu0 0
        %5747 = vmatprep.subr.bf16.mxu0 0
        %5748 = vmatpush1.bf16.msra.mxu0 0
        %5749 = vmatprep.subr.bf16.mxu0 0
        %5750 = vmatpush1.bf16.msra.mxu0 0
        %5751 = vmatprep.subr.bf16.mxu0 0
        %5752 = vmatpush1.bf16.msra.mxu0 0
        %5753 = vmatprep.subr.bf16.mxu0 0
        %5754 = vmatpush1.bf16.msra.mxu0 0
        %5755 = vmatprep.subr.bf16.mxu0 0
        %5756 = vmatpush1.bf16.msra.mxu0 0
        %5757 = vmatprep.subr.bf16.mxu0 0
        %5758 = vmatpush1.bf16.msra.mxu0 0
        %5759 = vmatprep.subr.bf16.mxu0 0
        %5760 = vmatpush1.bf16.msra.mxu0 %v5743
        %5761 = vmatprep.subr.bf16.mxu0 0
        %5762 = vmatpush2.bf16.msra.mxu0 0
        %5763 = vmatprep.subr.bf16.mxu0 0
        %5764 = vmatpush2.bf16.msra.mxu0 0
        %5765 = vmatprep.subr.bf16.mxu0 0
        %5766 = vmatpush2.bf16.msra.mxu0 0
        %5767 = vmatprep.subr.bf16.mxu0 0
        %5768 = vmatpush2.bf16.msra.mxu0 0
        %5769 = vmatprep.subr.bf16.mxu0 0
        %5770 = vmatpush2.bf16.msra.mxu0 0
        %5771 = vmatprep.subr.bf16.mxu0 0
        %5772 = vmatpush2.bf16.msra.mxu0 0
        %5773 = vmatprep.subr.bf16.mxu0 0
        %5774 = vmatpush2.bf16.msra.mxu0 0
        %5775 = vmatprep.subr.bf16.mxu0 0
        %5776 = vmatpush2.bf16.msra.mxu0 0
        %5777 = vmatprep.mubr.bf16.mxu0 0
        %5778 = vmatmul.mubr.bf16.gmra.mxu0 %v3134
        %v5779 = vpop.f32.mrf.mxu0
        %v5780 = vadd.f32 0.0, %v5779
        %v5781 = vpop.f32.mrf.mxu0
        %v5782 = vpop.f32.mrf.mxu0
        %v5783 = vadd.f32 0.0, %v5782
        %v5784 = vpop.f32.mrf.mxu0
        %5785 = vmatprep.mubr.bf16.mxu0 0
        %5786 = vmatmul.mubr.bf16.gmra.mxu0 %v3137
        %v5787 = vpop.f32.mrf.mxu0
        %v5788 = vadd.f32 0.0, %v5787
        %v5789 = vpop.f32.mrf.mxu0
        %v5790 = vpop.f32.mrf.mxu0
        %v5791 = vadd.f32 0.0, %v5790
        %v5792 = vpop.f32.mrf.mxu0
        %5793 = vmatprep.mubr.bf16.mxu0 0
        %5794 = vmatmul.mubr.bf16.gmra.mxu0 %v3140
        %v5795 = vpop.f32.mrf.mxu0
        %v5796 = vadd.f32 0.0, %v5795
        %v5797 = vpop.f32.mrf.mxu0
        %v5798 = vpop.f32.mrf.mxu0
        %v5799 = vadd.f32 0.0, %v5798
        %v5800 = vpop.f32.mrf.mxu0
        %5801 = vmatprep.mubr.bf16.mxu0 0
        %5802 = vmatmul.mubr.bf16.gmra.mxu0 %v3143
        %v5803 = vpop.f32.mrf.mxu0
        %v5804 = vadd.f32 0.0, %v5803
        %v5805 = vpop.f32.mrf.mxu0
        %v5806 = vpop.f32.mrf.mxu0
        %v5807 = vadd.f32 0.0, %v5806
        %v5808 = vpop.f32.mrf.mxu0
        %5809 = vmatprep.mubr.bf16.mxu0 0
        %5810 = vmatmul.mubr.bf16.gmra.mxu0 %v3146
        %v5811 = vpop.f32.mrf.mxu0
        %v5812 = vadd.f32 0.0, %v5811
        %v5813 = vpop.f32.mrf.mxu0
        %v5814 = vpop.f32.mrf.mxu0
        %v5815 = vadd.f32 0.0, %v5814
        %v5816 = vpop.f32.mrf.mxu0
        %5817 = vmatprep.mubr.bf16.mxu0 0
        %5818 = vmatmul.mubr.bf16.gmra.mxu0 %v3149
        %v5819 = vpop.f32.mrf.mxu0
        %v5820 = vadd.f32 0.0, %v5819
        %v5821 = vpop.f32.mrf.mxu0
        %v5822 = vpop.f32.mrf.mxu0
        %v5823 = vadd.f32 0.0, %v5822
        %v5824 = vpop.f32.mrf.mxu0
        %5825 = vmatprep.mubr.bf16.mxu0 0
        %5826 = vmatmul.mubr.bf16.gmra.mxu0 %v3152
        %v5827 = vpop.f32.mrf.mxu0
        %v5828 = vadd.f32 0.0, %v5827
        %v5829 = vpop.f32.mrf.mxu0
        %v5830 = vpop.f32.mrf.mxu0
        %v5831 = vadd.f32 0.0, %v5830
        %v5832 = vpop.f32.mrf.mxu0
        %5833 = vmatprep.mubr.bf16.mxu0 0
        %5834 = vmatmul.mubr.bf16.gmra.mxu0 %v3155
        %v5835 = vpop.f32.mrf.mxu0
        %v5836 = vadd.f32 0.0, %v5835
        %v5837 = vpop.f32.mrf.mxu0
        %v5838 = vpop.f32.mrf.mxu0
        %v5839 = vadd.f32 0.0, %v5838
        %v5840 = vpop.f32.mrf.mxu0
        %5841 = vmatprep.mubr.bf16.mxu0 0
        %5842 = vmatmul.mubr.bf16.gmra.mxu0 %v3158
        %v5843 = vpop.f32.mrf.mxu0
        %v5844 = vadd.f32 0.0, %v5843
        %v5845 = vpop.f32.mrf.mxu0
        %v5846 = vpop.f32.mrf.mxu0
        %v5847 = vadd.f32 0.0, %v5846
        %v5848 = vpop.f32.mrf.mxu0
        %5849 = vmatprep.mubr.bf16.mxu0 0
        %5850 = vmatmul.mubr.bf16.gmra.mxu0 %v3161
        %v5851 = vpop.f32.mrf.mxu0
        %v5852 = vadd.f32 0.0, %v5851
        %v5853 = vpop.f32.mrf.mxu0
        %v5854 = vpop.f32.mrf.mxu0
        %v5855 = vadd.f32 0.0, %v5854
        %v5856 = vpop.f32.mrf.mxu0
        %5857 = vmatprep.mubr.bf16.mxu0 0
        %5858 = vmatmul.mubr.bf16.gmra.mxu0 %v3164
        %v5859 = vpop.f32.mrf.mxu0
        %v5860 = vadd.f32 0.0, %v5859
        %v5861 = vpop.f32.mrf.mxu0
        %v5862 = vpop.f32.mrf.mxu0
        %v5863 = vadd.f32 0.0, %v5862
        %v5864 = vpop.f32.mrf.mxu0
        %5865 = vmatprep.mubr.bf16.mxu0 0
        %5866 = vmatmul.mubr.bf16.gmra.mxu0 %v3167
        %v5867 = vpop.f32.mrf.mxu0
        %v5868 = vadd.f32 0.0, %v5867
        %v5869 = vpop.f32.mrf.mxu0
        %v5870 = vpop.f32.mrf.mxu0
        %v5871 = vadd.f32 0.0, %v5870
        %v5872 = vpop.f32.mrf.mxu0
        %5873 = vmatprep.mubr.bf16.mxu0 0
        %5874 = vmatmul.mubr.bf16.gmra.mxu0 %v3170
        %v5875 = vpop.f32.mrf.mxu0
        %v5876 = vadd.f32 0.0, %v5875
        %v5877 = vpop.f32.mrf.mxu0
        %v5878 = vpop.f32.mrf.mxu0
        %v5879 = vadd.f32 0.0, %v5878
        %v5880 = vpop.f32.mrf.mxu0
        %5881 = vmatprep.mubr.bf16.mxu0 0
        %5882 = vmatmul.mubr.bf16.gmra.mxu0 %v3173
        %v5883 = vpop.f32.mrf.mxu0
        %v5884 = vadd.f32 0.0, %v5883
        %v5885 = vpop.f32.mrf.mxu0
        %v5886 = vpop.f32.mrf.mxu0
        %v5887 = vadd.f32 0.0, %v5886
        %v5888 = vpop.f32.mrf.mxu0
        %5889 = vmatprep.mubr.bf16.mxu0 0
        %5890 = vmatmul.mubr.bf16.gmra.mxu0 %v3176
        %v5891 = vpop.f32.mrf.mxu0
        %v5892 = vadd.f32 0.0, %v5891
        %v5893 = vpop.f32.mrf.mxu0
        %v5894 = vpop.f32.mrf.mxu0
        %v5895 = vadd.f32 0.0, %v5894
        %v5896 = vpop.f32.mrf.mxu0
        %5897 = vmatprep.mubr.bf16.mxu0 0
        %5898 = vmatmul.mubr.bf16.gmra.mxu0 %v3179
        %v5899 = vpop.f32.mrf.mxu0
        %v5900 = vadd.f32 0.0, %v5899
        %v5901 = vpop.f32.mrf.mxu0
        %v5902 = vpop.f32.mrf.mxu0
        %v5903 = vadd.f32 0.0, %v5902
        %v5904 = vpop.f32.mrf.mxu0
        %5905 = vdwg.mxu0
        %v5906 = vpack.c.bf16 %v5783, %v5780
        %v5907 = vpack.c.bf16 %v5791, %v5788
        %v5908 = vpack.c.bf16 %v5799, %v5796
        %v5909 = vpack.c.bf16 %v5807, %v5804
        %v5910 = vpack.c.bf16 %v5815, %v5812
        %v5911 = vpack.c.bf16 %v5823, %v5820
        %v5912 = vpack.c.bf16 %v5831, %v5828
        %v5913 = vpack.c.bf16 %v5839, %v5836
        %v5914 = vpack.c.bf16 %v5847, %v5844
        %v5915 = vpack.c.bf16 %v5855, %v5852
        %v5916 = vpack.c.bf16 %v5863, %v5860
        %v5917 = vpack.c.bf16 %v5871, %v5868
        %v5918 = vpack.c.bf16 %v5879, %v5876
        %v5919 = vpack.c.bf16 %v5887, %v5884
        %v5920 = vpack.c.bf16 %v5895, %v5892
        %v5921 = vpack.c.bf16 %v5903, %v5900
        %v5938 = vunpack.c.l.b16 %v5906
        %v5939 = vunpack.c.h.b16 %v5906
        %v5940 = vunpack.c.l.b16 %v5907
        %v5941 = vunpack.c.h.b16 %v5907
        %v5942 = vunpack.c.l.b16 %v5908
        %v5943 = vunpack.c.h.b16 %v5908
        %v5944 = vunpack.c.l.b16 %v5909
        %v5945 = vunpack.c.h.b16 %v5909
        %v5946 = vunpack.c.l.b16 %v5910
        %v5947 = vunpack.c.h.b16 %v5910
        %v5948 = vunpack.c.l.b16 %v5911
        %v5949 = vunpack.c.h.b16 %v5911
        %v5950 = vunpack.c.l.b16 %v5912
        %v5951 = vunpack.c.h.b16 %v5912
        %v5952 = vunpack.c.l.b16 %v5913
        %v5953 = vunpack.c.h.b16 %v5913
        %v5954 = vunpack.c.l.b16 %v5914
        %v5955 = vunpack.c.h.b16 %v5914
        %v5956 = vunpack.c.l.b16 %v5915
        %v5957 = vunpack.c.h.b16 %v5915
        %v5958 = vunpack.c.l.b16 %v5916
        %v5959 = vunpack.c.h.b16 %v5916
        %v5960 = vunpack.c.l.b16 %v5917
        %v5961 = vunpack.c.h.b16 %v5917
        %v5962 = vunpack.c.l.b16 %v5918
        %v5963 = vunpack.c.h.b16 %v5918
        %v5964 = vunpack.c.l.b16 %v5919
        %v5965 = vunpack.c.h.b16 %v5919
        %v5966 = vunpack.c.l.b16 %v5920
        %v5967 = vunpack.c.h.b16 %v5920
        %v5968 = vunpack.c.l.b16 %v5921
        %v5969 = vunpack.c.h.b16 %v5921
        %v5970 = vpack.c.b16 %v5938, %v5938
        %v5971 = vpack.c.b16 %v5939, %v5939
        %v5972 = vpack.c.b16 %v5940, %v5940
        %v5973 = vpack.c.b16 %v5941, %v5941
        %v5974 = vpack.c.b16 %v5942, %v5942
        %v5975 = vpack.c.b16 %v5943, %v5943
        %v5976 = vpack.c.b16 %v5944, %v5944
        %v5977 = vpack.c.b16 %v5945, %v5945
        %v5978 = vpack.c.b16 %v5946, %v5946
        %v5979 = vpack.c.b16 %v5947, %v5947
        %v5980 = vpack.c.b16 %v5948, %v5948
        %v5981 = vpack.c.b16 %v5949, %v5949
        %v5982 = vpack.c.b16 %v5950, %v5950
        %v5983 = vpack.c.b16 %v5951, %v5951
        %v5984 = vpack.c.b16 %v5952, %v5952
        %v5985 = vpack.c.b16 %v5953, %v5953
        %v5986 = vpack.c.b16 %v5954, %v5954
        %v5987 = vpack.c.b16 %v5955, %v5955
        %v5988 = vpack.c.b16 %v5956, %v5956
        %v5989 = vpack.c.b16 %v5957, %v5957
        %v5990 = vpack.c.b16 %v5958, %v5958
        %v5991 = vpack.c.b16 %v5959, %v5959
        %v5992 = vpack.c.b16 %v5960, %v5960
        %v5993 = vpack.c.b16 %v5961, %v5961
        %v5994 = vpack.c.b16 %v5962, %v5962
        %v5995 = vpack.c.b16 %v5963, %v5963
        %v5996 = vpack.c.b16 %v5964, %v5964
        %v5997 = vpack.c.b16 %v5965, %v5965
        %v5998 = vpack.c.b16 %v5966, %v5966
        %v5999 = vpack.c.b16 %v5967, %v5967
        %v6000 = vpack.c.b16 %v5968, %v5968
        %v6001 = vpack.c.b16 %v5969, %v5969
        %6034 = vst.msk [vmem:[%s247] sm:$0xf] %vm5534, %v5970
        %6035 = vst.msk [vmem:[%s247 + $0x4] sm:$0xf] %vm5534, %v5971
        %6036 = vst.msk [vmem:[%s247 + $0x8] sm:$0xf] %vm5534, %v5972
        %6037 = vst.msk [vmem:[%s247 + $0xc] sm:$0xf] %vm5534, %v5973
        %6038 = vst.msk [vmem:[%s247 + $0x10] sm:$0xf] %vm5534, %v5974
        %6039 = vst.msk [vmem:[%s247 + $0x14] sm:$0xf] %vm5534, %v5975
        %6040 = vst.msk [vmem:[%s247 + $0x18] sm:$0xf] %vm5534, %v5976
        %6041 = vst.msk [vmem:[%s247 + $0x1c] sm:$0xf] %vm5534, %v5977
        %6042 = vst.msk [vmem:[%s247 + $0x20] sm:$0xf] %vm5534, %v5978
        %6043 = vst.msk [vmem:[%s247 + $0x24] sm:$0xf] %vm5534, %v5979
        %6044 = vst.msk [vmem:[%s247 + $0x28] sm:$0xf] %vm5534, %v5980
        %6045 = vst.msk [vmem:[%s247 + $0x2c] sm:$0xf] %vm5534, %v5981
        %6046 = vst.msk [vmem:[%s247 + $0x30] sm:$0xf] %vm5534, %v5982
        %6047 = vst.msk [vmem:[%s247 + $0x34] sm:$0xf] %vm5534, %v5983
        %6048 = vst.msk [vmem:[%s247 + $0x38] sm:$0xf] %vm5534, %v5984
        %6049 = vst.msk [vmem:[%s247 + $0x3c] sm:$0xf] %vm5534, %v5985
        %6050 = vst.msk [vmem:[%s247 + $0x40] sm:$0xf] %vm5534, %v5986
        %6051 = vst.msk [vmem:[%s247 + $0x44] sm:$0xf] %vm5534, %v5987
        %6052 = vst.msk [vmem:[%s247 + $0x48] sm:$0xf] %vm5534, %v5988
        %6053 = vst.msk [vmem:[%s247 + $0x4c] sm:$0xf] %vm5534, %v5989
        %6054 = vst.msk [vmem:[%s247 + $0x50] sm:$0xf] %vm5534, %v5990
        %6055 = vst.msk [vmem:[%s247 + $0x54] sm:$0xf] %vm5534, %v5991
        %6056 = vst.msk [vmem:[%s247 + $0x58] sm:$0xf] %vm5534, %v5992
        %6057 = vst.msk [vmem:[%s247 + $0x5c] sm:$0xf] %vm5534, %v5993
        %6058 = vst.msk [vmem:[%s247 + $0x60] sm:$0xf] %vm5534, %v5994
        %6059 = vst.msk [vmem:[%s247 + $0x64] sm:$0xf] %vm5534, %v5995
        %6060 = vst.msk [vmem:[%s247 + $0x68] sm:$0xf] %vm5534, %v5996
        %6061 = vst.msk [vmem:[%s247 + $0x6c] sm:$0xf] %vm5534, %v5997
        %6062 = vst.msk [vmem:[%s247 + $0x70] sm:$0xf] %vm5534, %v5998
        %6063 = vst.msk [vmem:[%s247 + $0x74] sm:$0xf] %vm5534, %v5999
        %6064 = vst.msk [vmem:[%s247 + $0x78] sm:$0xf] %vm5534, %v6000
        %6065 = vst.msk [vmem:[%s247 + $0x7c] sm:$0xf] %vm5534, %v6001
        %v6066 = vsel %vm5567, %v5780, 0.0
        %v6067 = vsel %vm5567, %v5783, 0.0
        %v6068 = vadd.f32 %v6066, %v6067
        %v6069 = vsel %vm5567, %v5788, 0.0
        %v6070 = vadd.f32 %v6068, %v6069
        %v6071 = vsel %vm5567, %v5791, 0.0
        %v6072 = vadd.f32 %v6070, %v6071
        %v6073 = vsel %vm5567, %v5796, 0.0
        %v6074 = vadd.f32 %v6072, %v6073
        %v6075 = vsel %vm5567, %v5799, 0.0
        %v6076 = vadd.f32 %v6074, %v6075
        %v6077 = vsel %vm5567, %v5804, 0.0
        %v6078 = vadd.f32 %v6076, %v6077
        %v6079 = vsel %vm5567, %v5807, 0.0
        %v6080 = vadd.f32 %v6078, %v6079
        %v6081 = vsel %vm5567, %v5812, 0.0
        %v6082 = vadd.f32 %v6080, %v6081
        %v6083 = vsel %vm5567, %v5815, 0.0
        %v6084 = vadd.f32 %v6082, %v6083
        %v6085 = vsel %vm5567, %v5820, 0.0
        %v6086 = vadd.f32 %v6084, %v6085
        %v6087 = vsel %vm5567, %v5823, 0.0
        %v6088 = vadd.f32 %v6086, %v6087
        %v6089 = vsel %vm5567, %v5828, 0.0
        %v6090 = vadd.f32 %v6088, %v6089
        %v6091 = vsel %vm5567, %v5831, 0.0
        %v6092 = vadd.f32 %v6090, %v6091
        %v6093 = vsel %vm5567, %v5836, 0.0
        %v6094 = vadd.f32 %v6092, %v6093
        %v6095 = vsel %vm5567, %v5839, 0.0
        %v6096 = vadd.f32 %v6094, %v6095
        %v6097 = vsel %vm5567, %v5844, 0.0
        %v6098 = vadd.f32 %v6096, %v6097
        %v6099 = vsel %vm5567, %v5847, 0.0
        %v6100 = vadd.f32 %v6098, %v6099
        %v6101 = vsel %vm5567, %v5852, 0.0
        %v6102 = vadd.f32 %v6100, %v6101
        %v6103 = vsel %vm5567, %v5855, 0.0
        %v6104 = vadd.f32 %v6102, %v6103
        %v6105 = vsel %vm5567, %v5860, 0.0
        %v6106 = vadd.f32 %v6104, %v6105
        %v6107 = vsel %vm5567, %v5863, 0.0
        %v6108 = vadd.f32 %v6106, %v6107
        %v6109 = vsel %vm5567, %v5868, 0.0
        %v6110 = vadd.f32 %v6108, %v6109
        %v6111 = vsel %vm5567, %v5871, 0.0
        %v6112 = vadd.f32 %v6110, %v6111
        %v6113 = vsel %vm5567, %v5876, 0.0
        %v6114 = vadd.f32 %v6112, %v6113
        %v6115 = vsel %vm5567, %v5879, 0.0
        %v6116 = vadd.f32 %v6114, %v6115
        %v6117 = vsel %vm5567, %v5884, 0.0
        %v6118 = vadd.f32 %v6116, %v6117
        %v6119 = vsel %vm5567, %v5887, 0.0
        %v6120 = vadd.f32 %v6118, %v6119
        %v6121 = vsel %vm5567, %v5892, 0.0
        %v6122 = vadd.f32 %v6120, %v6121
        %v6123 = vsel %vm5567, %v5895, 0.0
        %v6124 = vadd.f32 %v6122, %v6123
        %v6125 = vsel %vm5567, %v5900, 0.0
        %v6126 = vadd.f32 %v6124, %v6125
        %v6127 = vsel %vm5567, %v5903, 0.0
        %v6128 = vadd.f32 %v6126, %v6127
        %v6129 = vrot.slane %v6128, 4
        %v6130 = vadd.f32 %v6128, %v6129
        %v6131 = vrot.slane %v6130, 2
        %v6132 = vadd.f32 %v6130, %v6131
        %v6133 = vrot.slane %v6132, 1
        %v6134 = vadd.f32 %v6132, %v6133
        %6135 = vst.msk [vmem:[%s232 + $0x2] sm:$0x1] %vm5637, %v6134
        %v6136 = vmul.f32 %v5780, %v5780
        %v6137 = vmul.f32 %v5783, %v5783
        %v6138 = vmul.f32 %v5788, %v5788
        %v6139 = vmul.f32 %v5791, %v5791
        %v6140 = vmul.f32 %v5796, %v5796
        %v6141 = vmul.f32 %v5799, %v5799
        %v6142 = vmul.f32 %v5804, %v5804
        %v6143 = vmul.f32 %v5807, %v5807
        %v6144 = vmul.f32 %v5812, %v5812
        %v6145 = vmul.f32 %v5815, %v5815
        %v6146 = vmul.f32 %v5820, %v5820
        %v6147 = vmul.f32 %v5823, %v5823
        %v6148 = vmul.f32 %v5828, %v5828
        %v6149 = vmul.f32 %v5831, %v5831
        %v6150 = vmul.f32 %v5836, %v5836
        %v6151 = vmul.f32 %v5839, %v5839
        %v6152 = vmul.f32 %v5844, %v5844
        %v6153 = vmul.f32 %v5847, %v5847
        %v6154 = vmul.f32 %v5852, %v5852
        %v6155 = vmul.f32 %v5855, %v5855
        %v6156 = vmul.f32 %v5860, %v5860
        %v6157 = vmul.f32 %v5863, %v5863
        %v6158 = vmul.f32 %v5868, %v5868
        %v6159 = vmul.f32 %v5871, %v5871
        %v6160 = vmul.f32 %v5876, %v5876
        %v6161 = vmul.f32 %v5879, %v5879
        %v6162 = vmul.f32 %v5884, %v5884
        %v6163 = vmul.f32 %v5887, %v5887
        %v6164 = vmul.f32 %v5892, %v5892
        %v6165 = vmul.f32 %v5895, %v5895
        %v6166 = vmul.f32 %v5900, %v5900
        %v6167 = vmul.f32 %v5903, %v5903
        %v6168 = vsel %vm5567, %v6136, 0.0
        %v6169 = vsel %vm5567, %v6137, 0.0
        %v6170 = vadd.f32 %v6168, %v6169
        %v6171 = vsel %vm5567, %v6138, 0.0
        %v6172 = vadd.f32 %v6170, %v6171
        %v6173 = vsel %vm5567, %v6139, 0.0
        %v6174 = vadd.f32 %v6172, %v6173
        %v6175 = vsel %vm5567, %v6140, 0.0
        %v6176 = vadd.f32 %v6174, %v6175
        %v6177 = vsel %vm5567, %v6141, 0.0
        %v6178 = vadd.f32 %v6176, %v6177
        %v6179 = vsel %vm5567, %v6142, 0.0
        %v6180 = vadd.f32 %v6178, %v6179
        %v6181 = vsel %vm5567, %v6143, 0.0
        %v6182 = vadd.f32 %v6180, %v6181
        %v6183 = vsel %vm5567, %v6144, 0.0
        %v6184 = vadd.f32 %v6182, %v6183
        %v6185 = vsel %vm5567, %v6145, 0.0
        %v6186 = vadd.f32 %v6184, %v6185
        %v6187 = vsel %vm5567, %v6146, 0.0
        %v6188 = vadd.f32 %v6186, %v6187
        %v6189 = vsel %vm5567, %v6147, 0.0
        %v6190 = vadd.f32 %v6188, %v6189
        %v6191 = vsel %vm5567, %v6148, 0.0
        %v6192 = vadd.f32 %v6190, %v6191
        %v6193 = vsel %vm5567, %v6149, 0.0
        %v6194 = vadd.f32 %v6192, %v6193
        %v6195 = vsel %vm5567, %v6150, 0.0
        %v6196 = vadd.f32 %v6194, %v6195
        %v6197 = vsel %vm5567, %v6151, 0.0
        %v6198 = vadd.f32 %v6196, %v6197
        %v6199 = vsel %vm5567, %v6152, 0.0
        %v6200 = vadd.f32 %v6198, %v6199
        %v6201 = vsel %vm5567, %v6153, 0.0
        %v6202 = vadd.f32 %v6200, %v6201
        %v6203 = vsel %vm5567, %v6154, 0.0
        %v6204 = vadd.f32 %v6202, %v6203
        %v6205 = vsel %vm5567, %v6155, 0.0
        %v6206 = vadd.f32 %v6204, %v6205
        %v6207 = vsel %vm5567, %v6156, 0.0
        %v6208 = vadd.f32 %v6206, %v6207
        %v6209 = vsel %vm5567, %v6157, 0.0
        %v6210 = vadd.f32 %v6208, %v6209
        %v6211 = vsel %vm5567, %v6158, 0.0
        %v6212 = vadd.f32 %v6210, %v6211
        %v6213 = vsel %vm5567, %v6159, 0.0
        %v6214 = vadd.f32 %v6212, %v6213
        %v6215 = vsel %vm5567, %v6160, 0.0
        %v6216 = vadd.f32 %v6214, %v6215
        %v6217 = vsel %vm5567, %v6161, 0.0
        %v6218 = vadd.f32 %v6216, %v6217
        %v6219 = vsel %vm5567, %v6162, 0.0
        %v6220 = vadd.f32 %v6218, %v6219
        %v6221 = vsel %vm5567, %v6163, 0.0
        %v6222 = vadd.f32 %v6220, %v6221
        %v6223 = vsel %vm5567, %v6164, 0.0
        %v6224 = vadd.f32 %v6222, %v6223
        %v6225 = vsel %vm5567, %v6165, 0.0
        %v6226 = vadd.f32 %v6224, %v6225
        %v6227 = vsel %vm5567, %v6166, 0.0
        %v6228 = vadd.f32 %v6226, %v6227
        %v6229 = vsel %vm5567, %v6167, 0.0
        %v6230 = vadd.f32 %v6228, %v6229
        %v6231 = vrot.slane %v6230, 4
        %v6232 = vadd.f32 %v6230, %v6231
        %v6233 = vrot.slane %v6232, 2
        %v6234 = vadd.f32 %v6232, %v6233
        %v6235 = vrot.slane %v6234, 1
        %v6236 = vadd.f32 %v6234, %v6235
        %6237 = vst.msk [vmem:[%s232 + $0x3] sm:$0x1] %vm5637, %v6236
        %p6238 = scmp.lt.s32.totalorder %s20, 1
        %s6239 = scalar_select %p6238, %s20, 1
        %s6240 = smul.addr %s6239, 32
        %s6241 = smul.addr %s6240, 4
        %s6242 = scalar_lea.vmem %s3, %s6241
        %p6243 = scmp.lt.s32.totalorder %s20, 1
        %s6244 = scalar_select %p6243, %s20, 1
        %s6245 = smul.addr %s6244, 32
        %s6246 = smul.addr %s6245, 4
        %s6247 = scalar_lea.vmem %s4, %s6246
        %s6248 = sand.u32 %s148, 1
        %s6249 = scalar_lea.sflag [#allocation4], %s6248
        %s6250 = sand.u32 %s148, 1
        %s6251 = smul.addr %s6250, 4
        %s6252 = scalar_lea.vmem [#allocation3], %s6251
        // Predicated region
        $region33: #{tpu_custom_call.1} parent=31 // pred_check
          %p6253 = pneg %p106
        $region34: #{tpu_custom_call.1} parent=31 // pred_check_branch
          %6255 = sbr.rel (%p6253) target = $region36
        $region35: #{tpu_custom_call.1} parent=31 // pred_region
          _
        $region36: #{tpu_custom_call.1} parent=31 // pred_fallthru
          _
        // Predicated region
        $region37: #{tpu_custom_call.1} parent=31 // pred_check
          %p6256 = pneg %p132
        $region38: #{tpu_custom_call.1} parent=31 // pred_check_branch
          %6258 = sbr.rel (%p6256) target = $region40
        $region39: #{tpu_custom_call.1} parent=31 // pred_region
          _
        $region40: #{tpu_custom_call.1} parent=31 // pred_fallthru
          _
        // Predicated region
        $region41: #{tpu_custom_call.1} parent=31 // pred_check
          %p6259 = pneg %p158
        $region42: #{tpu_custom_call.1} parent=31 // pred_check_branch
          %6261 = sbr.rel (%p6259) target = $region44
        $region43: #{tpu_custom_call.1} parent=31 // pred_region
          %s6263 = ssub.s32 64, 64
          %6264 = vsyncadd %s6249, %s6263
          %s6265 = smul.addr %s20, 64
          %s6266 = scalar_lea.hbm %s5, %s6265
          %s6268 = sshll.u32 %s6252, 4
          %s6269 = int_to_ptr.vmem [resolvable:$true] %s6268
          %6271 = dma.vmem_to_hbm [thread:$0]  %s6269, 64, %s6266, %s6249
        $region44: #{tpu_custom_call.1} parent=31 // pred_fallthru
          _
      $region32: #{tpu_custom_call.1} parent=5 // pred_fallthru
        _
      %p6272 = scmp.le.s32.totalorder 2, %s15
      // Predicated region
      $region45: #{tpu_custom_call.1} parent=5 // pred_check
        %p6273 = pneg %p6272
      $region46: #{tpu_custom_call.1} parent=5 // pred_check_branch
        %6275 = sbr.rel (%p6273) target = $region48
      $region47: #{tpu_custom_call.1} parent=5 // pred_region
        %s6276 = ssub.s32 %s15, 2
        // Predicated region
        $region49: #{tpu_custom_call.1} parent=47 // pred_check
          %p6277 = pneg %p112
        $region50: #{tpu_custom_call.1} parent=47 // pred_check_branch
          %6279 = sbr.rel (%p6277) target = $region52
        $region51: #{tpu_custom_call.1} parent=47 // pred_region
          %p6280 = scmp.lt.s32.totalorder %s21, 1
          %s6281 = scalar_select %p6280, %s21, 1
          %s6282 = smul.addr %s6281, 32
          %s6283 = smul.addr %s6282, 4
          %s6284 = scalar_lea.vmem %s3, %s6283
        $region52: #{tpu_custom_call.1} parent=47 // pred_fallthru
          _
        // Predicated region
        $region53: #{tpu_custom_call.1} parent=47 // pred_check
          %p6285 = pneg %p138
        $region54: #{tpu_custom_call.1} parent=47 // pred_check_branch
          %6287 = sbr.rel (%p6285) target = $region56
        $region55: #{tpu_custom_call.1} parent=47 // pred_region
          %p6288 = scmp.lt.s32.totalorder %s21, 1
          %s6289 = scalar_select %p6288, %s21, 1
          %s6290 = smul.addr %s6289, 32
          %s6291 = smul.addr %s6290, 4
          %s6292 = scalar_lea.vmem %s4, %s6291
        $region56: #{tpu_custom_call.1} parent=47 // pred_fallthru
          _
        // Predicated region
        $region57: #{tpu_custom_call.1} parent=47 // pred_check
          %p6293 = pneg %p164
        $region58: #{tpu_custom_call.1} parent=47 // pred_check_branch
          %6295 = sbr.rel (%p6293) target = $region60
        $region59: #{tpu_custom_call.1} parent=47 // pred_region
          %s6296 = sand.u32 %s149, 1
          %s6297 = scalar_lea.sflag [#allocation4], %s6296
          %s6298 = sand.u32 %s149, 1
          %s6299 = smul.addr %s6298, 4
          %s6300 = scalar_lea.vmem [#allocation3], %s6299
          %6301 = dma.done %s6297, 64
        $region60: #{tpu_custom_call.1} parent=47 // pred_fallthru
          _
      $region48: #{tpu_custom_call.1} parent=5 // pred_fallthru
        _
    $region6: #{tpu_custom_call.1} parent=1 // loop_footer
      %s19 = sadd.s32 1, %s15
    $region7: #{tpu_custom_call.1} parent=1 // loop_footer_branch
      %14 = sbr.rel target = $region3
    $region8: #{tpu_custom_call.1} parent=1 // loop_exit
      _
    %6302 = vsyncpa [#allocation4], 1
    %s6303 = scalar_lea.sflag [#allocation4], 1
    %6304 = vsyncpa %s6303, 1

</llo_original>
